<compile_context>
chip_gen: v7x
topology: tpu7x:2x2x1
jax: 0.10.0
libtpu: 0.0.40
codegen_flags: <defaults>
</compile_context>

<pallas_src>
import functools

import jax
import jax.numpy as jnp
from jax import lax
from jax.experimental import pallas as pl
from jax.experimental.pallas import tpu as pltpu


def deepxml_kernel(xw_ref, xind_ref, ys_ref, e_ref, wft_ref, bf_ref,
                   wct_ref, bc_ref, out_ref, *, kc):
    TB, S = xind_ref.shape
    V, D = e_ref.shape
    L = wct_ref.shape[1]
    K = ys_ref.shape[1]

    # ---- coarse transform: weighted embedding bag ---------------------------
    # Fused masked select on the VPU (no separate one-hot materialization),
    # then a single dense MXU matmul bag @ E.
    ind = xind_ref[...]                                            # (TB, S) i32
    w = xw_ref[...]                                                # (TB, S) f32
    iota_v = lax.broadcasted_iota(jnp.int32, (1, 1, V), 2)         # lane-only iota
    bag = jnp.sum(
        jnp.where(ind[:, :, None] == iota_v, w[:, :, None], 0.0),
        axis=1)                                                    # (TB, V) f32
    coarse = jnp.dot(bag.astype(jnp.bfloat16), e_ref[...],
                     preferred_element_type=jnp.float32)           # (TB, D) f32

    # ---- fine transform: residual block h = ReLU(coarse @ WfT + bf) + coarse
    pre = jnp.dot(coarse.astype(jnp.bfloat16), wft_ref[...],
                  preferred_element_type=jnp.float32) + bf_ref[...]
    h = jnp.maximum(pre, 0.0) + coarse                             # (TB, D) f32

    # ---- classifier (SparseLinear over shortlist) ---------------------------
    # Dense logits for all L labels in one MXU matmul, then a K-chunked
    # per-row shortlist select (VPU compare+select, XLU lane reduce).  Chunking
    # keeps the masked intermediate at (TB, kc, L) instead of (TB, K, L).
    logits = jnp.dot(h.astype(jnp.bfloat16), wct_ref[...],
                     preferred_element_type=jnp.float32) + bc_ref[...]  # (TB, L)
    logits_b = logits[:, None, :]                                  # (TB, 1, L)
    iota_l = lax.broadcasted_iota(jnp.int32, (1, 1, L), 2)         # hoisted iota
    for c in range(K // kc):                                       # static unroll
        ys_c = ys_ref[:, c * kc:(c + 1) * kc]                      # (TB, kc) i32
        sel = ys_c[:, :, None] == iota_l                           # (TB, kc, L) mask
        out_ref[:, c * kc:(c + 1) * kc] = jnp.sum(
            jnp.where(sel, logits_b, 0.0), axis=-1)                # (TB, kc) f32


def _pick_kc(K):
    for kc in (16, 8):
        if kc <= K and K % kc == 0:
            return kc
    return K


def _vmem_limit_bytes(TB, S, V, D, L, K, kc):
    f32, bf16 = 4, 2
    weights = (V * D + D * D + D * L) * bf16 + (D + L) * f32       # single-buffered
    batch_io = 2 * TB * (2 * S * f32 + K * f32) + 2 * TB * K * f32  # double-buffered
    inter = (TB * S * V * f32          # fused bag select
             + TB * V * f32            # bag
             + 3 * TB * D * f32        # coarse, pre, h
             + TB * L * f32            # dense logits
             + 2 * TB * kc * L * f32)  # chunked shortlist select
    est = weights + batch_io + inter
    # 2x headroom for vregs/compiler scratch; capped at v7x's 64 MiB physical.
    return int(min(max(2 * est, 16 << 20), 64 << 20))


def deepxml_forward(x_w, x_ind, y_s, E, WfT, bf, Wc, bc, *, block_b=128):
    """Fused DeepXMLs forward. Weights fed to the MXU as bf16, f32 accumulate.

    block_b: batch tile (multiple of 8). 128 is a good default on v5e/v7x; use
    256 on v6e when benchmarking large batches.
    """
    B, S = x_w.shape
    V, D = E.shape
    L = Wc.shape[0]
    K = y_s.shape[1]
    KC = _pick_kc(K)

    # Batch tile: multiple of 8 sublanes, capped at block_b.  If the grid would
    # collapse to a single step, halve the tile so both TensorCores get work.
    TB = max(8, (min(block_b, B) // 8) * 8)
    Bp = ((B + TB - 1) // TB) * TB
    if Bp // TB < 2 and TB > 8:
        TB = max(8, (TB // 2 // 8) * 8)
        Bp = ((B + TB - 1) // TB) * TB

    xw = x_w.astype(jnp.float32)
    xind = x_ind.astype(jnp.int32)
    ys = y_s.astype(jnp.int32)
    if Bp != B:
        pad = Bp - B
        xw = jnp.pad(xw, ((0, pad), (0, 0)))
        xind = jnp.pad(xind, ((0, pad), (0, 0)))
        ys = jnp.pad(ys, ((0, pad), (0, 0)), constant_values=L - 1)

    e_bf = E.astype(jnp.bfloat16)                       # (V, D)
    wft_bf = WfT.astype(jnp.bfloat16)                   # (D, D)
    wct_bf = Wc.T.astype(jnp.bfloat16)                  # (D, L)
    bf_row = jnp.reshape(bf, (1, D)).astype(jnp.float32)
    bc_row = jnp.reshape(bc, (1, L)).astype(jnp.float32)

    grid = (Bp // TB,)
    const0 = lambda i: (0, 0)
    kernel = functools.partial(deepxml_kernel, kc=KC)
    vmem_limit = _vmem_limit_bytes(TB, S, V, D, L, K, KC)

    def _call(single_buffer_weights):
        def wspec(shape):
            if single_buffer_weights:
                # Constant index_map -> block never changes: one VMEM buffer.
                return pl.BlockSpec(shape, const0, pipeline_mode=pl.Buffered(1))
            return pl.BlockSpec(shape, const0)

        return pl.pallas_call(
            kernel,
            out_shape=jax.ShapeDtypeStruct((Bp, K), jnp.float32),
            grid_spec=pltpu.PrefetchScalarGridSpec(
                num_scalar_prefetch=0,
                grid=grid,
                in_specs=[
                    pl.BlockSpec((TB, S), lambda i: (i, 0)),   # X_w
                    pl.BlockSpec((TB, S), lambda i: (i, 0)),   # X_ind
                    pl.BlockSpec((TB, K), lambda i: (i, 0)),   # Y_s
                    wspec((V, D)),                             # E        (bf16)
                    wspec((D, D)),                             # WfT      (bf16)
                    wspec((1, D)),                             # bf       (f32)
                    wspec((D, L)),                             # Wc^T     (bf16)
                    wspec((1, L)),                             # bc row   (f32)
                ],
                out_specs=pl.BlockSpec((TB, K), lambda i: (i, 0)),
            ),
            compiler_params=pltpu.CompilerParams(
                dimension_semantics=("parallel",),
                vmem_limit_bytes=vmem_limit),
        )(xw, xind, ys, e_bf, wft_bf, bf_row, wct_bf, bc_row)

    try:
        out = _call(single_buffer_weights=True)
    except Exception:
        # Fallback if this JAX/Mosaic build rejects pipeline_mode=Buffered(1);
        # default double-buffering is merely a VMEM-footprint regression.
        out = _call(single_buffer_weights=False)
    return out[:B]


def ref_forward(x_w, x_ind, y_s, E, WfT, bf, Wc, bc):
    """Pure-JAX f32 reference of the module forward (weights upcast from bf16)."""
    E = E.astype(jnp.float32)
    WfT = WfT.astype(jnp.float32)
    Wc = Wc.astype(jnp.float32)
    bf = bf.astype(jnp.float32)
    bc = bc.astype(jnp.float32)

    emb = E[x_ind]                                       # (B, S, D)
    coarse = jnp.einsum('bs,bsd->bd', x_w, emb)          # (B, D)
    h = jnp.maximum(coarse @ WfT + bf.reshape(-1), 0.0) + coarse
    wsel = Wc[y_s]                                       # (B, K, D)
    bsel = bc.reshape(-1)[y_s]                           # (B, K)
    return jnp.einsum('bkd,bd->bk', wsel, h) + bsel


if __name__ == "__main__":
    # Small, deterministic, lane-aligned correctness configuration.
    # (Benchmark with B >= 1024 and block_b >= 128 -- 256 on v6e -- instead.)
    B, S = 16, 8            # batch, sparse features per sample
    V, D = 128, 128         # vocabulary size, representation dims
    num_labels = 127
    L = num_labels + 1      # +1 for label_padding_index (= num_labels)
    K = 128                 # shortlist size

    key = jax.random.PRNGKey(0)
    k1, k2, k3, k4, k5, k6, k7, k8 = jax.random.split(key, 8)

    # Sparse features (padding token index 0 has a zero embedding and weight 0).
    x_ind = jax.random.randint(k1, (B, S), 1, V).astype(jnp.int32)
    x_ind = x_ind.at[:, -1].set(0)
    x_w = jax.random.uniform(k2, (B, S), jnp.float32)
    x_w = x_w.at[:, -1].set(0.0)

    # Label shortlist (last slot padded with label_padding_index).
    y_s = jax.random.randint(k3, (B, K), 0, num_labels).astype(jnp.int32)
    y_s = y_s.at[:, -1].set(num_labels)

    # Parameters (deterministic init; padding rows zeroed), stored in bf16.
    E = (jax.random.normal(k4, (V, D), jnp.float32) * 0.1).at[0].set(0.0)
    WfT = jax.random.normal(k5, (D, D), jnp.float32) * (1.0 / jnp.sqrt(D))
    bf = jax.random.normal(k6, (1, D), jnp.float32) * 0.01
    Wc = (jax.random.normal(k7, (L, D), jnp.float32) * 0.1).at[num_labels].set(0.0)
    bc = (jax.random.normal(k8, (L, 1), jnp.float32) * 0.01).at[num_labels].set(0.0)

    E_bf = E.astype(jnp.bfloat16)
    WfT_bf = WfT.astype(jnp.bfloat16)
    Wc_bf = Wc.astype(jnp.bfloat16)

    out = deepxml_forward(x_w, x_ind, y_s, E_bf, WfT_bf, bf, Wc_bf, bc)
    out = jax.block_until_ready(out)

    ref = ref_forward(x_w, x_ind, y_s, E_bf, WfT_bf, bf, Wc_bf, bc)
    assert out.shape == (B, K) and out.dtype == jnp.float32
    # bf16 MXU inputs (weights AND activations) with f32 accumulation: allow
    # small mixed-precision drift vs. the f32-activation reference.
    assert jnp.allclose(out, ref, atol=3e-2, rtol=3e-2), (
        float(jnp.max(jnp.abs(out - ref))))
    print("KERNEL_OK")
</pallas_src>

<mosaic_0001>
module attributes {stable_mosaic.version = 11 : i64} {
  func.func @deepxml_kernel(%arg0: i32, %arg1: memref<8x8xf32, #tpu.memory_space<vmem>>, %arg2: memref<8x8xi32, #tpu.memory_space<vmem>>, %arg3: memref<8x128xi32, #tpu.memory_space<vmem>>, %arg4: memref<128x128xbf16, #tpu.memory_space<vmem>>, %arg5: memref<128x128xbf16, #tpu.memory_space<vmem>>, %arg6: memref<1x128xf32, #tpu.memory_space<vmem>>, %arg7: memref<128x128xbf16, #tpu.memory_space<vmem>>, %arg8: memref<1x128xf32, #tpu.memory_space<vmem>>, %arg9: memref<8x128xf32, #tpu.memory_space<vmem>>) attributes {dimension_semantics = [#tpu.dimension_semantics<parallel>], iteration_bounds = array<i64: 2>, scalar_prefetch = 0 : i64, scratch_operands = 0 : i64, tpu.core_type = #tpu.core_type<tc>, window_params = [{transform_indices = @transform_0, window_bounds = array<i64: 8, 8>}, {transform_indices = @transform_1, window_bounds = array<i64: 8, 8>}, {transform_indices = @transform_2, window_bounds = array<i64: 8, 128>}, {pipeline_mode = #tpu.pipeline_mode<synchronous>, transform_indices = @transform_3, window_bounds = array<i64: 128, 128>}, {pipeline_mode = #tpu.pipeline_mode<synchronous>, transform_indices = @transform_4, window_bounds = array<i64: 128, 128>}, {pipeline_mode = #tpu.pipeline_mode<synchronous>, transform_indices = @transform_5, window_bounds = array<i64: 1, 128>}, {pipeline_mode = #tpu.pipeline_mode<synchronous>, transform_indices = @transform_6, window_bounds = array<i64: 128, 128>}, {pipeline_mode = #tpu.pipeline_mode<synchronous>, transform_indices = @transform_7, window_bounds = array<i64: 1, 128>}, {transform_indices = @transform_8, window_bounds = array<i64: 8, 128>}]} {
    %c0 = arith.constant 0 : index
    %c0_0 = arith.constant 0 : index
    %0 = vector.load %arg2[%c0, %c0_0] : memref<8x8xi32, #tpu.memory_space<vmem>>, vector<8x8xi32>
    %c0_1 = arith.constant 0 : index
    %c0_2 = arith.constant 0 : index
    %1 = vector.load %arg1[%c0_1, %c0_2] : memref<8x8xf32, #tpu.memory_space<vmem>>, vector<8x8xf32>
    %2 = tpu.iota {dimensions = array<i32: 2>} : vector<1x1x128xi32>
    %3 = vector.shape_cast %0 : vector<8x8xi32> to vector<8x8x1xi32>
    %4 = vector.broadcast %3 : vector<8x8x1xi32> to vector<8x8x128xi32>
    %5 = vector.broadcast %2 : vector<1x1x128xi32> to vector<8x8x128xi32>
    %6 = arith.cmpi eq, %4, %5 : vector<8x8x128xi32>
    %7 = vector.shape_cast %1 : vector<8x8xf32> to vector<8x8x1xf32>
    %cst = arith.constant 0.000000e+00 : f32
    %8 = vector.shape_cast %7 : vector<8x8x1xf32> to vector<8x8x1xf32>
    %9 = vector.broadcast %8 : vector<8x8x1xf32> to vector<8x8x128xf32>
    %10 = vector.broadcast %cst : f32 to vector<8x8x128xf32>
    %11 = arith.select %6, %9, %10 : vector<8x8x128xi1>, vector<8x8x128xf32>
    %cst_3 = arith.constant dense<0.000000e+00> : vector<8x128xf32>
    %12 = vector.multi_reduction <add>, %11, %cst_3 [1] : vector<8x8x128xf32> to vector<8x128xf32>
    %13 = arith.truncf %12 : vector<8x128xf32> to vector<8x128xbf16>
    %c0_4 = arith.constant 0 : index
    %c0_5 = arith.constant 0 : index
    %14 = vector.load %arg4[%c0_4, %c0_5] : memref<128x128xbf16, #tpu.memory_space<vmem>>, vector<128x128xbf16>
    %cst_6 = arith.constant dense<0.000000e+00> : vector<8x128xf32>
    %15 = tpu.matmul %13, %14, %cst_6 {dimension_numbers = #tpu.dot_dimension_numbers<[1], [0], [0], [1], [0, 0, 1, 1], [], []>} : vector<8x128xbf16>, vector<128x128xbf16>, vector<8x128xf32> -> vector<8x128xf32>
    %16 = arith.truncf %15 : vector<8x128xf32> to vector<8x128xbf16>
    %c0_7 = arith.constant 0 : index
    %c0_8 = arith.constant 0 : index
    %17 = vector.load %arg5[%c0_7, %c0_8] : memref<128x128xbf16, #tpu.memory_space<vmem>>, vector<128x128xbf16>
    %cst_9 = arith.constant dense<0.000000e+00> : vector<8x128xf32>
    %18 = tpu.matmul %16, %17, %cst_9 {dimension_numbers = #tpu.dot_dimension_numbers<[1], [0], [0], [1], [0, 0, 1, 1], [], []>} : vector<8x128xbf16>, vector<128x128xbf16>, vector<8x128xf32> -> vector<8x128xf32>
    %c0_10 = arith.constant 0 : index
    %c0_11 = arith.constant 0 : index
    %19 = vector.load %arg6[%c0_10, %c0_11] : memref<1x128xf32, #tpu.memory_space<vmem>>, vector<1x128xf32>
    %20 = vector.broadcast %19 : vector<1x128xf32> to vector<8x128xf32>
    %21 = arith.addf %18, %20 : vector<8x128xf32>
    %cst_12 = arith.constant 0.000000e+00 : f32
    %22 = vector.broadcast %cst_12 : f32 to vector<8x128xf32>
    %23 = arith.maximumf %21, %22 : vector<8x128xf32>
    %24 = arith.addf %23, %15 : vector<8x128xf32>
    %25 = arith.truncf %24 : vector<8x128xf32> to vector<8x128xbf16>
    %c0_13 = arith.constant 0 : index
    %c0_14 = arith.constant 0 : index
    %26 = vector.load %arg7[%c0_13, %c0_14] : memref<128x128xbf16, #tpu.memory_space<vmem>>, vector<128x128xbf16>
    %cst_15 = arith.constant dense<0.000000e+00> : vector<8x128xf32>
    %27 = tpu.matmul %25, %26, %cst_15 {dimension_numbers = #tpu.dot_dimension_numbers<[1], [0], [0], [1], [0, 0, 1, 1], [], []>} : vector<8x128xbf16>, vector<128x128xbf16>, vector<8x128xf32> -> vector<8x128xf32>
    %c0_16 = arith.constant 0 : index
    %c0_17 = arith.constant 0 : index
    %28 = vector.load %arg8[%c0_16, %c0_17] : memref<1x128xf32, #tpu.memory_space<vmem>>, vector<1x128xf32>
    %29 = vector.broadcast %28 : vector<1x128xf32> to vector<8x128xf32>
    %30 = arith.addf %27, %29 : vector<8x128xf32>
    %31 = vector.shape_cast %30 : vector<8x128xf32> to vector<8x1x128xf32>
    %32 = tpu.iota {dimensions = array<i32: 2>} : vector<1x1x128xi32>
    %c0_18 = arith.constant 0 : index
    %c0_19 = arith.constant 0 : index
    %33 = vector.load %arg3[%c0_18, %c0_19] : memref<8x128xi32, #tpu.memory_space<vmem>>, vector<8x16xi32>
    %34 = vector.shape_cast %33 : vector<8x16xi32> to vector<8x16x1xi32>
    %35 = vector.broadcast %34 : vector<8x16x1xi32> to vector<8x16x128xi32>
    %36 = vector.broadcast %32 : vector<1x1x128xi32> to vector<8x16x128xi32>
    %37 = arith.cmpi eq, %35, %36 : vector<8x16x128xi32>
    %cst_20 = arith.constant 0.000000e+00 : f32
    %38 = vector.shape_cast %31 : vector<8x1x128xf32> to vector<8x1x128xf32>
    %39 = vector.broadcast %38 : vector<8x1x128xf32> to vector<8x16x128xf32>
    %40 = vector.broadcast %cst_20 : f32 to vector<8x16x128xf32>
    %41 = arith.select %37, %39, %40 : vector<8x16x128xi1>, vector<8x16x128xf32>
    %cst_21 = arith.constant dense<0.000000e+00> : vector<8x16xf32>
    %42 = vector.multi_reduction <add>, %41, %cst_21 [2] : vector<8x16x128xf32> to vector<8x16xf32>
    %c0_22 = arith.constant 0 : index
    %c0_23 = arith.constant 0 : index
    %43 = vector.load %arg9[%c0_22, %c0_23] : memref<8x128xf32, #tpu.memory_space<vmem>>, vector<8x16xf32>
    tpu.vector_store %arg9[%c0_22, %c0_23], %42 {strides = array<i32>} : memref<8x128xf32, #tpu.memory_space<vmem>>, vector<8x16xf32>,
    %c0_24 = arith.constant 0 : index
    %c16 = arith.constant 16 : index
    %44 = vector.load %arg3[%c0_24, %c16] : memref<8x128xi32, #tpu.memory_space<vmem>>, vector<8x16xi32>
    %45 = vector.shape_cast %44 : vector<8x16xi32> to vector<8x16x1xi32>
    %46 = vector.broadcast %45 : vector<8x16x1xi32> to vector<8x16x128xi32>
    %47 = vector.broadcast %32 : vector<1x1x128xi32> to vector<8x16x128xi32>
    %48 = arith.cmpi eq, %46, %47 : vector<8x16x128xi32>
    %cst_25 = arith.constant 0.000000e+00 : f32
    %49 = vector.shape_cast %31 : vector<8x1x128xf32> to vector<8x1x128xf32>
    %50 = vector.broadcast %49 : vector<8x1x128xf32> to vector<8x16x128xf32>
    %51 = vector.broadcast %cst_25 : f32 to vector<8x16x128xf32>
    %52 = arith.select %48, %50, %51 : vector<8x16x128xi1>, vector<8x16x128xf32>
    %cst_26 = arith.constant dense<0.000000e+00> : vector<8x16xf32>
    %53 = vector.multi_reduction <add>, %52, %cst_26 [2] : vector<8x16x128xf32> to vector<8x16xf32>
    %c0_27 = arith.constant 0 : index
    %c16_28 = arith.constant 16 : index
    %54 = vector.load %arg9[%c0_27, %c16_28] : memref<8x128xf32, #tpu.memory_space<vmem>>, vector<8x16xf32>
    tpu.vector_store %arg9[%c0_27, %c16_28], %53 {strides = array<i32>} : memref<8x128xf32, #tpu.memory_space<vmem>>, vector<8x16xf32>,
    %c0_29 = arith.constant 0 : index
    %c32 = arith.constant 32 : index
    %55 = vector.load %arg3[%c0_29, %c32] : memref<8x128xi32, #tpu.memory_space<vmem>>, vector<8x16xi32>
    %56 = vector.shape_cast %55 : vector<8x16xi32> to vector<8x16x1xi32>
    %57 = vector.broadcast %56 : vector<8x16x1xi32> to vector<8x16x128xi32>
    %58 = vector.broadcast %32 : vector<1x1x128xi32> to vector<8x16x128xi32>
    %59 = arith.cmpi eq, %57, %58 : vector<8x16x128xi32>
    %cst_30 = arith.constant 0.000000e+00 : f32
    %60 = vector.shape_cast %31 : vector<8x1x128xf32> to vector<8x1x128xf32>
    %61 = vector.broadcast %60 : vector<8x1x128xf32> to vector<8x16x128xf32>
    %62 = vector.broadcast %cst_30 : f32 to vector<8x16x128xf32>
    %63 = arith.select %59, %61, %62 : vector<8x16x128xi1>, vector<8x16x128xf32>
    %cst_31 = arith.constant dense<0.000000e+00> : vector<8x16xf32>
    %64 = vector.multi_reduction <add>, %63, %cst_31 [2] : vector<8x16x128xf32> to vector<8x16xf32>
    %c0_32 = arith.constant 0 : index
    %c32_33 = arith.constant 32 : index
    %65 = vector.load %arg9[%c0_32, %c32_33] : memref<8x128xf32, #tpu.memory_space<vmem>>, vector<8x16xf32>
    tpu.vector_store %arg9[%c0_32, %c32_33], %64 {strides = array<i32>} : memref<8x128xf32, #tpu.memory_space<vmem>>, vector<8x16xf32>,
    %c0_34 = arith.constant 0 : index
    %c48 = arith.constant 48 : index
    %66 = vector.load %arg3[%c0_34, %c48] : memref<8x128xi32, #tpu.memory_space<vmem>>, vector<8x16xi32>
    %67 = vector.shape_cast %66 : vector<8x16xi32> to vector<8x16x1xi32>
    %68 = vector.broadcast %67 : vector<8x16x1xi32> to vector<8x16x128xi32>
    %69 = vector.broadcast %32 : vector<1x1x128xi32> to vector<8x16x128xi32>
    %70 = arith.cmpi eq, %68, %69 : vector<8x16x128xi32>
    %cst_35 = arith.constant 0.000000e+00 : f32
    %71 = vector.shape_cast %31 : vector<8x1x128xf32> to vector<8x1x128xf32>
    %72 = vector.broadcast %71 : vector<8x1x128xf32> to vector<8x16x128xf32>
    %73 = vector.broadcast %cst_35 : f32 to vector<8x16x128xf32>
    %74 = arith.select %70, %72, %73 : vector<8x16x128xi1>, vector<8x16x128xf32>
    %cst_36 = arith.constant dense<0.000000e+00> : vector<8x16xf32>
    %75 = vector.multi_reduction <add>, %74, %cst_36 [2] : vector<8x16x128xf32> to vector<8x16xf32>
    %c0_37 = arith.constant 0 : index
    %c48_38 = arith.constant 48 : index
    %76 = vector.load %arg9[%c0_37, %c48_38] : memref<8x128xf32, #tpu.memory_space<vmem>>, vector<8x16xf32>
    tpu.vector_store %arg9[%c0_37, %c48_38], %75 {strides = array<i32>} : memref<8x128xf32, #tpu.memory_space<vmem>>, vector<8x16xf32>,
    %c0_39 = arith.constant 0 : index
    %c64 = arith.constant 64 : index
    %77 = vector.load %arg3[%c0_39, %c64] : memref<8x128xi32, #tpu.memory_space<vmem>>, vector<8x16xi32>
    %78 = vector.shape_cast %77 : vector<8x16xi32> to vector<8x16x1xi32>
    %79 = vector.broadcast %78 : vector<8x16x1xi32> to vector<8x16x128xi32>
    %80 = vector.broadcast %32 : vector<1x1x128xi32> to vector<8x16x128xi32>
    %81 = arith.cmpi eq, %79, %80 : vector<8x16x128xi32>
    %cst_40 = arith.constant 0.000000e+00 : f32
    %82 = vector.shape_cast %31 : vector<8x1x128xf32> to vector<8x1x128xf32>
    %83 = vector.broadcast %82 : vector<8x1x128xf32> to vector<8x16x128xf32>
    %84 = vector.broadcast %cst_40 : f32 to vector<8x16x128xf32>
    %85 = arith.select %81, %83, %84 : vector<8x16x128xi1>, vector<8x16x128xf32>
    %cst_41 = arith.constant dense<0.000000e+00> : vector<8x16xf32>
    %86 = vector.multi_reduction <add>, %85, %cst_41 [2] : vector<8x16x128xf32> to vector<8x16xf32>
    %c0_42 = arith.constant 0 : index
    %c64_43 = arith.constant 64 : index
    %87 = vector.load %arg9[%c0_42, %c64_43] : memref<8x128xf32, #tpu.memory_space<vmem>>, vector<8x16xf32>
    tpu.vector_store %arg9[%c0_42, %c64_43], %86 {strides = array<i32>} : memref<8x128xf32, #tpu.memory_space<vmem>>, vector<8x16xf32>,
    %c0_44 = arith.constant 0 : index
    %c80 = arith.constant 80 : index
    %88 = vector.load %arg3[%c0_44, %c80] : memref<8x128xi32, #tpu.memory_space<vmem>>, vector<8x16xi32>
    %89 = vector.shape_cast %88 : vector<8x16xi32> to vector<8x16x1xi32>
    %90 = vector.broadcast %89 : vector<8x16x1xi32> to vector<8x16x128xi32>
    %91 = vector.broadcast %32 : vector<1x1x128xi32> to vector<8x16x128xi32>
    %92 = arith.cmpi eq, %90, %91 : vector<8x16x128xi32>
    %cst_45 = arith.constant 0.000000e+00 : f32
    %93 = vector.shape_cast %31 : vector<8x1x128xf32> to vector<8x1x128xf32>
    %94 = vector.broadcast %93 : vector<8x1x128xf32> to vector<8x16x128xf32>
    %95 = vector.broadcast %cst_45 : f32 to vector<8x16x128xf32>
    %96 = arith.select %92, %94, %95 : vector<8x16x128xi1>, vector<8x16x128xf32>
    %cst_46 = arith.constant dense<0.000000e+00> : vector<8x16xf32>
    %97 = vector.multi_reduction <add>, %96, %cst_46 [2] : vector<8x16x128xf32> to vector<8x16xf32>
    %c0_47 = arith.constant 0 : index
    %c80_48 = arith.constant 80 : index
    %98 = vector.load %arg9[%c0_47, %c80_48] : memref<8x128xf32, #tpu.memory_space<vmem>>, vector<8x16xf32>
    tpu.vector_store %arg9[%c0_47, %c80_48], %97 {strides = array<i32>} : memref<8x128xf32, #tpu.memory_space<vmem>>, vector<8x16xf32>,
    %c0_49 = arith.constant 0 : index
    %c96 = arith.constant 96 : index
    %99 = vector.load %arg3[%c0_49, %c96] : memref<8x128xi32, #tpu.memory_space<vmem>>, vector<8x16xi32>
    %100 = vector.shape_cast %99 : vector<8x16xi32> to vector<8x16x1xi32>
    %101 = vector.broadcast %100 : vector<8x16x1xi32> to vector<8x16x128xi32>
    %102 = vector.broadcast %32 : vector<1x1x128xi32> to vector<8x16x128xi32>
    %103 = arith.cmpi eq, %101, %102 : vector<8x16x128xi32>
    %cst_50 = arith.constant 0.000000e+00 : f32
    %104 = vector.shape_cast %31 : vector<8x1x128xf32> to vector<8x1x128xf32>
    %105 = vector.broadcast %104 : vector<8x1x128xf32> to vector<8x16x128xf32>
    %106 = vector.broadcast %cst_50 : f32 to vector<8x16x128xf32>
    %107 = arith.select %103, %105, %106 : vector<8x16x128xi1>, vector<8x16x128xf32>
    %cst_51 = arith.constant dense<0.000000e+00> : vector<8x16xf32>
    %108 = vector.multi_reduction <add>, %107, %cst_51 [2] : vector<8x16x128xf32> to vector<8x16xf32>
    %c0_52 = arith.constant 0 : index
    %c96_53 = arith.constant 96 : index
    %109 = vector.load %arg9[%c0_52, %c96_53] : memref<8x128xf32, #tpu.memory_space<vmem>>, vector<8x16xf32>
    tpu.vector_store %arg9[%c0_52, %c96_53], %108 {strides = array<i32>} : memref<8x128xf32, #tpu.memory_space<vmem>>, vector<8x16xf32>,
    %c0_54 = arith.constant 0 : index
    %c112 = arith.constant 112 : index
    %110 = vector.load %arg3[%c0_54, %c112] : memref<8x128xi32, #tpu.memory_space<vmem>>, vector<8x16xi32>
    %111 = vector.shape_cast %110 : vector<8x16xi32> to vector<8x16x1xi32>
    %112 = vector.broadcast %111 : vector<8x16x1xi32> to vector<8x16x128xi32>
    %113 = vector.broadcast %32 : vector<1x1x128xi32> to vector<8x16x128xi32>
    %114 = arith.cmpi eq, %112, %113 : vector<8x16x128xi32>
    %cst_55 = arith.constant 0.000000e+00 : f32
    %115 = vector.shape_cast %31 : vector<8x1x128xf32> to vector<8x1x128xf32>
    %116 = vector.broadcast %115 : vector<8x1x128xf32> to vector<8x16x128xf32>
    %117 = vector.broadcast %cst_55 : f32 to vector<8x16x128xf32>
    %118 = arith.select %114, %116, %117 : vector<8x16x128xi1>, vector<8x16x128xf32>
    %cst_56 = arith.constant dense<0.000000e+00> : vector<8x16xf32>
    %119 = vector.multi_reduction <add>, %118, %cst_56 [2] : vector<8x16x128xf32> to vector<8x16xf32>
    %c0_57 = arith.constant 0 : index
    %c112_58 = arith.constant 112 : index
    %120 = vector.load %arg9[%c0_57, %c112_58] : memref<8x128xf32, #tpu.memory_space<vmem>>, vector<8x16xf32>
    tpu.vector_store %arg9[%c0_57, %c112_58], %119 {strides = array<i32>} : memref<8x128xf32, #tpu.memory_space<vmem>>, vector<8x16xf32>,
    return
  }
  func.func @transform_0(%arg0: i32) -> (i32, i32) {
    %c0_i32 = arith.constant 0 : i32
    %c0_i32_0 = arith.constant 0 : i32
    return %arg0, %c0_i32 : i32, i32
  }
  func.func @transform_1(%arg0: i32) -> (i32, i32) {
    %c0_i32 = arith.constant 0 : i32
    %c0_i32_0 = arith.constant 0 : i32
    return %arg0, %c0_i32 : i32, i32
  }
  func.func @transform_2(%arg0: i32) -> (i32, i32) {
    %c0_i32 = arith.constant 0 : i32
    %c0_i32_0 = arith.constant 0 : i32
    return %arg0, %c0_i32 : i32, i32
  }
  func.func @transform_3(%arg0: i32) -> (i32, i32) {
    %c0_i32 = arith.constant 0 : i32
    %c0_i32_0 = arith.constant 0 : i32
    %c0_i32_1 = arith.constant 0 : i32
    return %c0_i32, %c0_i32_0 : i32, i32
  }
  func.func @transform_4(%arg0: i32) -> (i32, i32) {
    %c0_i32 = arith.constant 0 : i32
    %c0_i32_0 = arith.constant 0 : i32
    %c0_i32_1 = arith.constant 0 : i32
    return %c0_i32, %c0_i32_0 : i32, i32
  }
  func.func @transform_5(%arg0: i32) -> (i32, i32) {
    %c0_i32 = arith.constant 0 : i32
    %c0_i32_0 = arith.constant 0 : i32
    %c0_i32_1 = arith.constant 0 : i32
    return %c0_i32, %c0_i32_0 : i32, i32
  }
  func.func @transform_6(%arg0: i32) -> (i32, i32) {
    %c0_i32 = arith.constant 0 : i32
    %c0_i32_0 = arith.constant 0 : i32
    %c0_i32_1 = arith.constant 0 : i32
    return %c0_i32, %c0_i32_0 : i32, i32
  }
  func.func @transform_7(%arg0: i32) -> (i32, i32) {
    %c0_i32 = arith.constant 0 : i32
    %c0_i32_0 = arith.constant 0 : i32
    %c0_i32_1 = arith.constant 0 : i32
    return %c0_i32, %c0_i32_0 : i32, i32
  }
  func.func @transform_8(%arg0: i32) -> (i32, i32) {
    %c0_i32 = arith.constant 0 : i32
    %c0_i32_0 = arith.constant 0 : i32
    return %arg0, %c0_i32 : i32, i32
  }
}

module attributes {stable_mosaic.version = 11 : i64} {
  func.func @deepxml_kernel(%arg0: i32, %arg1: memref<8x8xf32, #tpu.memory_space<vmem>>, %arg2: memref<8x8xi32, #tpu.memory_space<vmem>>, %arg3: memref<8x128xi32, #tpu.memory_space<vmem>>, %arg4: memref<128x128xbf16, #tpu.memory_space<vmem>>, %arg5: memref<128x128xbf16, #tpu.memory_space<vmem>>, %arg6: memref<1x128xf32, #tpu.memory_space<vmem>>, %arg7: memref<128x128xbf16, #tpu.memory_space<vmem>>, %arg8: memref<1x128xf32, #tpu.memory_space<vmem>>, %arg9: memref<8x128xf32, #tpu.memory_space<vmem>>) attributes {dimension_semantics = [#tpu.dimension_semantics<parallel>], iteration_bounds = array<i64: 2>, scalar_prefetch = 0 : i64, scratch_operands = 0 : i64, tpu.core_type = #tpu.core_type<tc>, window_params = [{transform_indices = @transform_0, window_bounds = array<i64: 8, 8>}, {transform_indices = @transform_1, window_bounds = array<i64: 8, 8>}, {transform_indices = @transform_2, window_bounds = array<i64: 8, 128>}, {pipeline_mode = #tpu.pipeline_mode<synchronous>, transform_indices = @transform_3, window_bounds = array<i64: 128, 128>}, {pipeline_mode = #tpu.pipeline_mode<synchronous>, transform_indices = @transform_4, window_bounds = array<i64: 128, 128>}, {pipeline_mode = #tpu.pipeline_mode<synchronous>, transform_indices = @transform_5, window_bounds = array<i64: 1, 128>}, {pipeline_mode = #tpu.pipeline_mode<synchronous>, transform_indices = @transform_6, window_bounds = array<i64: 128, 128>}, {pipeline_mode = #tpu.pipeline_mode<synchronous>, transform_indices = @transform_7, window_bounds = array<i64: 1, 128>}, {transform_indices = @transform_8, window_bounds = array<i64: 8, 128>}]} {
    %c0 = arith.constant 0 : index
    %c0_0 = arith.constant 0 : index
    %0 = vector.load %arg2[%c0, %c0_0] : memref<8x8xi32, #tpu.memory_space<vmem>>, vector<8x8xi32>
    %c0_1 = arith.constant 0 : index
    %c0_2 = arith.constant 0 : index
    %1 = vector.load %arg1[%c0_1, %c0_2] : memref<8x8xf32, #tpu.memory_space<vmem>>, vector<8x8xf32>
    %2 = tpu.iota {dimensions = array<i32: 2>} : vector<1x1x128xi32>
    %3 = vector.shape_cast %0 : vector<8x8xi32> to vector<8x8x1xi32>
    %4 = vector.broadcast %3 : vector<8x8x1xi32> to vector<8x8x128xi32>
    %5 = vector.broadcast %2 : vector<1x1x128xi32> to vector<8x8x128xi32>
    %6 = arith.cmpi eq, %4, %5 : vector<8x8x128xi32>
    %7 = vector.shape_cast %1 : vector<8x8xf32> to vector<8x8x1xf32>
    %cst = arith.constant 0.000000e+00 : f32
    %8 = vector.shape_cast %7 : vector<8x8x1xf32> to vector<8x8x1xf32>
    %9 = vector.broadcast %8 : vector<8x8x1xf32> to vector<8x8x128xf32>
    %10 = vector.broadcast %cst : f32 to vector<8x8x128xf32>
    %11 = arith.select %6, %9, %10 : vector<8x8x128xi1>, vector<8x8x128xf32>
    %cst_3 = arith.constant dense<0.000000e+00> : vector<8x128xf32>
    %12 = vector.multi_reduction <add>, %11, %cst_3 [1] : vector<8x8x128xf32> to vector<8x128xf32>
    %13 = arith.truncf %12 : vector<8x128xf32> to vector<8x128xbf16>
    %c0_4 = arith.constant 0 : index
    %c0_5 = arith.constant 0 : index
    %14 = vector.load %arg4[%c0_4, %c0_5] : memref<128x128xbf16, #tpu.memory_space<vmem>>, vector<128x128xbf16>
    %cst_6 = arith.constant dense<0.000000e+00> : vector<8x128xf32>
    %15 = tpu.matmul %13, %14, %cst_6 {dimension_numbers = #tpu.dot_dimension_numbers<[1], [0], [0], [1], [0, 0, 1, 1], [], []>} : vector<8x128xbf16>, vector<128x128xbf16>, vector<8x128xf32> -> vector<8x128xf32>
    %16 = arith.truncf %15 : vector<8x128xf32> to vector<8x128xbf16>
    %c0_7 = arith.constant 0 : index
    %c0_8 = arith.constant 0 : index
    %17 = vector.load %arg5[%c0_7, %c0_8] : memref<128x128xbf16, #tpu.memory_space<vmem>>, vector<128x128xbf16>
    %cst_9 = arith.constant dense<0.000000e+00> : vector<8x128xf32>
    %18 = tpu.matmul %16, %17, %cst_9 {dimension_numbers = #tpu.dot_dimension_numbers<[1], [0], [0], [1], [0, 0, 1, 1], [], []>} : vector<8x128xbf16>, vector<128x128xbf16>, vector<8x128xf32> -> vector<8x128xf32>
    %c0_10 = arith.constant 0 : index
    %c0_11 = arith.constant 0 : index
    %19 = vector.load %arg6[%c0_10, %c0_11] : memref<1x128xf32, #tpu.memory_space<vmem>>, vector<1x128xf32>
    %20 = vector.broadcast %19 : vector<1x128xf32> to vector<8x128xf32>
    %21 = arith.addf %18, %20 : vector<8x128xf32>
    %cst_12 = arith.constant 0.000000e+00 : f32
    %22 = vector.broadcast %cst_12 : f32 to vector<8x128xf32>
    %23 = arith.maximumf %21, %22 : vector<8x128xf32>
    %24 = arith.addf %23, %15 : vector<8x128xf32>
    %25 = arith.truncf %24 : vector<8x128xf32> to vector<8x128xbf16>
    %c0_13 = arith.constant 0 : index
    %c0_14 = arith.constant 0 : index
    %26 = vector.load %arg7[%c0_13, %c0_14] : memref<128x128xbf16, #tpu.memory_space<vmem>>, vector<128x128xbf16>
    %cst_15 = arith.constant dense<0.000000e+00> : vector<8x128xf32>
    %27 = tpu.matmul %25, %26, %cst_15 {dimension_numbers = #tpu.dot_dimension_numbers<[1], [0], [0], [1], [0, 0, 1, 1], [], []>} : vector<8x128xbf16>, vector<128x128xbf16>, vector<8x128xf32> -> vector<8x128xf32>
    %c0_16 = arith.constant 0 : index
    %c0_17 = arith.constant 0 : index
    %28 = vector.load %arg8[%c0_16, %c0_17] : memref<1x128xf32, #tpu.memory_space<vmem>>, vector<1x128xf32>
    %29 = vector.broadcast %28 : vector<1x128xf32> to vector<8x128xf32>
    %30 = arith.addf %27, %29 : vector<8x128xf32>
    %31 = vector.shape_cast %30 : vector<8x128xf32> to vector<8x1x128xf32>
    %32 = tpu.iota {dimensions = array<i32: 2>} : vector<1x1x128xi32>
    %c0_18 = arith.constant 0 : index
    %c0_19 = arith.constant 0 : index
    %33 = vector.load %arg3[%c0_18, %c0_19] : memref<8x128xi32, #tpu.memory_space<vmem>>, vector<8x16xi32>
    %34 = vector.shape_cast %33 : vector<8x16xi32> to vector<8x16x1xi32>
    %35 = vector.broadcast %34 : vector<8x16x1xi32> to vector<8x16x128xi32>
    %36 = vector.broadcast %32 : vector<1x1x128xi32> to vector<8x16x128xi32>
    %37 = arith.cmpi eq, %35, %36 : vector<8x16x128xi32>
    %cst_20 = arith.constant 0.000000e+00 : f32
    %38 = vector.shape_cast %31 : vector<8x1x128xf32> to vector<8x1x128xf32>
    %39 = vector.broadcast %38 : vector<8x1x128xf32> to vector<8x16x128xf32>
    %40 = vector.broadcast %cst_20 : f32 to vector<8x16x128xf32>
    %41 = arith.select %37, %39, %40 : vector<8x16x128xi1>, vector<8x16x128xf32>
    %cst_21 = arith.constant dense<0.000000e+00> : vector<8x16xf32>
    %42 = vector.multi_reduction <add>, %41, %cst_21 [2] : vector<8x16x128xf32> to vector<8x16xf32>
    %c0_22 = arith.constant 0 : index
    %c0_23 = arith.constant 0 : index
    %43 = vector.load %arg9[%c0_22, %c0_23] : memref<8x128xf32, #tpu.memory_space<vmem>>, vector<8x16xf32>
    tpu.vector_store %arg9[%c0_22, %c0_23], %42 {strides = array<i32>} : memref<8x128xf32, #tpu.memory_space<vmem>>, vector<8x16xf32>,
    %c0_24 = arith.constant 0 : index
    %c16 = arith.constant 16 : index
    %44 = vector.load %arg3[%c0_24, %c16] : memref<8x128xi32, #tpu.memory_space<vmem>>, vector<8x16xi32>
    %45 = vector.shape_cast %44 : vector<8x16xi32> to vector<8x16x1xi32>
    %46 = vector.broadcast %45 : vector<8x16x1xi32> to vector<8x16x128xi32>
    %47 = vector.broadcast %32 : vector<1x1x128xi32> to vector<8x16x128xi32>
    %48 = arith.cmpi eq, %46, %47 : vector<8x16x128xi32>
    %cst_25 = arith.constant 0.000000e+00 : f32
    %49 = vector.shape_cast %31 : vector<8x1x128xf32> to vector<8x1x128xf32>
    %50 = vector.broadcast %49 : vector<8x1x128xf32> to vector<8x16x128xf32>
    %51 = vector.broadcast %cst_25 : f32 to vector<8x16x128xf32>
    %52 = arith.select %48, %50, %51 : vector<8x16x128xi1>, vector<8x16x128xf32>
    %cst_26 = arith.constant dense<0.000000e+00> : vector<8x16xf32>
    %53 = vector.multi_reduction <add>, %52, %cst_26 [2] : vector<8x16x128xf32> to vector<8x16xf32>
    %c0_27 = arith.constant 0 : index
    %c16_28 = arith.constant 16 : index
    %54 = vector.load %arg9[%c0_27, %c16_28] : memref<8x128xf32, #tpu.memory_space<vmem>>, vector<8x16xf32>
    tpu.vector_store %arg9[%c0_27, %c16_28], %53 {strides = array<i32>} : memref<8x128xf32, #tpu.memory_space<vmem>>, vector<8x16xf32>,
    %c0_29 = arith.constant 0 : index
    %c32 = arith.constant 32 : index
    %55 = vector.load %arg3[%c0_29, %c32] : memref<8x128xi32, #tpu.memory_space<vmem>>, vector<8x16xi32>
    %56 = vector.shape_cast %55 : vector<8x16xi32> to vector<8x16x1xi32>
    %57 = vector.broadcast %56 : vector<8x16x1xi32> to vector<8x16x128xi32>
    %58 = vector.broadcast %32 : vector<1x1x128xi32> to vector<8x16x128xi32>
    %59 = arith.cmpi eq, %57, %58 : vector<8x16x128xi32>
    %cst_30 = arith.constant 0.000000e+00 : f32
    %60 = vector.shape_cast %31 : vector<8x1x128xf32> to vector<8x1x128xf32>
    %61 = vector.broadcast %60 : vector<8x1x128xf32> to vector<8x16x128xf32>
    %62 = vector.broadcast %cst_30 : f32 to vector<8x16x128xf32>
    %63 = arith.select %59, %61, %62 : vector<8x16x128xi1>, vector<8x16x128xf32>
    %cst_31 = arith.constant dense<0.000000e+00> : vector<8x16xf32>
    %64 = vector.multi_reduction <add>, %63, %cst_31 [2] : vector<8x16x128xf32> to vector<8x16xf32>
    %c0_32 = arith.constant 0 : index
    %c32_33 = arith.constant 32 : index
    %65 = vector.load %arg9[%c0_32, %c32_33] : memref<8x128xf32, #tpu.memory_space<vmem>>, vector<8x16xf32>
    tpu.vector_store %arg9[%c0_32, %c32_33], %64 {strides = array<i32>} : memref<8x128xf32, #tpu.memory_space<vmem>>, vector<8x16xf32>,
    %c0_34 = arith.constant 0 : index
    %c48 = arith.constant 48 : index
    %66 = vector.load %arg3[%c0_34, %c48] : memref<8x128xi32, #tpu.memory_space<vmem>>, vector<8x16xi32>
    %67 = vector.shape_cast %66 : vector<8x16xi32> to vector<8x16x1xi32>
    %68 = vector.broadcast %67 : vector<8x16x1xi32> to vector<8x16x128xi32>
    %69 = vector.broadcast %32 : vector<1x1x128xi32> to vector<8x16x128xi32>
    %70 = arith.cmpi eq, %68, %69 : vector<8x16x128xi32>
    %cst_35 = arith.constant 0.000000e+00 : f32
    %71 = vector.shape_cast %31 : vector<8x1x128xf32> to vector<8x1x128xf32>
    %72 = vector.broadcast %71 : vector<8x1x128xf32> to vector<8x16x128xf32>
    %73 = vector.broadcast %cst_35 : f32 to vector<8x16x128xf32>
    %74 = arith.select %70, %72, %73 : vector<8x16x128xi1>, vector<8x16x128xf32>
    %cst_36 = arith.constant dense<0.000000e+00> : vector<8x16xf32>
    %75 = vector.multi_reduction <add>, %74, %cst_36 [2] : vector<8x16x128xf32> to vector<8x16xf32>
    %c0_37 = arith.constant 0 : index
    %c48_38 = arith.constant 48 : index
    %76 = vector.load %arg9[%c0_37, %c48_38] : memref<8x128xf32, #tpu.memory_space<vmem>>, vector<8x16xf32>
    tpu.vector_store %arg9[%c0_37, %c48_38], %75 {strides = array<i32>} : memref<8x128xf32, #tpu.memory_space<vmem>>, vector<8x16xf32>,
    %c0_39 = arith.constant 0 : index
    %c64 = arith.constant 64 : index
    %77 = vector.load %arg3[%c0_39, %c64] : memref<8x128xi32, #tpu.memory_space<vmem>>, vector<8x16xi32>
    %78 = vector.shape_cast %77 : vector<8x16xi32> to vector<8x16x1xi32>
    %79 = vector.broadcast %78 : vector<8x16x1xi32> to vector<8x16x128xi32>
    %80 = vector.broadcast %32 : vector<1x1x128xi32> to vector<8x16x128xi32>
    %81 = arith.cmpi eq, %79, %80 : vector<8x16x128xi32>
    %cst_40 = arith.constant 0.000000e+00 : f32
    %82 = vector.shape_cast %31 : vector<8x1x128xf32> to vector<8x1x128xf32>
    %83 = vector.broadcast %82 : vector<8x1x128xf32> to vector<8x16x128xf32>
    %84 = vector.broadcast %cst_40 : f32 to vector<8x16x128xf32>
    %85 = arith.select %81, %83, %84 : vector<8x16x128xi1>, vector<8x16x128xf32>
    %cst_41 = arith.constant dense<0.000000e+00> : vector<8x16xf32>
    %86 = vector.multi_reduction <add>, %85, %cst_41 [2] : vector<8x16x128xf32> to vector<8x16xf32>
    %c0_42 = arith.constant 0 : index
    %c64_43 = arith.constant 64 : index
    %87 = vector.load %arg9[%c0_42, %c64_43] : memref<8x128xf32, #tpu.memory_space<vmem>>, vector<8x16xf32>
    tpu.vector_store %arg9[%c0_42, %c64_43], %86 {strides = array<i32>} : memref<8x128xf32, #tpu.memory_space<vmem>>, vector<8x16xf32>,
    %c0_44 = arith.constant 0 : index
    %c80 = arith.constant 80 : index
    %88 = vector.load %arg3[%c0_44, %c80] : memref<8x128xi32, #tpu.memory_space<vmem>>, vector<8x16xi32>
    %89 = vector.shape_cast %88 : vector<8x16xi32> to vector<8x16x1xi32>
    %90 = vector.broadcast %89 : vector<8x16x1xi32> to vector<8x16x128xi32>
    %91 = vector.broadcast %32 : vector<1x1x128xi32> to vector<8x16x128xi32>
    %92 = arith.cmpi eq, %90, %91 : vector<8x16x128xi32>
    %cst_45 = arith.constant 0.000000e+00 : f32
    %93 = vector.shape_cast %31 : vector<8x1x128xf32> to vector<8x1x128xf32>
    %94 = vector.broadcast %93 : vector<8x1x128xf32> to vector<8x16x128xf32>
    %95 = vector.broadcast %cst_45 : f32 to vector<8x16x128xf32>
    %96 = arith.select %92, %94, %95 : vector<8x16x128xi1>, vector<8x16x128xf32>
    %cst_46 = arith.constant dense<0.000000e+00> : vector<8x16xf32>
    %97 = vector.multi_reduction <add>, %96, %cst_46 [2] : vector<8x16x128xf32> to vector<8x16xf32>
    %c0_47 = arith.constant 0 : index
    %c80_48 = arith.constant 80 : index
    %98 = vector.load %arg9[%c0_47, %c80_48] : memref<8x128xf32, #tpu.memory_space<vmem>>, vector<8x16xf32>
    tpu.vector_store %arg9[%c0_47, %c80_48], %97 {strides = array<i32>} : memref<8x128xf32, #tpu.memory_space<vmem>>, vector<8x16xf32>,
    %c0_49 = arith.constant 0 : index
    %c96 = arith.constant 96 : index
    %99 = vector.load %arg3[%c0_49, %c96] : memref<8x128xi32, #tpu.memory_space<vmem>>, vector<8x16xi32>
    %100 = vector.shape_cast %99 : vector<8x16xi32> to vector<8x16x1xi32>
    %101 = vector.broadcast %100 : vector<8x16x1xi32> to vector<8x16x128xi32>
    %102 = vector.broadcast %32 : vector<1x1x128xi32> to vector<8x16x128xi32>
    %103 = arith.cmpi eq, %101, %102 : vector<8x16x128xi32>
    %cst_50 = arith.constant 0.000000e+00 : f32
    %104 = vector.shape_cast %31 : vector<8x1x128xf32> to vector<8x1x128xf32>
    %105 = vector.broadcast %104 : vector<8x1x128xf32> to vector<8x16x128xf32>
    %106 = vector.broadcast %cst_50 : f32 to vector<8x16x128xf32>
    %107 = arith.select %103, %105, %106 : vector<8x16x128xi1>, vector<8x16x128xf32>
    %cst_51 = arith.constant dense<0.000000e+00> : vector<8x16xf32>
    %108 = vector.multi_reduction <add>, %107, %cst_51 [2] : vector<8x16x128xf32> to vector<8x16xf32>
    %c0_52 = arith.constant 0 : index
    %c96_53 = arith.constant 96 : index
    %109 = vector.load %arg9[%c0_52, %c96_53] : memref<8x128xf32, #tpu.memory_space<vmem>>, vector<8x16xf32>
    tpu.vector_store %arg9[%c0_52, %c96_53], %108 {strides = array<i32>} : memref<8x128xf32, #tpu.memory_space<vmem>>, vector<8x16xf32>,
    %c0_54 = arith.constant 0 : index
    %c112 = arith.constant 112 : index
    %110 = vector.load %arg3[%c0_54, %c112] : memref<8x128xi32, #tpu.memory_space<vmem>>, vector<8x16xi32>
    %111 = vector.shape_cast %110 : vector<8x16xi32> to vector<8x16x1xi32>
    %112 = vector.broadcast %111 : vector<8x16x1xi32> to vector<8x16x128xi32>
    %113 = vector.broadcast %32 : vector<1x1x128xi32> to vector<8x16x128xi32>
    %114 = arith.cmpi eq, %112, %113 : vector<8x16x128xi32>
    %cst_55 = arith.constant 0.000000e+00 : f32
    %115 = vector.shape_cast %31 : vector<8x1x128xf32> to vector<8x1x128xf32>
    %116 = vector.broadcast %115 : vector<8x1x128xf32> to vector<8x16x128xf32>
    %117 = vector.broadcast %cst_55 : f32 to vector<8x16x128xf32>
    %118 = arith.select %114, %116, %117 : vector<8x16x128xi1>, vector<8x16x128xf32>
    %cst_56 = arith.constant dense<0.000000e+00> : vector<8x16xf32>
    %119 = vector.multi_reduction <add>, %118, %cst_56 [2] : vector<8x16x128xf32> to vector<8x16xf32>
    %c0_57 = arith.constant 0 : index
    %c112_58 = arith.constant 112 : index
    %120 = vector.load %arg9[%c0_57, %c112_58] : memref<8x128xf32, #tpu.memory_space<vmem>>, vector<8x16xf32>
    tpu.vector_store %arg9[%c0_57, %c112_58], %119 {strides = array<i32>} : memref<8x128xf32, #tpu.memory_space<vmem>>, vector<8x16xf32>,
    return
  }
  func.func @transform_0(%arg0: i32) -> (i32, i32) {
    %c0_i32 = arith.constant 0 : i32
    %c0_i32_0 = arith.constant 0 : i32
    return %arg0, %c0_i32 : i32, i32
  }
  func.func @transform_1(%arg0: i32) -> (i32, i32) {
    %c0_i32 = arith.constant 0 : i32
    %c0_i32_0 = arith.constant 0 : i32
    return %arg0, %c0_i32 : i32, i32
  }
  func.func @transform_2(%arg0: i32) -> (i32, i32) {
    %c0_i32 = arith.constant 0 : i32
    %c0_i32_0 = arith.constant 0 : i32
    return %arg0, %c0_i32 : i32, i32
  }
  func.func @transform_3(%arg0: i32) -> (i32, i32) {
    %c0_i32 = arith.constant 0 : i32
    %c0_i32_0 = arith.constant 0 : i32
    %c0_i32_1 = arith.constant 0 : i32
    return %c0_i32, %c0_i32_0 : i32, i32
  }
  func.func @transform_4(%arg0: i32) -> (i32, i32) {
    %c0_i32 = arith.constant 0 : i32
    %c0_i32_0 = arith.constant 0 : i32
    %c0_i32_1 = arith.constant 0 : i32
    return %c0_i32, %c0_i32_0 : i32, i32
  }
  func.func @transform_5(%arg0: i32) -> (i32, i32) {
    %c0_i32 = arith.constant 0 : i32
    %c0_i32_0 = arith.constant 0 : i32
    %c0_i32_1 = arith.constant 0 : i32
    return %c0_i32, %c0_i32_0 : i32, i32
  }
  func.func @transform_6(%arg0: i32) -> (i32, i32) {
    %c0_i32 = arith.constant 0 : i32
    %c0_i32_0 = arith.constant 0 : i32
    %c0_i32_1 = arith.constant 0 : i32
    return %c0_i32, %c0_i32_0 : i32, i32
  }
  func.func @transform_7(%arg0: i32) -> (i32, i32) {
    %c0_i32 = arith.constant 0 : i32
    %c0_i32_0 = arith.constant 0 : i32
    %c0_i32_1 = arith.constant 0 : i32
    return %c0_i32, %c0_i32_0 : i32, i32
  }
  func.func @transform_8(%arg0: i32) -> (i32, i32) {
    %c0_i32 = arith.constant 0 : i32
    %c0_i32_0 = arith.constant 0 : i32
    return %arg0, %c0_i32 : i32, i32
  }
}

</mosaic_0001>

<llo_original>
// kernel: tpu_custom_call.1
$region0: #{tpu_custom_call.1}
  #allocation0 [shape = 'u32[]', space=smem, size = 0x4, offset = 0x4, fixed_abs, tag = 'smem constant byte address 0x4 - core index']
  #allocation1 [shape = 'u32[144,128]{1,0:T(1,128)}', space=vmem, size = 0x12000, scoped, tag = 'internal scratch']
  %s0 = inlined_call_operand.vmem [shape: f32[16,8], index: 0, kind: input, shape index: {}]
  %s1 = inlined_call_operand.vmem [shape: s32[16,8], index: 1, kind: input, shape index: {}]
  %s2 = inlined_call_operand.hbm [shape: s32[16,128], index: 2, kind: input, shape index: {}]
  %s3 = inlined_call_operand.hbm [shape: bf16[128,128], index: 3, kind: input, shape index: {}]
  %s4 = inlined_call_operand.hbm [shape: bf16[128,128], index: 4, kind: input, shape index: {}]
  %s5 = inlined_call_operand.vmem [shape: f32[1,128], index: 5, kind: input, shape index: {}]
  %s6 = inlined_call_operand.vmem [shape: bf16[128,128], index: 6, kind: input, shape index: {}]
  %s7 = inlined_call_operand.vmem [shape: f32[1,128], index: 7, kind: input, shape index: {}]
  %s8 = inlined_call_operand.hbm [shape: f32[16,128], index: 8, kind: output, shape index: {}]
  %s9 = sld [smem:[#allocation0]]
  $region77: #{tpu_custom_call.1} parent=0
    _
  %s11 = ssub.s32 1, %s9
  %s12 = scalar_select 0, %s11, %s9
  $region1: #{tpu_custom_call.1} parent=0
    #allocation2 [shape = 'u8[8192]{0}', space=vmem, size = 0x2000, scoped, tag = 'input window, operand 2']
    #allocation3 [shape = 's32[2]{0}', space=sflag, size = 0x8, scoped, tag = 'scoped memory for tpu_custom_call.1']
    #allocation4 [shape = 's32[2]{0}', space=sflag, size = 0x8, scoped, tag = 'scoped memory for tpu_custom_call.1']
    #allocation5 [shape = 'u8[32768]{0}', space=vmem, size = 0x8000, scoped, tag = 'input window, operand 3, single buffered']
    #allocation6 [shape = 's32[1]{0}', space=sflag, size = 0x4, scoped, tag = 'scoped memory for tpu_custom_call.1']
    #allocation7 [shape = 'u8[32768]{0}', space=vmem, size = 0x8000, scoped, tag = 'input window, operand 4, single buffered']
    #allocation8 [shape = 'u8[8192]{0}', space=vmem, size = 0x2000, scoped, tag = 'output window, operand 0']
    %13 = vsyncpa [#allocation3], 0
    %s14 = scalar_lea.sflag [#allocation3], 1
    %15 = vsyncpa %s14, 0
    %16 = vsyncpa [#allocation6], 0
    %17 = vsyncpa [#allocation4], 0
    %s18 = scalar_lea.sflag [#allocation4], 1
    %19 = vsyncpa %s18, 0
    loop: start=0, step=1, limit=4
    $region2: #{tpu_custom_call.1} parent=1 // loop_pre_header
      _
    $region3: #{tpu_custom_call.1} parent=1 // loop_header
      %s21 = sphi 0, %s25
      %p22 = scmp.ge.s32.totalorder %s21, 4
      %s31 = sphi 0, %s33
      %s34 = sphi 0, %s31
      %s35 = sphi 0, %s34
      %s51 = sphi 0, %s35
      %s57 = sphi 0, %s59
      %s60 = sphi 0, %s57
      %s61 = sphi 0, %s60
      %s77 = sphi 0, %s61
      %s83 = sphi 0, %s85
      %s86 = sphi 0, %s83
      %s87 = sphi 0, %s86
      %s103 = sphi 0, %s87
      %s107 = sphi 0, %s107
      %s109 = sphi 0, %s107
      %s110 = sphi 0, %s109
      %s124 = sphi 0, %s110
      %s128 = sphi 0, %s128
      %s130 = sphi 0, %s128
      %s131 = sphi 0, %s130
      %s145 = sphi 0, %s131
      %s149 = sphi 0, %s149
      %s151 = sphi 0, %s149
      %s152 = sphi 0, %s151
      %s166 = sphi 0, %s152
      %s170 = sphi 0, %s170
      %s172 = sphi 0, %s170
      %s173 = sphi 0, %s172
      %s187 = sphi 0, %s173
      %s191 = sphi 0, %s191
      %s193 = sphi 0, %s191
      %s194 = sphi 0, %s193
      %s208 = sphi 0, %s194
      %s214 = sphi 0, %s216
      %s217 = sphi 0, %s214
      %s218 = sphi 0, %s217
      %s234 = sphi 0, %s218
    $region4: #{tpu_custom_call.1} parent=1 // loop_header_branch
      %24 = sbr.rel (%p22) target = $region8
    $region5: #{tpu_custom_call.1} parent=1 // loop_body
      %s26 = ssub.s32 %s21, 1
      %s27 = ssub.s32 %s21, 2
      %s28 = sadd.s32 %s21, 1
      %s29 = ssub.s32 %s21, %s28
      %p30 = scmp.eq.s32.totalorder %s29, 0
      %s32 = sadd.s32 %s31, 1
      %s33 = scalar_select %p30, %s31, %s32
      %p36 = pneg %p30
      %p37 = scmp.eq.s32.totalorder %s21, 1
      %p38 = por %p36, %p37
      %p39 = scmp.ne.s32.totalorder %s31, %s34
      %p40 = scmp.eq.s32.totalorder %s21, 0
      %p41 = por %p39, %p40
      %p42 = scmp.ne.s32.totalorder %s31, %s34
      %p43 = scmp.eq.s32.totalorder %s26, 1
      %p44 = por %p42, %p43
      %p45 = scmp.ne.s32.totalorder %s34, %s35
      %p46 = scmp.eq.s32.totalorder %s26, 0
      %p47 = por %p45, %p46
      %p48 = scmp.ne.s32.totalorder %s34, %s35
      %p49 = scmp.eq.s32.totalorder %s27, 1
      %p50 = por %p48, %p49
      %p52 = scmp.ne.s32.totalorder %s35, %s51
      %p53 = scmp.eq.s32.totalorder %s27, 0
      %p54 = por %p52, %p53
      %s55 = ssub.s32 %s21, %s28
      %p56 = scmp.eq.s32.totalorder %s55, 0
      %s58 = sadd.s32 %s57, 1
      %s59 = scalar_select %p56, %s57, %s58
      %p62 = pneg %p56
      %p63 = scmp.eq.s32.totalorder %s21, 1
      %p64 = por %p62, %p63
      %p65 = scmp.ne.s32.totalorder %s57, %s60
      %p66 = scmp.eq.s32.totalorder %s21, 0
      %p67 = por %p65, %p66
      %p68 = scmp.ne.s32.totalorder %s57, %s60
      %p69 = scmp.eq.s32.totalorder %s26, 1
      %p70 = por %p68, %p69
      %p71 = scmp.ne.s32.totalorder %s60, %s61
      %p72 = scmp.eq.s32.totalorder %s26, 0
      %p73 = por %p71, %p72
      %p74 = scmp.ne.s32.totalorder %s60, %s61
      %p75 = scmp.eq.s32.totalorder %s27, 1
      %p76 = por %p74, %p75
      %p78 = scmp.ne.s32.totalorder %s61, %s77
      %p79 = scmp.eq.s32.totalorder %s27, 0
      %p80 = por %p78, %p79
      %s81 = ssub.s32 %s21, %s28
      %p82 = scmp.eq.s32.totalorder %s81, 0
      %s84 = sadd.s32 %s83, 1
      %s85 = scalar_select %p82, %s83, %s84
      %p88 = pneg %p82
      %p89 = scmp.eq.s32.totalorder %s21, 1
      %p90 = por %p88, %p89
      %p91 = scmp.ne.s32.totalorder %s83, %s86
      %p92 = scmp.eq.s32.totalorder %s21, 0
      %p93 = por %p91, %p92
      %p94 = scmp.ne.s32.totalorder %s83, %s86
      %p95 = scmp.eq.s32.totalorder %s26, 1
      %p96 = por %p94, %p95
      %p97 = scmp.ne.s32.totalorder %s86, %s87
      %p98 = scmp.eq.s32.totalorder %s26, 0
      %p99 = por %p97, %p98
      %p100 = scmp.ne.s32.totalorder %s86, %s87
      %p101 = scmp.eq.s32.totalorder %s27, 1
      %p102 = por %p100, %p101
      %p104 = scmp.ne.s32.totalorder %s87, %s103
      %p105 = scmp.eq.s32.totalorder %s27, 0
      %p106 = por %p104, %p105
      %s108 = sadd.s32 %s107, 1
      %p111 = scmp.eq.s32.totalorder %s21, 1
      %p112 = scmp.ne.s32.totalorder %s107, %s109
      %p113 = scmp.eq.s32.totalorder %s21, 0
      %p114 = por %p112, %p113
      %p115 = scmp.ne.s32.totalorder %s107, %s109
      %p116 = scmp.eq.s32.totalorder %s26, 1
      %p117 = por %p115, %p116
      %p118 = scmp.ne.s32.totalorder %s109, %s110
      %p119 = scmp.eq.s32.totalorder %s26, 0
      %p120 = por %p118, %p119
      %p121 = scmp.ne.s32.totalorder %s109, %s110
      %p122 = scmp.eq.s32.totalorder %s27, 1
      %p123 = por %p121, %p122
      %p125 = scmp.ne.s32.totalorder %s110, %s124
      %p126 = scmp.eq.s32.totalorder %s27, 0
      %p127 = por %p125, %p126
      %s129 = sadd.s32 %s128, 1
      %p132 = scmp.eq.s32.totalorder %s21, 1
      %p133 = scmp.ne.s32.totalorder %s128, %s130
      %p134 = scmp.eq.s32.totalorder %s21, 0
      %p135 = por %p133, %p134
      %p136 = scmp.ne.s32.totalorder %s128, %s130
      %p137 = scmp.eq.s32.totalorder %s26, 1
      %p138 = por %p136, %p137
      %p139 = scmp.ne.s32.totalorder %s130, %s131
      %p140 = scmp.eq.s32.totalorder %s26, 0
      %p141 = por %p139, %p140
      %p142 = scmp.ne.s32.totalorder %s130, %s131
      %p143 = scmp.eq.s32.totalorder %s27, 1
      %p144 = por %p142, %p143
      %p146 = scmp.ne.s32.totalorder %s131, %s145
      %p147 = scmp.eq.s32.totalorder %s27, 0
      %p148 = por %p146, %p147
      %s150 = sadd.s32 %s149, 1
      %p153 = scmp.eq.s32.totalorder %s21, 1
      %p154 = scmp.ne.s32.totalorder %s149, %s151
      %p155 = scmp.eq.s32.totalorder %s21, 0
      %p156 = por %p154, %p155
      %p157 = scmp.ne.s32.totalorder %s149, %s151
      %p158 = scmp.eq.s32.totalorder %s26, 1
      %p159 = por %p157, %p158
      %p160 = scmp.ne.s32.totalorder %s151, %s152
      %p161 = scmp.eq.s32.totalorder %s26, 0
      %p162 = por %p160, %p161
      %p163 = scmp.ne.s32.totalorder %s151, %s152
      %p164 = scmp.eq.s32.totalorder %s27, 1
      %p165 = por %p163, %p164
      %p167 = scmp.ne.s32.totalorder %s152, %s166
      %p168 = scmp.eq.s32.totalorder %s27, 0
      %p169 = por %p167, %p168
      %s171 = sadd.s32 %s170, 1
      %p174 = scmp.eq.s32.totalorder %s21, 1
      %p175 = scmp.ne.s32.totalorder %s170, %s172
      %p176 = scmp.eq.s32.totalorder %s21, 0
      %p177 = por %p175, %p176
      %p178 = scmp.ne.s32.totalorder %s170, %s172
      %p179 = scmp.eq.s32.totalorder %s26, 1
      %p180 = por %p178, %p179
      %p181 = scmp.ne.s32.totalorder %s172, %s173
      %p182 = scmp.eq.s32.totalorder %s26, 0
      %p183 = por %p181, %p182
      %p184 = scmp.ne.s32.totalorder %s172, %s173
      %p185 = scmp.eq.s32.totalorder %s27, 1
      %p186 = por %p184, %p185
      %p188 = scmp.ne.s32.totalorder %s173, %s187
      %p189 = scmp.eq.s32.totalorder %s27, 0
      %p190 = por %p188, %p189
      %s192 = sadd.s32 %s191, 1
      %p195 = scmp.eq.s32.totalorder %s21, 1
      %p196 = scmp.ne.s32.totalorder %s191, %s193
      %p197 = scmp.eq.s32.totalorder %s21, 0
      %p198 = por %p196, %p197
      %p199 = scmp.ne.s32.totalorder %s191, %s193
      %p200 = scmp.eq.s32.totalorder %s26, 1
      %p201 = por %p199, %p200
      %p202 = scmp.ne.s32.totalorder %s193, %s194
      %p203 = scmp.eq.s32.totalorder %s26, 0
      %p204 = por %p202, %p203
      %p205 = scmp.ne.s32.totalorder %s193, %s194
      %p206 = scmp.eq.s32.totalorder %s27, 1
      %p207 = por %p205, %p206
      %p209 = scmp.ne.s32.totalorder %s194, %s208
      %p210 = scmp.eq.s32.totalorder %s27, 0
      %p211 = por %p209, %p210
      %s212 = ssub.s32 %s21, %s28
      %p213 = scmp.eq.s32.totalorder %s212, 0
      %s215 = sadd.s32 %s214, 1
      %s216 = scalar_select %p213, %s214, %s215
      %p219 = pneg %p213
      %p220 = scmp.eq.s32.totalorder %s21, 1
      %p221 = por %p219, %p220
      %p222 = scmp.ne.s32.totalorder %s214, %s217
      %p223 = scmp.eq.s32.totalorder %s21, 0
      %p224 = por %p222, %p223
      %p225 = scmp.ne.s32.totalorder %s214, %s217
      %p226 = scmp.eq.s32.totalorder %s26, 1
      %p227 = por %p225, %p226
      %p228 = scmp.ne.s32.totalorder %s217, %s218
      %p229 = scmp.eq.s32.totalorder %s26, 0
      %p230 = por %p228, %p229
      %p231 = scmp.ne.s32.totalorder %s217, %s218
      %p232 = scmp.eq.s32.totalorder %s27, 1
      %p233 = por %p231, %p232
      %p235 = scmp.ne.s32.totalorder %s218, %s234
      %p236 = scmp.eq.s32.totalorder %s27, 0
      %p237 = por %p235, %p236
      %p238 = scmp.le.s32.totalorder 1, %s21
      %p239 = scmp.lt.s32.totalorder %s21, 3
      %p240 = pnand %p238, %p239
      %p241 = pneg %p240
      // Predicated region
      $region9: #{tpu_custom_call.1} parent=5 // pred_check
        _
      $region10: #{tpu_custom_call.1} parent=5 // pred_check_branch
        %243 = sbr.rel (%p240) target = $region12
      $region11: #{tpu_custom_call.1} parent=5 // pred_region
        %s244 = ssub.s32 %s21, 1
        // Predicated region
        $region13: #{tpu_custom_call.1} parent=11 // pred_check
          %p245 = pneg %p120
        $region14: #{tpu_custom_call.1} parent=11 // pred_check_branch
          %247 = sbr.rel (%p245) target = $region16
        $region15: #{tpu_custom_call.1} parent=11 // pred_region
          %s249 = ssub.s32 1024, 1024
          %250 = vsyncadd [#allocation6], %s249
          %s251 = sshll.u32 [#allocation5], 4
          %s252 = int_to_ptr.vmem [resolvable:$true] %s251
          %257 = dma.hbm_to_vmem [thread:$0]  %s3, 1024, %s252, [#allocation6], 64, 64, 4
        $region16: #{tpu_custom_call.1} parent=11 // pred_fallthru
          _
        // Predicated region
        $region17: #{tpu_custom_call.1} parent=11 // pred_check
          %p258 = pneg %p141
        $region18: #{tpu_custom_call.1} parent=11 // pred_check_branch
          %260 = sbr.rel (%p258) target = $region20
        $region19: #{tpu_custom_call.1} parent=11 // pred_region
          %s262 = ssub.s32 1024, 1024
          %263 = vsyncadd [#allocation6], %s262
          %s264 = sshll.u32 [#allocation7], 4
          %s265 = int_to_ptr.vmem [resolvable:$true] %s264
          %270 = dma.hbm_to_vmem [thread:$0]  %s4, 1024, %s265, [#allocation6], 64, 64, 4
        $region20: #{tpu_custom_call.1} parent=11 // pred_fallthru
          _
        // Predicated region
        $region21: #{tpu_custom_call.1} parent=11 // pred_check
          %p271 = pneg %p162
        $region22: #{tpu_custom_call.1} parent=11 // pred_check_branch
          %273 = sbr.rel (%p271) target = $region24
        $region23: #{tpu_custom_call.1} parent=11 // pred_region
          _
        $region24: #{tpu_custom_call.1} parent=11 // pred_fallthru
          _
        // Predicated region
        $region25: #{tpu_custom_call.1} parent=11 // pred_check
          %p274 = pneg %p183
        $region26: #{tpu_custom_call.1} parent=11 // pred_check_branch
          %276 = sbr.rel (%p274) target = $region28
        $region27: #{tpu_custom_call.1} parent=11 // pred_region
          _
        $region28: #{tpu_custom_call.1} parent=11 // pred_fallthru
          _
        // Predicated region
        $region29: #{tpu_custom_call.1} parent=11 // pred_check
          %p277 = pneg %p204
        $region30: #{tpu_custom_call.1} parent=11 // pred_check_branch
          %279 = sbr.rel (%p277) target = $region32
        $region31: #{tpu_custom_call.1} parent=11 // pred_region
          _
        $region32: #{tpu_custom_call.1} parent=11 // pred_fallthru
          _
      $region12: #{tpu_custom_call.1} parent=5 // pred_fallthru
        _
      %p280 = scmp.lt.s32.totalorder %s21, 2
      // Predicated region
      $region33: #{tpu_custom_call.1} parent=5 // pred_check
        %p281 = pneg %p280
      $region34: #{tpu_custom_call.1} parent=5 // pred_check_branch
        %283 = sbr.rel (%p281) target = $region36
      $region35: #{tpu_custom_call.1} parent=5 // pred_region
        // Predicated region
        $region37: #{tpu_custom_call.1} parent=35 // pred_check
          %p284 = pneg %p41
        $region38: #{tpu_custom_call.1} parent=35 // pred_check_branch
          %286 = sbr.rel (%p284) target = $region40
        $region39: #{tpu_custom_call.1} parent=35 // pred_region
          %p287 = scmp.lt.s32.totalorder %s21, 1
          %s288 = scalar_select %p287, %s21, 1
          %s289 = smul.addr %s288, 8
          %s290 = scalar_lea.vmem %s0, %s289
        $region40: #{tpu_custom_call.1} parent=35 // pred_fallthru
          _
        // Predicated region
        $region41: #{tpu_custom_call.1} parent=35 // pred_check
          %p291 = pneg %p67
        $region42: #{tpu_custom_call.1} parent=35 // pred_check_branch
          %293 = sbr.rel (%p291) target = $region44
        $region43: #{tpu_custom_call.1} parent=35 // pred_region
          %p294 = scmp.lt.s32.totalorder %s21, 1
          %s295 = scalar_select %p294, %s21, 1
          %s296 = smul.addr %s295, 8
          %s297 = scalar_lea.vmem %s1, %s296
        $region44: #{tpu_custom_call.1} parent=35 // pred_fallthru
          _
        // Predicated region
        $region45: #{tpu_custom_call.1} parent=35 // pred_check
          %p298 = pneg %p93
        $region46: #{tpu_custom_call.1} parent=35 // pred_check_branch
          %300 = sbr.rel (%p298) target = $region48
        $region47: #{tpu_custom_call.1} parent=35 // pred_region
          %s301 = sand.u32 %s83, 1
          %s302 = scalar_lea.sflag [#allocation3], %s301
          %s303 = sand.u32 %s83, 1
          %s304 = smul.addr %s303, 8
          %s305 = scalar_lea.vmem [#allocation2], %s304
          %s307 = ssub.s32 128, 128
          %308 = vsyncadd %s302, %s307
          %s309 = smul.addr %s21, 128
          %s310 = scalar_lea.hbm %s2, %s309
          %s312 = sshll.u32 %s305, 4
          %s313 = int_to_ptr.vmem [resolvable:$true] %s312
          %315 = dma.hbm_to_vmem [thread:$0]  %s310, 128, %s313, %s302
        $region48: #{tpu_custom_call.1} parent=35 // pred_fallthru
          _
      $region36: #{tpu_custom_call.1} parent=5 // pred_fallthru
        _
      %p316 = scmp.le.s32.totalorder 1, %s21
      %p317 = scmp.lt.s32.totalorder %s21, 3
      %p318 = pnand %p316, %p317
      %p319 = pneg %p318
      // Predicated region
      $region49: #{tpu_custom_call.1} parent=5 // pred_check
        _
      $region50: #{tpu_custom_call.1} parent=5 // pred_check_branch
        %321 = sbr.rel (%p318) target = $region52
      $region51: #{tpu_custom_call.1} parent=5 // pred_region
        %s322 = ssub.s32 %s21, 1
        %s323 = sand.u32 %s86, 1
        %s324 = scalar_lea.sflag [#allocation3], %s323
        %s325 = sand.u32 %s86, 1
        %s326 = smul.addr %s325, 8
        %s327 = scalar_lea.vmem [#allocation2], %s326
        // Predicated region
        $region53: #{tpu_custom_call.1} parent=51 // pred_check
          %p328 = pneg %p99
        $region54: #{tpu_custom_call.1} parent=51 // pred_check_branch
          %330 = sbr.rel (%p328) target = $region56
        $region55: #{tpu_custom_call.1} parent=51 // pred_region
          %331 = dma.done %s324, 128
        $region56: #{tpu_custom_call.1} parent=51 // pred_fallthru
          _
        // Predicated region
        $region57: #{tpu_custom_call.1} parent=51 // pred_check
          %p332 = pneg %p120
        $region58: #{tpu_custom_call.1} parent=51 // pred_check_branch
          %334 = sbr.rel (%p332) target = $region60
        $region59: #{tpu_custom_call.1} parent=51 // pred_region
          %335 = dma.done [#allocation6], 1024
        $region60: #{tpu_custom_call.1} parent=51 // pred_fallthru
          _
        // Predicated region
        $region61: #{tpu_custom_call.1} parent=51 // pred_check
          %p336 = pneg %p141
        $region62: #{tpu_custom_call.1} parent=51 // pred_check_branch
          %338 = sbr.rel (%p336) target = $region64
        $region63: #{tpu_custom_call.1} parent=51 // pred_region
          %339 = dma.done [#allocation6], 1024
        $region64: #{tpu_custom_call.1} parent=51 // pred_fallthru
          _
        %p340 = scmp.lt.s32.totalorder %s26, 1
        %s341 = scalar_select %p340, %s26, 1
        %s342 = smul.addr %s341, 8
        %s343 = scalar_lea.vmem %s0, %s342
        %p344 = pneg %p47
        %p345 = pneg %p44
        %p346 = scmp.lt.s32.totalorder %s26, 1
        %s347 = scalar_select %p346, %s26, 1
        %s348 = smul.addr %s347, 8
        %s349 = scalar_lea.vmem %s1, %s348
        %p350 = pneg %p73
        %p351 = pneg %p70
        %s352 = sand.u32 %s86, 1
        %s353 = scalar_lea.sflag [#allocation3], %s352
        %s354 = sand.u32 %s86, 1
        %s355 = smul.addr %s354, 8
        %s356 = scalar_lea.vmem [#allocation2], %s355
        %p357 = pneg %p99
        %p358 = pneg %p96
        %p359 = pneg %p120
        %p360 = pneg %p117
        %p361 = pneg %p141
        %p362 = pneg %p138
        %p363 = pneg %p162
        %p364 = pneg %p159
        %p365 = pneg %p183
        %p366 = pneg %p180
        %p367 = pneg %p204
        %p368 = pneg %p201
        %p369 = pneg %p230
        %p370 = pneg %p227
        %s371 = sand.u32 %s217, 1
        %s372 = scalar_lea.sflag [#allocation4], %s371
        %s373 = sand.u32 %s217, 1
        %s374 = smul.addr %s373, 8
        %s375 = scalar_lea.vmem [#allocation8], %s374
        %p376 = scmp.lt.s32.totalorder %s26, 1
        %s377 = scalar_select %p376, %s26, 1
        %s378 = smul.addr %s377, 8
        %s379 = scalar_lea.vmem %s0, %s378
        %p380 = scmp.lt.s32.totalorder %s26, 1
        %s381 = scalar_select %p380, %s26, 1
        %s382 = smul.addr %s381, 8
        %s383 = scalar_lea.vmem %s1, %s382
        %v385 = vld [vmem:[%s383] sm:$0xff]
        %v386 = vld [vmem:[%s379] sm:$0xff]
        %v387 = vlaneseq
        %v388 = vand.u32 %v387, 127
        %v389 = vlaneseq
        %v390 = vshrl.u32 %v389, 7
        %v391 = vsub.s32 0, %v390
        %v392 = vrot.slane %v385, %v391
        %394 = vbcast.lane.b32.xlu0 %v392, 256
        %v395 = vpop.permute.xlu0 %394
        %v396 = vlaneseq
        %v397 = vshrl.u32 %v396, 7
        %v398 = vsub.s32 1, %v397
        %v399 = vrot.slane %v385, %v398
        %401 = vbcast.lane.b32.xlu0 %v399, 256
        %v402 = vpop.permute.xlu0 %401
        %v403 = vlaneseq
        %v404 = vshrl.u32 %v403, 7
        %v405 = vsub.s32 2, %v404
        %v406 = vrot.slane %v385, %v405
        %408 = vbcast.lane.b32.xlu0 %v406, 256
        %v409 = vpop.permute.xlu0 %408
        %v410 = vlaneseq
        %v411 = vshrl.u32 %v410, 7
        %v412 = vsub.s32 3, %v411
        %v413 = vrot.slane %v385, %v412
        %415 = vbcast.lane.b32.xlu0 %v413, 256
        %v416 = vpop.permute.xlu0 %415
        %v417 = vlaneseq
        %v418 = vshrl.u32 %v417, 7
        %v419 = vsub.s32 4, %v418
        %v420 = vrot.slane %v385, %v419
        %422 = vbcast.lane.b32.xlu0 %v420, 256
        %v423 = vpop.permute.xlu0 %422
        %v424 = vlaneseq
        %v425 = vshrl.u32 %v424, 7
        %v426 = vsub.s32 5, %v425
        %v427 = vrot.slane %v385, %v426
        %429 = vbcast.lane.b32.xlu0 %v427, 256
        %v430 = vpop.permute.xlu0 %429
        %v431 = vlaneseq
        %v432 = vshrl.u32 %v431, 7
        %v433 = vsub.s32 6, %v432
        %v434 = vrot.slane %v385, %v433
        %436 = vbcast.lane.b32.xlu0 %v434, 256
        %v437 = vpop.permute.xlu0 %436
        %v438 = vlaneseq
        %v439 = vshrl.u32 %v438, 7
        %v440 = vsub.s32 7, %v439
        %v441 = vrot.slane %v385, %v440
        %443 = vbcast.lane.b32.xlu0 %v441, 256
        %v444 = vpop.permute.xlu0 %443
        %vm445 = vcmp.eq.s32.totalorder %v395, %v388
        %vm446 = vcmp.eq.s32.totalorder %v402, %v388
        %vm447 = vcmp.eq.s32.totalorder %v409, %v388
        %vm448 = vcmp.eq.s32.totalorder %v416, %v388
        %vm449 = vcmp.eq.s32.totalorder %v423, %v388
        %vm450 = vcmp.eq.s32.totalorder %v430, %v388
        %vm451 = vcmp.eq.s32.totalorder %v437, %v388
        %vm452 = vcmp.eq.s32.totalorder %v444, %v388
        %v453 = vlaneseq
        %v454 = vshrl.u32 %v453, 7
        %v455 = vsub.s32 0, %v454
        %v456 = vrot.slane %v386, %v455
        %458 = vbcast.lane.b32.xlu0 %v456, 256
        %v459 = vpop.permute.xlu0 %458
        %v460 = vlaneseq
        %v461 = vshrl.u32 %v460, 7
        %v462 = vsub.s32 1, %v461
        %v463 = vrot.slane %v386, %v462
        %465 = vbcast.lane.b32.xlu0 %v463, 256
        %v466 = vpop.permute.xlu0 %465
        %v467 = vlaneseq
        %v468 = vshrl.u32 %v467, 7
        %v469 = vsub.s32 2, %v468
        %v470 = vrot.slane %v386, %v469
        %472 = vbcast.lane.b32.xlu0 %v470, 256
        %v473 = vpop.permute.xlu0 %472
        %v474 = vlaneseq
        %v475 = vshrl.u32 %v474, 7
        %v476 = vsub.s32 3, %v475
        %v477 = vrot.slane %v386, %v476
        %479 = vbcast.lane.b32.xlu0 %v477, 256
        %v480 = vpop.permute.xlu0 %479
        %v481 = vlaneseq
        %v482 = vshrl.u32 %v481, 7
        %v483 = vsub.s32 4, %v482
        %v484 = vrot.slane %v386, %v483
        %486 = vbcast.lane.b32.xlu0 %v484, 256
        %v487 = vpop.permute.xlu0 %486
        %v488 = vlaneseq
        %v489 = vshrl.u32 %v488, 7
        %v490 = vsub.s32 5, %v489
        %v491 = vrot.slane %v386, %v490
        %493 = vbcast.lane.b32.xlu0 %v491, 256
        %v494 = vpop.permute.xlu0 %493
        %v495 = vlaneseq
        %v496 = vshrl.u32 %v495, 7
        %v497 = vsub.s32 6, %v496
        %v498 = vrot.slane %v386, %v497
        %500 = vbcast.lane.b32.xlu0 %v498, 256
        %v501 = vpop.permute.xlu0 %500
        %v502 = vlaneseq
        %v503 = vshrl.u32 %v502, 7
        %v504 = vsub.s32 7, %v503
        %v505 = vrot.slane %v386, %v504
        %507 = vbcast.lane.b32.xlu0 %v505, 256
        %v508 = vpop.permute.xlu0 %507
        %v509 = vsel %vm445, %v459, 0.0
        %v510 = vsel %vm446, %v466, 0.0
        %v511 = vsel %vm447, %v473, 0.0
        %v512 = vsel %vm448, %v480, 0.0
        %v513 = vsel %vm449, %v487, 0.0
        %v514 = vsel %vm450, %v494, 0.0
        %v515 = vsel %vm451, %v501, 0.0
        %v516 = vsel %vm452, %v508, 0.0
        %v517 = vrot.slane %v509, 4
        %v518 = vadd.f32 %v509, %v517
        %v519 = vrot.slane %v518, 2
        %v520 = vadd.f32 %v518, %v519
        %v521 = vrot.slane %v520, 1
        %v522 = vadd.f32 %v520, %v521
        %v523 = vrot.slane %v510, 4
        %v524 = vadd.f32 %v510, %v523
        %v525 = vrot.slane %v524, 2
        %v526 = vadd.f32 %v524, %v525
        %v527 = vrot.slane %v526, 1
        %v528 = vadd.f32 %v526, %v527
        %v529 = vrot.slane %v511, 4
        %v530 = vadd.f32 %v511, %v529
        %v531 = vrot.slane %v530, 2
        %v532 = vadd.f32 %v530, %v531
        %v533 = vrot.slane %v532, 1
        %v534 = vadd.f32 %v532, %v533
        %v535 = vrot.slane %v512, 4
        %v536 = vadd.f32 %v512, %v535
        %v537 = vrot.slane %v536, 2
        %v538 = vadd.f32 %v536, %v537
        %v539 = vrot.slane %v538, 1
        %v540 = vadd.f32 %v538, %v539
        %v541 = vrot.slane %v513, 4
        %v542 = vadd.f32 %v513, %v541
        %v543 = vrot.slane %v542, 2
        %v544 = vadd.f32 %v542, %v543
        %v545 = vrot.slane %v544, 1
        %v546 = vadd.f32 %v544, %v545
        %v547 = vrot.slane %v514, 4
        %v548 = vadd.f32 %v514, %v547
        %v549 = vrot.slane %v548, 2
        %v550 = vadd.f32 %v548, %v549
        %v551 = vrot.slane %v550, 1
        %v552 = vadd.f32 %v550, %v551
        %v553 = vrot.slane %v515, 4
        %v554 = vadd.f32 %v515, %v553
        %v555 = vrot.slane %v554, 2
        %v556 = vadd.f32 %v554, %v555
        %v557 = vrot.slane %v556, 1
        %v558 = vadd.f32 %v556, %v557
        %v559 = vrot.slane %v516, 4
        %v560 = vadd.f32 %v516, %v559
        %v561 = vrot.slane %v560, 2
        %v562 = vadd.f32 %v560, %v561
        %v563 = vrot.slane %v562, 1
        %v564 = vadd.f32 %v562, %v563
        %v565 = vpack.c.bf16 %v522, %v522
        %v566 = vpack.c.bf16 %v528, %v528
        %v567 = vpack.c.bf16 %v534, %v534
        %v568 = vpack.c.bf16 %v540, %v540
        %v569 = vpack.c.bf16 %v546, %v546
        %v570 = vpack.c.bf16 %v552, %v552
        %v571 = vpack.c.bf16 %v558, %v558
        %v572 = vpack.c.bf16 %v564, %v564
        %v573 = vld [vmem:[#allocation5] sm:$0xf]
        %v574 = vld [vmem:[#allocation5 + $0x4] sm:$0xf]
        %v575 = vld [vmem:[#allocation5 + $0x8] sm:$0xf]
        %v576 = vld [vmem:[#allocation5 + $0xc] sm:$0xf]
        %v577 = vld [vmem:[#allocation5 + $0x10] sm:$0xf]
        %v578 = vld [vmem:[#allocation5 + $0x14] sm:$0xf]
        %v579 = vld [vmem:[#allocation5 + $0x18] sm:$0xf]
        %v580 = vld [vmem:[#allocation5 + $0x1c] sm:$0xf]
        %v581 = vld [vmem:[#allocation5 + $0x20] sm:$0xf]
        %v582 = vld [vmem:[#allocation5 + $0x24] sm:$0xf]
        %v583 = vld [vmem:[#allocation5 + $0x28] sm:$0xf]
        %v584 = vld [vmem:[#allocation5 + $0x2c] sm:$0xf]
        %v585 = vld [vmem:[#allocation5 + $0x30] sm:$0xf]
        %v586 = vld [vmem:[#allocation5 + $0x34] sm:$0xf]
        %v587 = vld [vmem:[#allocation5 + $0x38] sm:$0xf]
        %v588 = vld [vmem:[#allocation5 + $0x3c] sm:$0xf]
        %v597 = vunpack.c.l.b16 %v565
        %v598 = vunpack.c.l.b16 %v566
        %v599 = vunpack.c.l.b16 %v567
        %v600 = vunpack.c.l.b16 %v568
        %v601 = vunpack.c.l.b16 %v569
        %v602 = vunpack.c.l.b16 %v570
        %v603 = vunpack.c.l.b16 %v571
        %v604 = vunpack.c.l.b16 %v572
        %vm605 = vcmask 1041409
        %v606 = vsel %vm605, %v598, %v597
        %vm607 = vcmask 1042434
        %v608 = vsel %vm607, %v599, %v606
        %vm609 = vcmask 1043459
        %v610 = vsel %vm609, %v600, %v608
        %vm611 = vcmask 1044484
        %v612 = vsel %vm611, %v601, %v610
        %vm613 = vcmask 1045509
        %v614 = vsel %vm613, %v602, %v612
        %vm615 = vcmask 1046534
        %v616 = vsel %vm615, %v603, %v614
        %vm617 = vcmask 1047559
        %v618 = vsel %vm617, %v604, %v616
        %v619 = vpack.c.b16 %v618, %v618
        %v637 = vunpack.c.l.b16 %v573
        %v638 = vunpack.c.l.b16 %v574
        %v639 = vunpack.c.l.b16 %v575
        %v640 = vunpack.c.l.b16 %v576
        %v641 = vunpack.c.l.b16 %v577
        %v642 = vunpack.c.l.b16 %v578
        %v643 = vunpack.c.l.b16 %v579
        %v644 = vunpack.c.l.b16 %v580
        %v645 = vunpack.c.l.b16 %v581
        %v646 = vunpack.c.l.b16 %v582
        %v647 = vunpack.c.l.b16 %v583
        %v648 = vunpack.c.l.b16 %v584
        %v649 = vunpack.c.l.b16 %v585
        %v650 = vunpack.c.l.b16 %v586
        %v651 = vunpack.c.l.b16 %v587
        %v652 = vunpack.c.l.b16 %v588
        %v653 = vpack.c.b16 %v638, %v637
        %v654 = vpack.c.b16 %v640, %v639
        %v655 = vpack.c.b16 %v642, %v641
        %v656 = vpack.c.b16 %v644, %v643
        %v657 = vpack.c.b16 %v646, %v645
        %v658 = vpack.c.b16 %v648, %v647
        %v659 = vpack.c.b16 %v650, %v649
        %v660 = vpack.c.b16 %v652, %v651
        %669 = vmatprep.subr.bf16.mxu0 0
        %670 = vmatpush1.bf16.msra.mxu0 %v653
        %671 = vmatprep.subr.bf16.mxu0 0
        %672 = vmatpush1.bf16.msra.mxu0 %v654
        %673 = vmatprep.subr.bf16.mxu0 0
        %674 = vmatpush1.bf16.msra.mxu0 %v655
        %675 = vmatprep.subr.bf16.mxu0 0
        %676 = vmatpush1.bf16.msra.mxu0 %v656
        %677 = vmatprep.subr.bf16.mxu0 0
        %678 = vmatpush1.bf16.msra.mxu0 %v657
        %679 = vmatprep.subr.bf16.mxu0 0
        %680 = vmatpush1.bf16.msra.mxu0 %v658
        %681 = vmatprep.subr.bf16.mxu0 0
        %682 = vmatpush1.bf16.msra.mxu0 %v659
        %683 = vmatprep.subr.bf16.mxu0 0
        %684 = vmatpush1.bf16.msra.mxu0 %v660
        %685 = vmatprep.subr.bf16.mxu0 0
        %686 = vmatpush1.bf16.msra.mxu0 0
        %687 = vmatprep.subr.bf16.mxu0 0
        %688 = vmatpush1.bf16.msra.mxu0 0
        %689 = vmatprep.subr.bf16.mxu0 0
        %690 = vmatpush1.bf16.msra.mxu0 0
        %691 = vmatprep.subr.bf16.mxu0 0
        %692 = vmatpush1.bf16.msra.mxu0 0
        %693 = vmatprep.subr.bf16.mxu0 0
        %694 = vmatpush1.bf16.msra.mxu0 0
        %695 = vmatprep.subr.bf16.mxu0 0
        %696 = vmatpush1.bf16.msra.mxu0 0
        %697 = vmatprep.subr.bf16.mxu0 0
        %698 = vmatpush1.bf16.msra.mxu0 0
        %699 = vmatprep.subr.bf16.mxu0 0
        %700 = vmatpush1.bf16.msra.mxu0 0
        %701 = vmatprep.mubr.bf16.mxu0 0
        %702 = vmatmul.mubr.bf16.gmra.mrb[0].mxu0 %v619
        %v703 = vpop.f32.mrb[0].mxu0
        %v704 = vadd.f32 0.0, %v703
        %v705 = vpop.f32.mrb[0].mxu0
        %v706 = vpop.f32.mrb[0].mxu0
        %v707 = vpop.f32.mrb[0].mxu0
        %708 = vdwg.mxu0
        %v709 = vpack.c.bf16 %v704, %v704
        %v710 = vld [vmem:[#allocation7] sm:$0xf]
        %v711 = vld [vmem:[#allocation7 + $0x4] sm:$0xf]
        %v712 = vld [vmem:[#allocation7 + $0x8] sm:$0xf]
        %v713 = vld [vmem:[#allocation7 + $0xc] sm:$0xf]
        %v714 = vld [vmem:[#allocation7 + $0x10] sm:$0xf]
        %v715 = vld [vmem:[#allocation7 + $0x14] sm:$0xf]
        %v716 = vld [vmem:[#allocation7 + $0x18] sm:$0xf]
        %v717 = vld [vmem:[#allocation7 + $0x1c] sm:$0xf]
        %v718 = vld [vmem:[#allocation7 + $0x20] sm:$0xf]
        %v719 = vld [vmem:[#allocation7 + $0x24] sm:$0xf]
        %v720 = vld [vmem:[#allocation7 + $0x28] sm:$0xf]
        %v721 = vld [vmem:[#allocation7 + $0x2c] sm:$0xf]
        %v722 = vld [vmem:[#allocation7 + $0x30] sm:$0xf]
        %v723 = vld [vmem:[#allocation7 + $0x34] sm:$0xf]
        %v724 = vld [vmem:[#allocation7 + $0x38] sm:$0xf]
        %v725 = vld [vmem:[#allocation7 + $0x3c] sm:$0xf]
        %v726 = vld [vmem:[%s5] sm:$0x1]
        %v728 = vlaneseq
        %v729 = vshrl.u32 %v728, 7
        %v730 = vsub.s32 0, %v729
        %v731 = vrot.slane %v726, %v730
        %v749 = vunpack.c.l.b16 %v710
        %v750 = vunpack.c.l.b16 %v711
        %v751 = vunpack.c.l.b16 %v712
        %v752 = vunpack.c.l.b16 %v713
        %v753 = vunpack.c.l.b16 %v714
        %v754 = vunpack.c.l.b16 %v715
        %v755 = vunpack.c.l.b16 %v716
        %v756 = vunpack.c.l.b16 %v717
        %v757 = vunpack.c.l.b16 %v718
        %v758 = vunpack.c.l.b16 %v719
        %v759 = vunpack.c.l.b16 %v720
        %v760 = vunpack.c.l.b16 %v721
        %v761 = vunpack.c.l.b16 %v722
        %v762 = vunpack.c.l.b16 %v723
        %v763 = vunpack.c.l.b16 %v724
        %v764 = vunpack.c.l.b16 %v725
        %v765 = vpack.c.b16 %v750, %v749
        %v766 = vpack.c.b16 %v752, %v751
        %v767 = vpack.c.b16 %v754, %v753
        %v768 = vpack.c.b16 %v756, %v755
        %v769 = vpack.c.b16 %v758, %v757
        %v770 = vpack.c.b16 %v760, %v759
        %v771 = vpack.c.b16 %v762, %v761
        %v772 = vpack.c.b16 %v764, %v763
        %781 = vmatprep.subr.bf16.mxu0 0
        %782 = vmatpush1.bf16.msra.mxu0 %v765
        %783 = vmatprep.subr.bf16.mxu0 0
        %784 = vmatpush1.bf16.msra.mxu0 %v766
        %785 = vmatprep.subr.bf16.mxu0 0
        %786 = vmatpush1.bf16.msra.mxu0 %v767
        %787 = vmatprep.subr.bf16.mxu0 0
        %788 = vmatpush1.bf16.msra.mxu0 %v768
        %789 = vmatprep.subr.bf16.mxu0 0
        %790 = vmatpush1.bf16.msra.mxu0 %v769
        %791 = vmatprep.subr.bf16.mxu0 0
        %792 = vmatpush1.bf16.msra.mxu0 %v770
        %793 = vmatprep.subr.bf16.mxu0 0
        %794 = vmatpush1.bf16.msra.mxu0 %v771
        %795 = vmatprep.subr.bf16.mxu0 0
        %796 = vmatpush1.bf16.msra.mxu0 %v772
        %797 = vmatprep.subr.bf16.mxu0 0
        %798 = vmatpush1.bf16.msra.mxu0 0
        %799 = vmatprep.subr.bf16.mxu0 0
        %800 = vmatpush1.bf16.msra.mxu0 0
        %801 = vmatprep.subr.bf16.mxu0 0
        %802 = vmatpush1.bf16.msra.mxu0 0
        %803 = vmatprep.subr.bf16.mxu0 0
        %804 = vmatpush1.bf16.msra.mxu0 0
        %805 = vmatprep.subr.bf16.mxu0 0
        %806 = vmatpush1.bf16.msra.mxu0 0
        %807 = vmatprep.subr.bf16.mxu0 0
        %808 = vmatpush1.bf16.msra.mxu0 0
        %809 = vmatprep.subr.bf16.mxu0 0
        %810 = vmatpush1.bf16.msra.mxu0 0
        %811 = vmatprep.subr.bf16.mxu0 0
        %812 = vmatpush1.bf16.msra.mxu0 0
        %813 = vmatprep.mubr.bf16.mxu0 0
        %814 = vmatmul.mubr.bf16.gmra.mrb[0].mxu0 %v709
        %v815 = vpop.f32.mrb[0].mxu0
        %v816 = vadd.f32 %v731, %v815
        %v817 = vpop.f32.mrb[0].mxu0
        %v818 = vpop.f32.mrb[0].mxu0
        %v819 = vpop.f32.mrb[0].mxu0
        %820 = vdwg.mxu0
        %v821 = vmax.f32 %v816, 0.0
        %v822 = vadd.f32 %v821, %v704
        %v823 = vpack.c.bf16 %v822, %v822
        %v824 = vld [vmem:[%s6] sm:$0xf]
        %v825 = vld [vmem:[%s6 + $0x4] sm:$0xf]
        %v826 = vld [vmem:[%s6 + $0x8] sm:$0xf]
        %v827 = vld [vmem:[%s6 + $0xc] sm:$0xf]
        %v828 = vld [vmem:[%s6 + $0x10] sm:$0xf]
        %v829 = vld [vmem:[%s6 + $0x14] sm:$0xf]
        %v830 = vld [vmem:[%s6 + $0x18] sm:$0xf]
        %v831 = vld [vmem:[%s6 + $0x1c] sm:$0xf]
        %v832 = vld [vmem:[%s6 + $0x20] sm:$0xf]
        %v833 = vld [vmem:[%s6 + $0x24] sm:$0xf]
        %v834 = vld [vmem:[%s6 + $0x28] sm:$0xf]
        %v835 = vld [vmem:[%s6 + $0x2c] sm:$0xf]
        %v836 = vld [vmem:[%s6 + $0x30] sm:$0xf]
        %v837 = vld [vmem:[%s6 + $0x34] sm:$0xf]
        %v838 = vld [vmem:[%s6 + $0x38] sm:$0xf]
        %v839 = vld [vmem:[%s6 + $0x3c] sm:$0xf]
        %v840 = vld [vmem:[%s7] sm:$0x1]
        %v842 = vlaneseq
        %v843 = vshrl.u32 %v842, 7
        %v844 = vsub.s32 0, %v843
        %v845 = vrot.slane %v840, %v844
        %v863 = vunpack.c.l.b16 %v824
        %v864 = vunpack.c.l.b16 %v825
        %v865 = vunpack.c.l.b16 %v826
        %v866 = vunpack.c.l.b16 %v827
        %v867 = vunpack.c.l.b16 %v828
        %v868 = vunpack.c.l.b16 %v829
        %v869 = vunpack.c.l.b16 %v830
        %v870 = vunpack.c.l.b16 %v831
        %v871 = vunpack.c.l.b16 %v832
        %v872 = vunpack.c.l.b16 %v833
        %v873 = vunpack.c.l.b16 %v834
        %v874 = vunpack.c.l.b16 %v835
        %v875 = vunpack.c.l.b16 %v836
        %v876 = vunpack.c.l.b16 %v837
        %v877 = vunpack.c.l.b16 %v838
        %v878 = vunpack.c.l.b16 %v839
        %v879 = vpack.c.b16 %v864, %v863
        %v880 = vpack.c.b16 %v866, %v865
        %v881 = vpack.c.b16 %v868, %v867
        %v882 = vpack.c.b16 %v870, %v869
        %v883 = vpack.c.b16 %v872, %v871
        %v884 = vpack.c.b16 %v874, %v873
        %v885 = vpack.c.b16 %v876, %v875
        %v886 = vpack.c.b16 %v878, %v877
        %895 = vmatprep.subr.bf16.mxu0 0
        %896 = vmatpush1.bf16.msra.mxu0 %v879
        %897 = vmatprep.subr.bf16.mxu0 0
        %898 = vmatpush1.bf16.msra.mxu0 %v880
        %899 = vmatprep.subr.bf16.mxu0 0
        %900 = vmatpush1.bf16.msra.mxu0 %v881
        %901 = vmatprep.subr.bf16.mxu0 0
        %902 = vmatpush1.bf16.msra.mxu0 %v882
        %903 = vmatprep.subr.bf16.mxu0 0
        %904 = vmatpush1.bf16.msra.mxu0 %v883
        %905 = vmatprep.subr.bf16.mxu0 0
        %906 = vmatpush1.bf16.msra.mxu0 %v884
        %907 = vmatprep.subr.bf16.mxu0 0
        %908 = vmatpush1.bf16.msra.mxu0 %v885
        %909 = vmatprep.subr.bf16.mxu0 0
        %910 = vmatpush1.bf16.msra.mxu0 %v886
        %911 = vmatprep.subr.bf16.mxu0 0
        %912 = vmatpush1.bf16.msra.mxu0 0
        %913 = vmatprep.subr.bf16.mxu0 0
        %914 = vmatpush1.bf16.msra.mxu0 0
        %915 = vmatprep.subr.bf16.mxu0 0
        %916 = vmatpush1.bf16.msra.mxu0 0
        %917 = vmatprep.subr.bf16.mxu0 0
        %918 = vmatpush1.bf16.msra.mxu0 0
        %919 = vmatprep.subr.bf16.mxu0 0
        %920 = vmatpush1.bf16.msra.mxu0 0
        %921 = vmatprep.subr.bf16.mxu0 0
        %922 = vmatpush1.bf16.msra.mxu0 0
        %923 = vmatprep.subr.bf16.mxu0 0
        %924 = vmatpush1.bf16.msra.mxu0 0
        %925 = vmatprep.subr.bf16.mxu0 0
        %926 = vmatpush1.bf16.msra.mxu0 0
        %927 = vmatprep.mubr.bf16.mxu0 0
        %928 = vmatmul.mubr.bf16.gmra.mrb[0].mxu0 %v823
        %v929 = vpop.f32.mrb[0].mxu0
        %v930 = vadd.f32 %v845, %v929
        %v931 = vpop.f32.mrb[0].mxu0
        %v932 = vpop.f32.mrb[0].mxu0
        %v933 = vpop.f32.mrb[0].mxu0
        %934 = vdwg.mxu0
        %v936 = vcombine.high %v930, %v930
        %v938 = vunpack.c.l.s4 1966171168
        %v939 = vunpack.c.0.s8 %v938
        %v940 = vlaneseq
        %v941 = vshrl.u32 %v940, 7
        %v942 = vsub.s32 %v939, %v941
        %v943 = vrot.slane %v930, %v942
        %v945 = vunpack.c.l.s4 1966171168
        %v946 = vunpack.c.0.s8 %v945
        %v947 = vlaneseq
        %v948 = vshrl.u32 %v947, 7
        %v949 = vsub.s32 %v946, %v948
        %v950 = vrot.slane %v936, %v949
        %v951 = vcombine.high %v943, %v943
        %v952 = vcombine.high %v950, %v950
        %v954 = vunpack.c.l.s4 1966171168
        %v955 = vunpack.c.0.s8 %v954
        %v956 = vlaneseq
        %v957 = vshrl.u32 %v956, 7
        %v958 = vsub.s32 %v955, %v957
        %v959 = vrot.slane %v943, %v958
        %v961 = vunpack.c.l.s4 1966171168
        %v962 = vunpack.c.0.s8 %v961
        %v963 = vlaneseq
        %v964 = vshrl.u32 %v963, 7
        %v965 = vsub.s32 %v962, %v964
        %v966 = vrot.slane %v950, %v965
        %v968 = vunpack.c.l.s4 1966171168
        %v969 = vunpack.c.0.s8 %v968
        %v970 = vlaneseq
        %v971 = vshrl.u32 %v970, 7
        %v972 = vsub.s32 %v969, %v971
        %v973 = vrot.slane %v951, %v972
        %v975 = vunpack.c.l.s4 1966171168
        %v976 = vunpack.c.0.s8 %v975
        %v977 = vlaneseq
        %v978 = vshrl.u32 %v977, 7
        %v979 = vsub.s32 %v976, %v978
        %v980 = vrot.slane %v952, %v979
        %v981 = vcombine.high %v959, %v959
        %v982 = vcombine.high %v966, %v966
        %v983 = vcombine.high %v973, %v973
        %v984 = vcombine.high %v980, %v980
        %v985 = vld [vmem:[%s327] sm:$0xff]
        %v986 = vlaneseq
        %v987 = vshrl.u32 %v986, 7
        %v988 = vsub.s32 0, %v987
        %v989 = vrot.slane %v985, %v988
        %991 = vbcast.lane.b32.xlu0 %v989, 256
        %v992 = vpop.permute.xlu0 %991
        %s994 = sor.u32 256, 8
        %995 = vbcast.lane.b32.xlu0 %v989, %s994
        %v996 = vpop.permute.xlu0 %995
        %v997 = vlaneseq
        %v998 = vshrl.u32 %v997, 7
        %v999 = vsub.s32 1, %v998
        %v1000 = vrot.slane %v985, %v999
        %1002 = vbcast.lane.b32.xlu0 %v1000, 256
        %v1003 = vpop.permute.xlu0 %1002
        %s1005 = sor.u32 256, 8
        %1006 = vbcast.lane.b32.xlu0 %v1000, %s1005
        %v1007 = vpop.permute.xlu0 %1006
        %v1008 = vlaneseq
        %v1009 = vshrl.u32 %v1008, 7
        %v1010 = vsub.s32 2, %v1009
        %v1011 = vrot.slane %v985, %v1010
        %1013 = vbcast.lane.b32.xlu0 %v1011, 256
        %v1014 = vpop.permute.xlu0 %1013
        %s1016 = sor.u32 256, 8
        %1017 = vbcast.lane.b32.xlu0 %v1011, %s1016
        %v1018 = vpop.permute.xlu0 %1017
        %v1019 = vlaneseq
        %v1020 = vshrl.u32 %v1019, 7
        %v1021 = vsub.s32 3, %v1020
        %v1022 = vrot.slane %v985, %v1021
        %1024 = vbcast.lane.b32.xlu0 %v1022, 256
        %v1025 = vpop.permute.xlu0 %1024
        %s1027 = sor.u32 256, 8
        %1028 = vbcast.lane.b32.xlu0 %v1022, %s1027
        %v1029 = vpop.permute.xlu0 %1028
        %v1030 = vlaneseq
        %v1031 = vshrl.u32 %v1030, 7
        %v1032 = vsub.s32 4, %v1031
        %v1033 = vrot.slane %v985, %v1032
        %1035 = vbcast.lane.b32.xlu0 %v1033, 256
        %v1036 = vpop.permute.xlu0 %1035
        %s1038 = sor.u32 256, 8
        %1039 = vbcast.lane.b32.xlu0 %v1033, %s1038
        %v1040 = vpop.permute.xlu0 %1039
        %v1041 = vlaneseq
        %v1042 = vshrl.u32 %v1041, 7
        %v1043 = vsub.s32 5, %v1042
        %v1044 = vrot.slane %v985, %v1043
        %1046 = vbcast.lane.b32.xlu0 %v1044, 256
        %v1047 = vpop.permute.xlu0 %1046
        %s1049 = sor.u32 256, 8
        %1050 = vbcast.lane.b32.xlu0 %v1044, %s1049
        %v1051 = vpop.permute.xlu0 %1050
        %v1052 = vlaneseq
        %v1053 = vshrl.u32 %v1052, 7
        %v1054 = vsub.s32 6, %v1053
        %v1055 = vrot.slane %v985, %v1054
        %1057 = vbcast.lane.b32.xlu0 %v1055, 256
        %v1058 = vpop.permute.xlu0 %1057
        %s1060 = sor.u32 256, 8
        %1061 = vbcast.lane.b32.xlu0 %v1055, %s1060
        %v1062 = vpop.permute.xlu0 %1061
        %v1063 = vlaneseq
        %v1064 = vshrl.u32 %v1063, 7
        %v1065 = vsub.s32 7, %v1064
        %v1066 = vrot.slane %v985, %v1065
        %1068 = vbcast.lane.b32.xlu0 %v1066, 256
        %v1069 = vpop.permute.xlu0 %1068
        %s1071 = sor.u32 256, 8
        %1072 = vbcast.lane.b32.xlu0 %v1066, %s1071
        %v1073 = vpop.permute.xlu0 %1072
        %vm1074 = vcmp.eq.s32.totalorder %v992, %v388
        %vm1075 = vcmp.eq.s32.totalorder %v996, %v388
        %vm1076 = vcmp.eq.s32.totalorder %v1003, %v388
        %vm1077 = vcmp.eq.s32.totalorder %v1007, %v388
        %vm1078 = vcmp.eq.s32.totalorder %v1014, %v388
        %vm1079 = vcmp.eq.s32.totalorder %v1018, %v388
        %vm1080 = vcmp.eq.s32.totalorder %v1025, %v388
        %vm1081 = vcmp.eq.s32.totalorder %v1029, %v388
        %vm1082 = vcmp.eq.s32.totalorder %v1036, %v388
        %vm1083 = vcmp.eq.s32.totalorder %v1040, %v388
        %vm1084 = vcmp.eq.s32.totalorder %v1047, %v388
        %vm1085 = vcmp.eq.s32.totalorder %v1051, %v388
        %vm1086 = vcmp.eq.s32.totalorder %v1058, %v388
        %vm1087 = vcmp.eq.s32.totalorder %v1062, %v388
        %vm1088 = vcmp.eq.s32.totalorder %v1069, %v388
        %vm1089 = vcmp.eq.s32.totalorder %v1073, %v388
        %v1090 = vlaneseq
        %v1091 = vshrl.u32 %v1090, 7
        %v1092 = vsub.s32 0, %v1091
        %v1093 = vrot.slane %v959, %v1092
        %v1094 = vlaneseq
        %v1095 = vshrl.u32 %v1094, 7
        %v1096 = vsub.s32 0, %v1095
        %v1097 = vrot.slane %v973, %v1096
        %v1098 = vlaneseq
        %v1099 = vshrl.u32 %v1098, 7
        %v1100 = vsub.s32 0, %v1099
        %v1101 = vrot.slane %v981, %v1100
        %v1102 = vlaneseq
        %v1103 = vshrl.u32 %v1102, 7
        %v1104 = vsub.s32 0, %v1103
        %v1105 = vrot.slane %v983, %v1104
        %v1106 = vlaneseq
        %v1107 = vshrl.u32 %v1106, 7
        %v1108 = vsub.s32 0, %v1107
        %v1109 = vrot.slane %v966, %v1108
        %v1110 = vlaneseq
        %v1111 = vshrl.u32 %v1110, 7
        %v1112 = vsub.s32 0, %v1111
        %v1113 = vrot.slane %v980, %v1112
        %v1114 = vlaneseq
        %v1115 = vshrl.u32 %v1114, 7
        %v1116 = vsub.s32 0, %v1115
        %v1117 = vrot.slane %v982, %v1116
        %v1118 = vlaneseq
        %v1119 = vshrl.u32 %v1118, 7
        %v1120 = vsub.s32 0, %v1119
        %v1121 = vrot.slane %v984, %v1120
        %v1130 = vsel %vm1074, %v1093, 0.0
        %v1131 = vsel %vm1075, %v1093, 0.0
        %v1132 = vsel %vm1076, %v1097, 0.0
        %v1133 = vsel %vm1077, %v1097, 0.0
        %v1134 = vsel %vm1078, %v1101, 0.0
        %v1135 = vsel %vm1079, %v1101, 0.0
        %v1136 = vsel %vm1080, %v1105, 0.0
        %v1137 = vsel %vm1081, %v1105, 0.0
        %v1138 = vsel %vm1082, %v1109, 0.0
        %v1139 = vsel %vm1083, %v1109, 0.0
        %v1140 = vsel %vm1084, %v1113, 0.0
        %v1141 = vsel %vm1085, %v1113, 0.0
        %v1142 = vsel %vm1086, %v1117, 0.0
        %v1143 = vsel %vm1087, %v1117, 0.0
        %v1144 = vsel %vm1088, %v1121, 0.0
        %v1145 = vsel %vm1089, %v1121, 0.0
        %1146 = vadd.xlane.f32.xlu0 %v1130
        %v1147 = vpop.xlane.xlu0 %1146
        %1148 = vadd.xlane.f32.xlu0 %v1131
        %v1149 = vpop.xlane.xlu0 %1148
        %1150 = vadd.xlane.f32.xlu0 %v1132
        %v1151 = vpop.xlane.xlu0 %1150
        %1152 = vadd.xlane.f32.xlu0 %v1133
        %v1153 = vpop.xlane.xlu0 %1152
        %1154 = vadd.xlane.f32.xlu0 %v1134
        %v1155 = vpop.xlane.xlu0 %1154
        %1156 = vadd.xlane.f32.xlu0 %v1135
        %v1157 = vpop.xlane.xlu0 %1156
        %1158 = vadd.xlane.f32.xlu0 %v1136
        %v1159 = vpop.xlane.xlu0 %1158
        %1160 = vadd.xlane.f32.xlu0 %v1137
        %v1161 = vpop.xlane.xlu0 %1160
        %1162 = vadd.xlane.f32.xlu0 %v1138
        %v1163 = vpop.xlane.xlu0 %1162
        %1164 = vadd.xlane.f32.xlu0 %v1139
        %v1165 = vpop.xlane.xlu0 %1164
        %1166 = vadd.xlane.f32.xlu0 %v1140
        %v1167 = vpop.xlane.xlu0 %1166
        %1168 = vadd.xlane.f32.xlu0 %v1141
        %v1169 = vpop.xlane.xlu0 %1168
        %1170 = vadd.xlane.f32.xlu0 %v1142
        %v1171 = vpop.xlane.xlu0 %1170
        %1172 = vadd.xlane.f32.xlu0 %v1143
        %v1173 = vpop.xlane.xlu0 %1172
        %1174 = vadd.xlane.f32.xlu0 %v1144
        %v1175 = vpop.xlane.xlu0 %1174
        %1176 = vadd.xlane.f32.xlu0 %v1145
        %v1177 = vpop.xlane.xlu0 %1176
        %v1194 = vlaneseq
        %v1195 = vshrl.u32 %v1194, 7
        %v1196 = vsub.s32 %v388, %v1195
        %v1197 = vrot.slane %v1147, %v1196
        %v1198 = vadd.s32 %v388, 4294967288
        %v1199 = vlaneseq
        %v1200 = vshrl.u32 %v1199, 7
        %v1201 = vsub.s32 %v1198, %v1200
        %v1202 = vrot.slane %v1149, %v1201
        %vm1203 = vcmask 130112
        %v1204 = vsel %vm1203, %v1202, %v1197
        %v1205 = vlaneseq
        %v1206 = vshrl.u32 %v1205, 7
        %v1207 = vsub.s32 %v388, %v1206
        %v1208 = vrot.slane %v1151, %v1207
        %v1209 = vlaneseq
        %v1210 = vshrl.u32 %v1209, 7
        %v1211 = vsub.s32 %v1198, %v1210
        %v1212 = vrot.slane %v1153, %v1211
        %v1213 = vsel %vm1203, %v1212, %v1208
        %v1214 = vlaneseq
        %v1215 = vshrl.u32 %v1214, 7
        %v1216 = vsub.s32 %v388, %v1215
        %v1217 = vrot.slane %v1155, %v1216
        %v1218 = vlaneseq
        %v1219 = vshrl.u32 %v1218, 7
        %v1220 = vsub.s32 %v1198, %v1219
        %v1221 = vrot.slane %v1157, %v1220
        %v1222 = vsel %vm1203, %v1221, %v1217
        %v1223 = vlaneseq
        %v1224 = vshrl.u32 %v1223, 7
        %v1225 = vsub.s32 %v388, %v1224
        %v1226 = vrot.slane %v1159, %v1225
        %v1227 = vlaneseq
        %v1228 = vshrl.u32 %v1227, 7
        %v1229 = vsub.s32 %v1198, %v1228
        %v1230 = vrot.slane %v1161, %v1229
        %v1231 = vsel %vm1203, %v1230, %v1226
        %v1232 = vlaneseq
        %v1233 = vshrl.u32 %v1232, 7
        %v1234 = vsub.s32 %v388, %v1233
        %v1235 = vrot.slane %v1163, %v1234
        %v1236 = vlaneseq
        %v1237 = vshrl.u32 %v1236, 7
        %v1238 = vsub.s32 %v1198, %v1237
        %v1239 = vrot.slane %v1165, %v1238
        %v1240 = vsel %vm1203, %v1239, %v1235
        %v1241 = vlaneseq
        %v1242 = vshrl.u32 %v1241, 7
        %v1243 = vsub.s32 %v388, %v1242
        %v1244 = vrot.slane %v1167, %v1243
        %v1245 = vlaneseq
        %v1246 = vshrl.u32 %v1245, 7
        %v1247 = vsub.s32 %v1198, %v1246
        %v1248 = vrot.slane %v1169, %v1247
        %v1249 = vsel %vm1203, %v1248, %v1244
        %v1250 = vlaneseq
        %v1251 = vshrl.u32 %v1250, 7
        %v1252 = vsub.s32 %v388, %v1251
        %v1253 = vrot.slane %v1171, %v1252
        %v1254 = vlaneseq
        %v1255 = vshrl.u32 %v1254, 7
        %v1256 = vsub.s32 %v1198, %v1255
        %v1257 = vrot.slane %v1173, %v1256
        %v1258 = vsel %vm1203, %v1257, %v1253
        %v1259 = vlaneseq
        %v1260 = vshrl.u32 %v1259, 7
        %v1261 = vsub.s32 %v388, %v1260
        %v1262 = vrot.slane %v1175, %v1261
        %v1263 = vlaneseq
        %v1264 = vshrl.u32 %v1263, 7
        %v1265 = vsub.s32 %v1198, %v1264
        %v1266 = vrot.slane %v1177, %v1265
        %v1267 = vsel %vm1203, %v1266, %v1262
        %v1268 = vsel %vm605, %v1213, %v1204
        %v1269 = vsel %vm607, %v1222, %v1268
        %v1270 = vsel %vm609, %v1231, %v1269
        %v1271 = vsel %vm611, %v1240, %v1270
        %v1272 = vsel %vm613, %v1249, %v1271
        %v1273 = vsel %vm615, %v1258, %v1272
        %v1274 = vsel %vm617, %v1267, %v1273
        %vm1276 = vcmask 130048
        %1277 = vst.msk [vmem:[%s375] sm:$0xff] %vm1276, %v1274
        %v1278 = vld [vmem:[%s327] sm:$0xff]
        %v1279 = vlaneseq
        %v1280 = vshrl.u32 %v1279, 7
        %v1281 = vsub.s32 0, %v1280
        %v1282 = vrot.slane %v1278, %v1281
        %s1284 = sor.u32 256, 16
        %1285 = vbcast.lane.b32.xlu0 %v1282, %s1284
        %v1286 = vpop.permute.xlu0 %1285
        %s1288 = sor.u32 256, 24
        %1289 = vbcast.lane.b32.xlu0 %v1282, %s1288
        %v1290 = vpop.permute.xlu0 %1289
        %v1291 = vlaneseq
        %v1292 = vshrl.u32 %v1291, 7
        %v1293 = vsub.s32 1, %v1292
        %v1294 = vrot.slane %v1278, %v1293
        %s1296 = sor.u32 256, 16
        %1297 = vbcast.lane.b32.xlu0 %v1294, %s1296
        %v1298 = vpop.permute.xlu0 %1297
        %s1300 = sor.u32 256, 24
        %1301 = vbcast.lane.b32.xlu0 %v1294, %s1300
        %v1302 = vpop.permute.xlu0 %1301
        %v1303 = vlaneseq
        %v1304 = vshrl.u32 %v1303, 7
        %v1305 = vsub.s32 2, %v1304
        %v1306 = vrot.slane %v1278, %v1305
        %s1308 = sor.u32 256, 16
        %1309 = vbcast.lane.b32.xlu0 %v1306, %s1308
        %v1310 = vpop.permute.xlu0 %1309
        %s1312 = sor.u32 256, 24
        %1313 = vbcast.lane.b32.xlu0 %v1306, %s1312
        %v1314 = vpop.permute.xlu0 %1313
        %v1315 = vlaneseq
        %v1316 = vshrl.u32 %v1315, 7
        %v1317 = vsub.s32 3, %v1316
        %v1318 = vrot.slane %v1278, %v1317
        %s1320 = sor.u32 256, 16
        %1321 = vbcast.lane.b32.xlu0 %v1318, %s1320
        %v1322 = vpop.permute.xlu0 %1321
        %s1324 = sor.u32 256, 24
        %1325 = vbcast.lane.b32.xlu0 %v1318, %s1324
        %v1326 = vpop.permute.xlu0 %1325
        %v1327 = vlaneseq
        %v1328 = vshrl.u32 %v1327, 7
        %v1329 = vsub.s32 4, %v1328
        %v1330 = vrot.slane %v1278, %v1329
        %s1332 = sor.u32 256, 16
        %1333 = vbcast.lane.b32.xlu0 %v1330, %s1332
        %v1334 = vpop.permute.xlu0 %1333
        %s1336 = sor.u32 256, 24
        %1337 = vbcast.lane.b32.xlu0 %v1330, %s1336
        %v1338 = vpop.permute.xlu0 %1337
        %v1339 = vlaneseq
        %v1340 = vshrl.u32 %v1339, 7
        %v1341 = vsub.s32 5, %v1340
        %v1342 = vrot.slane %v1278, %v1341
        %s1344 = sor.u32 256, 16
        %1345 = vbcast.lane.b32.xlu0 %v1342, %s1344
        %v1346 = vpop.permute.xlu0 %1345
        %s1348 = sor.u32 256, 24
        %1349 = vbcast.lane.b32.xlu0 %v1342, %s1348
        %v1350 = vpop.permute.xlu0 %1349
        %v1351 = vlaneseq
        %v1352 = vshrl.u32 %v1351, 7
        %v1353 = vsub.s32 6, %v1352
        %v1354 = vrot.slane %v1278, %v1353
        %s1356 = sor.u32 256, 16
        %1357 = vbcast.lane.b32.xlu0 %v1354, %s1356
        %v1358 = vpop.permute.xlu0 %1357
        %s1360 = sor.u32 256, 24
        %1361 = vbcast.lane.b32.xlu0 %v1354, %s1360
        %v1362 = vpop.permute.xlu0 %1361
        %v1363 = vlaneseq
        %v1364 = vshrl.u32 %v1363, 7
        %v1365 = vsub.s32 7, %v1364
        %v1366 = vrot.slane %v1278, %v1365
        %s1368 = sor.u32 256, 16
        %1369 = vbcast.lane.b32.xlu0 %v1366, %s1368
        %v1370 = vpop.permute.xlu0 %1369
        %s1372 = sor.u32 256, 24
        %1373 = vbcast.lane.b32.xlu0 %v1366, %s1372
        %v1374 = vpop.permute.xlu0 %1373
        %vm1375 = vcmp.eq.s32.totalorder %v1286, %v388
        %vm1376 = vcmp.eq.s32.totalorder %v1290, %v388
        %vm1377 = vcmp.eq.s32.totalorder %v1298, %v388
        %vm1378 = vcmp.eq.s32.totalorder %v1302, %v388
        %vm1379 = vcmp.eq.s32.totalorder %v1310, %v388
        %vm1380 = vcmp.eq.s32.totalorder %v1314, %v388
        %vm1381 = vcmp.eq.s32.totalorder %v1322, %v388
        %vm1382 = vcmp.eq.s32.totalorder %v1326, %v388
        %vm1383 = vcmp.eq.s32.totalorder %v1334, %v388
        %vm1384 = vcmp.eq.s32.totalorder %v1338, %v388
        %vm1385 = vcmp.eq.s32.totalorder %v1346, %v388
        %vm1386 = vcmp.eq.s32.totalorder %v1350, %v388
        %vm1387 = vcmp.eq.s32.totalorder %v1358, %v388
        %vm1388 = vcmp.eq.s32.totalorder %v1362, %v388
        %vm1389 = vcmp.eq.s32.totalorder %v1370, %v388
        %vm1390 = vcmp.eq.s32.totalorder %v1374, %v388
        %v1391 = vsel %vm1375, %v1093, 0.0
        %v1392 = vsel %vm1376, %v1093, 0.0
        %v1393 = vsel %vm1377, %v1097, 0.0
        %v1394 = vsel %vm1378, %v1097, 0.0
        %v1395 = vsel %vm1379, %v1101, 0.0
        %v1396 = vsel %vm1380, %v1101, 0.0
        %v1397 = vsel %vm1381, %v1105, 0.0
        %v1398 = vsel %vm1382, %v1105, 0.0
        %v1399 = vsel %vm1383, %v1109, 0.0
        %v1400 = vsel %vm1384, %v1109, 0.0
        %v1401 = vsel %vm1385, %v1113, 0.0
        %v1402 = vsel %vm1386, %v1113, 0.0
        %v1403 = vsel %vm1387, %v1117, 0.0
        %v1404 = vsel %vm1388, %v1117, 0.0
        %v1405 = vsel %vm1389, %v1121, 0.0
        %v1406 = vsel %vm1390, %v1121, 0.0
        %1407 = vadd.xlane.f32.xlu0 %v1391
        %v1408 = vpop.xlane.xlu0 %1407
        %1409 = vadd.xlane.f32.xlu0 %v1392
        %v1410 = vpop.xlane.xlu0 %1409
        %1411 = vadd.xlane.f32.xlu0 %v1393
        %v1412 = vpop.xlane.xlu0 %1411
        %1413 = vadd.xlane.f32.xlu0 %v1394
        %v1414 = vpop.xlane.xlu0 %1413
        %1415 = vadd.xlane.f32.xlu0 %v1395
        %v1416 = vpop.xlane.xlu0 %1415
        %1417 = vadd.xlane.f32.xlu0 %v1396
        %v1418 = vpop.xlane.xlu0 %1417
        %1419 = vadd.xlane.f32.xlu0 %v1397
        %v1420 = vpop.xlane.xlu0 %1419
        %1421 = vadd.xlane.f32.xlu0 %v1398
        %v1422 = vpop.xlane.xlu0 %1421
        %1423 = vadd.xlane.f32.xlu0 %v1399
        %v1424 = vpop.xlane.xlu0 %1423
        %1425 = vadd.xlane.f32.xlu0 %v1400
        %v1426 = vpop.xlane.xlu0 %1425
        %1427 = vadd.xlane.f32.xlu0 %v1401
        %v1428 = vpop.xlane.xlu0 %1427
        %1429 = vadd.xlane.f32.xlu0 %v1402
        %v1430 = vpop.xlane.xlu0 %1429
        %1431 = vadd.xlane.f32.xlu0 %v1403
        %v1432 = vpop.xlane.xlu0 %1431
        %1433 = vadd.xlane.f32.xlu0 %v1404
        %v1434 = vpop.xlane.xlu0 %1433
        %1435 = vadd.xlane.f32.xlu0 %v1405
        %v1436 = vpop.xlane.xlu0 %1435
        %1437 = vadd.xlane.f32.xlu0 %v1406
        %v1438 = vpop.xlane.xlu0 %1437
        %v1455 = vadd.s32 %v388, 4294967280
        %v1456 = vlaneseq
        %v1457 = vshrl.u32 %v1456, 7
        %v1458 = vsub.s32 %v1455, %v1457
        %v1459 = vrot.slane %v1408, %v1458
        %v1460 = vadd.s32 %v388, 4294967272
        %v1461 = vlaneseq
        %v1462 = vshrl.u32 %v1461, 7
        %v1463 = vsub.s32 %v1460, %v1462
        %v1464 = vrot.slane %v1410, %v1463
        %vm1465 = vcmask 261312
        %v1466 = vsel %vm1465, %v1464, %v1459
        %v1467 = vlaneseq
        %v1468 = vshrl.u32 %v1467, 7
        %v1469 = vsub.s32 %v1455, %v1468
        %v1470 = vrot.slane %v1412, %v1469
        %v1471 = vlaneseq
        %v1472 = vshrl.u32 %v1471, 7
        %v1473 = vsub.s32 %v1460, %v1472
        %v1474 = vrot.slane %v1414, %v1473
        %v1475 = vsel %vm1465, %v1474, %v1470
        %v1476 = vlaneseq
        %v1477 = vshrl.u32 %v1476, 7
        %v1478 = vsub.s32 %v1455, %v1477
        %v1479 = vrot.slane %v1416, %v1478
        %v1480 = vlaneseq
        %v1481 = vshrl.u32 %v1480, 7
        %v1482 = vsub.s32 %v1460, %v1481
        %v1483 = vrot.slane %v1418, %v1482
        %v1484 = vsel %vm1465, %v1483, %v1479
        %v1485 = vlaneseq
        %v1486 = vshrl.u32 %v1485, 7
        %v1487 = vsub.s32 %v1455, %v1486
        %v1488 = vrot.slane %v1420, %v1487
        %v1489 = vlaneseq
        %v1490 = vshrl.u32 %v1489, 7
        %v1491 = vsub.s32 %v1460, %v1490
        %v1492 = vrot.slane %v1422, %v1491
        %v1493 = vsel %vm1465, %v1492, %v1488
        %v1494 = vlaneseq
        %v1495 = vshrl.u32 %v1494, 7
        %v1496 = vsub.s32 %v1455, %v1495
        %v1497 = vrot.slane %v1424, %v1496
        %v1498 = vlaneseq
        %v1499 = vshrl.u32 %v1498, 7
        %v1500 = vsub.s32 %v1460, %v1499
        %v1501 = vrot.slane %v1426, %v1500
        %v1502 = vsel %vm1465, %v1501, %v1497
        %v1503 = vlaneseq
        %v1504 = vshrl.u32 %v1503, 7
        %v1505 = vsub.s32 %v1455, %v1504
        %v1506 = vrot.slane %v1428, %v1505
        %v1507 = vlaneseq
        %v1508 = vshrl.u32 %v1507, 7
        %v1509 = vsub.s32 %v1460, %v1508
        %v1510 = vrot.slane %v1430, %v1509
        %v1511 = vsel %vm1465, %v1510, %v1506
        %v1512 = vlaneseq
        %v1513 = vshrl.u32 %v1512, 7
        %v1514 = vsub.s32 %v1455, %v1513
        %v1515 = vrot.slane %v1432, %v1514
        %v1516 = vlaneseq
        %v1517 = vshrl.u32 %v1516, 7
        %v1518 = vsub.s32 %v1460, %v1517
        %v1519 = vrot.slane %v1434, %v1518
        %v1520 = vsel %vm1465, %v1519, %v1515
        %v1521 = vlaneseq
        %v1522 = vshrl.u32 %v1521, 7
        %v1523 = vsub.s32 %v1455, %v1522
        %v1524 = vrot.slane %v1436, %v1523
        %v1525 = vlaneseq
        %v1526 = vshrl.u32 %v1525, 7
        %v1527 = vsub.s32 %v1460, %v1526
        %v1528 = vrot.slane %v1438, %v1527
        %v1529 = vsel %vm1465, %v1528, %v1524
        %v1530 = vsel %vm605, %v1475, %v1466
        %v1531 = vsel %vm607, %v1484, %v1530
        %v1532 = vsel %vm609, %v1493, %v1531
        %v1533 = vsel %vm611, %v1502, %v1532
        %v1534 = vsel %vm613, %v1511, %v1533
        %v1535 = vsel %vm615, %v1520, %v1534
        %v1536 = vsel %vm617, %v1529, %v1535
        %vm1538 = vcmask 261248
        %1539 = vst.msk [vmem:[%s375] sm:$0xff] %vm1538, %v1536
        %v1540 = vld [vmem:[%s327] sm:$0xff]
        %v1541 = vlaneseq
        %v1542 = vshrl.u32 %v1541, 7
        %v1543 = vsub.s32 0, %v1542
        %v1544 = vrot.slane %v1540, %v1543
        %s1546 = sor.u32 256, 32
        %1547 = vbcast.lane.b32.xlu0 %v1544, %s1546
        %v1548 = vpop.permute.xlu0 %1547
        %s1550 = sor.u32 256, 40
        %1551 = vbcast.lane.b32.xlu0 %v1544, %s1550
        %v1552 = vpop.permute.xlu0 %1551
        %v1553 = vlaneseq
        %v1554 = vshrl.u32 %v1553, 7
        %v1555 = vsub.s32 1, %v1554
        %v1556 = vrot.slane %v1540, %v1555
        %s1558 = sor.u32 256, 32
        %1559 = vbcast.lane.b32.xlu0 %v1556, %s1558
        %v1560 = vpop.permute.xlu0 %1559
        %s1562 = sor.u32 256, 40
        %1563 = vbcast.lane.b32.xlu0 %v1556, %s1562
        %v1564 = vpop.permute.xlu0 %1563
        %v1565 = vlaneseq
        %v1566 = vshrl.u32 %v1565, 7
        %v1567 = vsub.s32 2, %v1566
        %v1568 = vrot.slane %v1540, %v1567
        %s1570 = sor.u32 256, 32
        %1571 = vbcast.lane.b32.xlu0 %v1568, %s1570
        %v1572 = vpop.permute.xlu0 %1571
        %s1574 = sor.u32 256, 40
        %1575 = vbcast.lane.b32.xlu0 %v1568, %s1574
        %v1576 = vpop.permute.xlu0 %1575
        %v1577 = vlaneseq
        %v1578 = vshrl.u32 %v1577, 7
        %v1579 = vsub.s32 3, %v1578
        %v1580 = vrot.slane %v1540, %v1579
        %s1582 = sor.u32 256, 32
        %1583 = vbcast.lane.b32.xlu0 %v1580, %s1582
        %v1584 = vpop.permute.xlu0 %1583
        %s1586 = sor.u32 256, 40
        %1587 = vbcast.lane.b32.xlu0 %v1580, %s1586
        %v1588 = vpop.permute.xlu0 %1587
        %v1589 = vlaneseq
        %v1590 = vshrl.u32 %v1589, 7
        %v1591 = vsub.s32 4, %v1590
        %v1592 = vrot.slane %v1540, %v1591
        %s1594 = sor.u32 256, 32
        %1595 = vbcast.lane.b32.xlu0 %v1592, %s1594
        %v1596 = vpop.permute.xlu0 %1595
        %s1598 = sor.u32 256, 40
        %1599 = vbcast.lane.b32.xlu0 %v1592, %s1598
        %v1600 = vpop.permute.xlu0 %1599
        %v1601 = vlaneseq
        %v1602 = vshrl.u32 %v1601, 7
        %v1603 = vsub.s32 5, %v1602
        %v1604 = vrot.slane %v1540, %v1603
        %s1606 = sor.u32 256, 32
        %1607 = vbcast.lane.b32.xlu0 %v1604, %s1606
        %v1608 = vpop.permute.xlu0 %1607
        %s1610 = sor.u32 256, 40
        %1611 = vbcast.lane.b32.xlu0 %v1604, %s1610
        %v1612 = vpop.permute.xlu0 %1611
        %v1613 = vlaneseq
        %v1614 = vshrl.u32 %v1613, 7
        %v1615 = vsub.s32 6, %v1614
        %v1616 = vrot.slane %v1540, %v1615
        %s1618 = sor.u32 256, 32
        %1619 = vbcast.lane.b32.xlu0 %v1616, %s1618
        %v1620 = vpop.permute.xlu0 %1619
        %s1622 = sor.u32 256, 40
        %1623 = vbcast.lane.b32.xlu0 %v1616, %s1622
        %v1624 = vpop.permute.xlu0 %1623
        %v1625 = vlaneseq
        %v1626 = vshrl.u32 %v1625, 7
        %v1627 = vsub.s32 7, %v1626
        %v1628 = vrot.slane %v1540, %v1627
        %s1630 = sor.u32 256, 32
        %1631 = vbcast.lane.b32.xlu0 %v1628, %s1630
        %v1632 = vpop.permute.xlu0 %1631
        %s1634 = sor.u32 256, 40
        %1635 = vbcast.lane.b32.xlu0 %v1628, %s1634
        %v1636 = vpop.permute.xlu0 %1635
        %vm1637 = vcmp.eq.s32.totalorder %v1548, %v388
        %vm1638 = vcmp.eq.s32.totalorder %v1552, %v388
        %vm1639 = vcmp.eq.s32.totalorder %v1560, %v388
        %vm1640 = vcmp.eq.s32.totalorder %v1564, %v388
        %vm1641 = vcmp.eq.s32.totalorder %v1572, %v388
        %vm1642 = vcmp.eq.s32.totalorder %v1576, %v388
        %vm1643 = vcmp.eq.s32.totalorder %v1584, %v388
        %vm1644 = vcmp.eq.s32.totalorder %v1588, %v388
        %vm1645 = vcmp.eq.s32.totalorder %v1596, %v388
        %vm1646 = vcmp.eq.s32.totalorder %v1600, %v388
        %vm1647 = vcmp.eq.s32.totalorder %v1608, %v388
        %vm1648 = vcmp.eq.s32.totalorder %v1612, %v388
        %vm1649 = vcmp.eq.s32.totalorder %v1620, %v388
        %vm1650 = vcmp.eq.s32.totalorder %v1624, %v388
        %vm1651 = vcmp.eq.s32.totalorder %v1632, %v388
        %vm1652 = vcmp.eq.s32.totalorder %v1636, %v388
        %v1653 = vsel %vm1637, %v1093, 0.0
        %v1654 = vsel %vm1638, %v1093, 0.0
        %v1655 = vsel %vm1639, %v1097, 0.0
        %v1656 = vsel %vm1640, %v1097, 0.0
        %v1657 = vsel %vm1641, %v1101, 0.0
        %v1658 = vsel %vm1642, %v1101, 0.0
        %v1659 = vsel %vm1643, %v1105, 0.0
        %v1660 = vsel %vm1644, %v1105, 0.0
        %v1661 = vsel %vm1645, %v1109, 0.0
        %v1662 = vsel %vm1646, %v1109, 0.0
        %v1663 = vsel %vm1647, %v1113, 0.0
        %v1664 = vsel %vm1648, %v1113, 0.0
        %v1665 = vsel %vm1649, %v1117, 0.0
        %v1666 = vsel %vm1650, %v1117, 0.0
        %v1667 = vsel %vm1651, %v1121, 0.0
        %v1668 = vsel %vm1652, %v1121, 0.0
        %1669 = vadd.xlane.f32.xlu0 %v1653
        %v1670 = vpop.xlane.xlu0 %1669
        %1671 = vadd.xlane.f32.xlu0 %v1654
        %v1672 = vpop.xlane.xlu0 %1671
        %1673 = vadd.xlane.f32.xlu0 %v1655
        %v1674 = vpop.xlane.xlu0 %1673
        %1675 = vadd.xlane.f32.xlu0 %v1656
        %v1676 = vpop.xlane.xlu0 %1675
        %1677 = vadd.xlane.f32.xlu0 %v1657
        %v1678 = vpop.xlane.xlu0 %1677
        %1679 = vadd.xlane.f32.xlu0 %v1658
        %v1680 = vpop.xlane.xlu0 %1679
        %1681 = vadd.xlane.f32.xlu0 %v1659
        %v1682 = vpop.xlane.xlu0 %1681
        %1683 = vadd.xlane.f32.xlu0 %v1660
        %v1684 = vpop.xlane.xlu0 %1683
        %1685 = vadd.xlane.f32.xlu0 %v1661
        %v1686 = vpop.xlane.xlu0 %1685
        %1687 = vadd.xlane.f32.xlu0 %v1662
        %v1688 = vpop.xlane.xlu0 %1687
        %1689 = vadd.xlane.f32.xlu0 %v1663
        %v1690 = vpop.xlane.xlu0 %1689
        %1691 = vadd.xlane.f32.xlu0 %v1664
        %v1692 = vpop.xlane.xlu0 %1691
        %1693 = vadd.xlane.f32.xlu0 %v1665
        %v1694 = vpop.xlane.xlu0 %1693
        %1695 = vadd.xlane.f32.xlu0 %v1666
        %v1696 = vpop.xlane.xlu0 %1695
        %1697 = vadd.xlane.f32.xlu0 %v1667
        %v1698 = vpop.xlane.xlu0 %1697
        %1699 = vadd.xlane.f32.xlu0 %v1668
        %v1700 = vpop.xlane.xlu0 %1699
        %v1717 = vadd.s32 %v388, 4294967264
        %v1718 = vlaneseq
        %v1719 = vshrl.u32 %v1718, 7
        %v1720 = vsub.s32 %v1717, %v1719
        %v1721 = vrot.slane %v1670, %v1720
        %v1722 = vadd.s32 %v388, 4294967256
        %v1723 = vlaneseq
        %v1724 = vshrl.u32 %v1723, 7
        %v1725 = vsub.s32 %v1722, %v1724
        %v1726 = vrot.slane %v1672, %v1725
        %vm1727 = vcmask 392512
        %v1728 = vsel %vm1727, %v1726, %v1721
        %v1729 = vlaneseq
        %v1730 = vshrl.u32 %v1729, 7
        %v1731 = vsub.s32 %v1717, %v1730
        %v1732 = vrot.slane %v1674, %v1731
        %v1733 = vlaneseq
        %v1734 = vshrl.u32 %v1733, 7
        %v1735 = vsub.s32 %v1722, %v1734
        %v1736 = vrot.slane %v1676, %v1735
        %v1737 = vsel %vm1727, %v1736, %v1732
        %v1738 = vlaneseq
        %v1739 = vshrl.u32 %v1738, 7
        %v1740 = vsub.s32 %v1717, %v1739
        %v1741 = vrot.slane %v1678, %v1740
        %v1742 = vlaneseq
        %v1743 = vshrl.u32 %v1742, 7
        %v1744 = vsub.s32 %v1722, %v1743
        %v1745 = vrot.slane %v1680, %v1744
        %v1746 = vsel %vm1727, %v1745, %v1741
        %v1747 = vlaneseq
        %v1748 = vshrl.u32 %v1747, 7
        %v1749 = vsub.s32 %v1717, %v1748
        %v1750 = vrot.slane %v1682, %v1749
        %v1751 = vlaneseq
        %v1752 = vshrl.u32 %v1751, 7
        %v1753 = vsub.s32 %v1722, %v1752
        %v1754 = vrot.slane %v1684, %v1753
        %v1755 = vsel %vm1727, %v1754, %v1750
        %v1756 = vlaneseq
        %v1757 = vshrl.u32 %v1756, 7
        %v1758 = vsub.s32 %v1717, %v1757
        %v1759 = vrot.slane %v1686, %v1758
        %v1760 = vlaneseq
        %v1761 = vshrl.u32 %v1760, 7
        %v1762 = vsub.s32 %v1722, %v1761
        %v1763 = vrot.slane %v1688, %v1762
        %v1764 = vsel %vm1727, %v1763, %v1759
        %v1765 = vlaneseq
        %v1766 = vshrl.u32 %v1765, 7
        %v1767 = vsub.s32 %v1717, %v1766
        %v1768 = vrot.slane %v1690, %v1767
        %v1769 = vlaneseq
        %v1770 = vshrl.u32 %v1769, 7
        %v1771 = vsub.s32 %v1722, %v1770
        %v1772 = vrot.slane %v1692, %v1771
        %v1773 = vsel %vm1727, %v1772, %v1768
        %v1774 = vlaneseq
        %v1775 = vshrl.u32 %v1774, 7
        %v1776 = vsub.s32 %v1717, %v1775
        %v1777 = vrot.slane %v1694, %v1776
        %v1778 = vlaneseq
        %v1779 = vshrl.u32 %v1778, 7
        %v1780 = vsub.s32 %v1722, %v1779
        %v1781 = vrot.slane %v1696, %v1780
        %v1782 = vsel %vm1727, %v1781, %v1777
        %v1783 = vlaneseq
        %v1784 = vshrl.u32 %v1783, 7
        %v1785 = vsub.s32 %v1717, %v1784
        %v1786 = vrot.slane %v1698, %v1785
        %v1787 = vlaneseq
        %v1788 = vshrl.u32 %v1787, 7
        %v1789 = vsub.s32 %v1722, %v1788
        %v1790 = vrot.slane %v1700, %v1789
        %v1791 = vsel %vm1727, %v1790, %v1786
        %v1792 = vsel %vm605, %v1737, %v1728
        %v1793 = vsel %vm607, %v1746, %v1792
        %v1794 = vsel %vm609, %v1755, %v1793
        %v1795 = vsel %vm611, %v1764, %v1794
        %v1796 = vsel %vm613, %v1773, %v1795
        %v1797 = vsel %vm615, %v1782, %v1796
        %v1798 = vsel %vm617, %v1791, %v1797
        %vm1800 = vcmask 392448
        %1801 = vst.msk [vmem:[%s375] sm:$0xff] %vm1800, %v1798
        %v1802 = vld [vmem:[%s327] sm:$0xff]
        %v1803 = vlaneseq
        %v1804 = vshrl.u32 %v1803, 7
        %v1805 = vsub.s32 0, %v1804
        %v1806 = vrot.slane %v1802, %v1805
        %s1808 = sor.u32 256, 48
        %1809 = vbcast.lane.b32.xlu0 %v1806, %s1808
        %v1810 = vpop.permute.xlu0 %1809
        %s1812 = sor.u32 256, 56
        %1813 = vbcast.lane.b32.xlu0 %v1806, %s1812
        %v1814 = vpop.permute.xlu0 %1813
        %v1815 = vlaneseq
        %v1816 = vshrl.u32 %v1815, 7
        %v1817 = vsub.s32 1, %v1816
        %v1818 = vrot.slane %v1802, %v1817
        %s1820 = sor.u32 256, 48
        %1821 = vbcast.lane.b32.xlu0 %v1818, %s1820
        %v1822 = vpop.permute.xlu0 %1821
        %s1824 = sor.u32 256, 56
        %1825 = vbcast.lane.b32.xlu0 %v1818, %s1824
        %v1826 = vpop.permute.xlu0 %1825
        %v1827 = vlaneseq
        %v1828 = vshrl.u32 %v1827, 7
        %v1829 = vsub.s32 2, %v1828
        %v1830 = vrot.slane %v1802, %v1829
        %s1832 = sor.u32 256, 48
        %1833 = vbcast.lane.b32.xlu0 %v1830, %s1832
        %v1834 = vpop.permute.xlu0 %1833
        %s1836 = sor.u32 256, 56
        %1837 = vbcast.lane.b32.xlu0 %v1830, %s1836
        %v1838 = vpop.permute.xlu0 %1837
        %v1839 = vlaneseq
        %v1840 = vshrl.u32 %v1839, 7
        %v1841 = vsub.s32 3, %v1840
        %v1842 = vrot.slane %v1802, %v1841
        %s1844 = sor.u32 256, 48
        %1845 = vbcast.lane.b32.xlu0 %v1842, %s1844
        %v1846 = vpop.permute.xlu0 %1845
        %s1848 = sor.u32 256, 56
        %1849 = vbcast.lane.b32.xlu0 %v1842, %s1848
        %v1850 = vpop.permute.xlu0 %1849
        %v1851 = vlaneseq
        %v1852 = vshrl.u32 %v1851, 7
        %v1853 = vsub.s32 4, %v1852
        %v1854 = vrot.slane %v1802, %v1853
        %s1856 = sor.u32 256, 48
        %1857 = vbcast.lane.b32.xlu0 %v1854, %s1856
        %v1858 = vpop.permute.xlu0 %1857
        %s1860 = sor.u32 256, 56
        %1861 = vbcast.lane.b32.xlu0 %v1854, %s1860
        %v1862 = vpop.permute.xlu0 %1861
        %v1863 = vlaneseq
        %v1864 = vshrl.u32 %v1863, 7
        %v1865 = vsub.s32 5, %v1864
        %v1866 = vrot.slane %v1802, %v1865
        %s1868 = sor.u32 256, 48
        %1869 = vbcast.lane.b32.xlu0 %v1866, %s1868
        %v1870 = vpop.permute.xlu0 %1869
        %s1872 = sor.u32 256, 56
        %1873 = vbcast.lane.b32.xlu0 %v1866, %s1872
        %v1874 = vpop.permute.xlu0 %1873
        %v1875 = vlaneseq
        %v1876 = vshrl.u32 %v1875, 7
        %v1877 = vsub.s32 6, %v1876
        %v1878 = vrot.slane %v1802, %v1877
        %s1880 = sor.u32 256, 48
        %1881 = vbcast.lane.b32.xlu0 %v1878, %s1880
        %v1882 = vpop.permute.xlu0 %1881
        %s1884 = sor.u32 256, 56
        %1885 = vbcast.lane.b32.xlu0 %v1878, %s1884
        %v1886 = vpop.permute.xlu0 %1885
        %v1887 = vlaneseq
        %v1888 = vshrl.u32 %v1887, 7
        %v1889 = vsub.s32 7, %v1888
        %v1890 = vrot.slane %v1802, %v1889
        %s1892 = sor.u32 256, 48
        %1893 = vbcast.lane.b32.xlu0 %v1890, %s1892
        %v1894 = vpop.permute.xlu0 %1893
        %s1896 = sor.u32 256, 56
        %1897 = vbcast.lane.b32.xlu0 %v1890, %s1896
        %v1898 = vpop.permute.xlu0 %1897
        %vm1899 = vcmp.eq.s32.totalorder %v1810, %v388
        %vm1900 = vcmp.eq.s32.totalorder %v1814, %v388
        %vm1901 = vcmp.eq.s32.totalorder %v1822, %v388
        %vm1902 = vcmp.eq.s32.totalorder %v1826, %v388
        %vm1903 = vcmp.eq.s32.totalorder %v1834, %v388
        %vm1904 = vcmp.eq.s32.totalorder %v1838, %v388
        %vm1905 = vcmp.eq.s32.totalorder %v1846, %v388
        %vm1906 = vcmp.eq.s32.totalorder %v1850, %v388
        %vm1907 = vcmp.eq.s32.totalorder %v1858, %v388
        %vm1908 = vcmp.eq.s32.totalorder %v1862, %v388
        %vm1909 = vcmp.eq.s32.totalorder %v1870, %v388
        %vm1910 = vcmp.eq.s32.totalorder %v1874, %v388
        %vm1911 = vcmp.eq.s32.totalorder %v1882, %v388
        %vm1912 = vcmp.eq.s32.totalorder %v1886, %v388
        %vm1913 = vcmp.eq.s32.totalorder %v1894, %v388
        %vm1914 = vcmp.eq.s32.totalorder %v1898, %v388
        %v1915 = vsel %vm1899, %v1093, 0.0
        %v1916 = vsel %vm1900, %v1093, 0.0
        %v1917 = vsel %vm1901, %v1097, 0.0
        %v1918 = vsel %vm1902, %v1097, 0.0
        %v1919 = vsel %vm1903, %v1101, 0.0
        %v1920 = vsel %vm1904, %v1101, 0.0
        %v1921 = vsel %vm1905, %v1105, 0.0
        %v1922 = vsel %vm1906, %v1105, 0.0
        %v1923 = vsel %vm1907, %v1109, 0.0
        %v1924 = vsel %vm1908, %v1109, 0.0
        %v1925 = vsel %vm1909, %v1113, 0.0
        %v1926 = vsel %vm1910, %v1113, 0.0
        %v1927 = vsel %vm1911, %v1117, 0.0
        %v1928 = vsel %vm1912, %v1117, 0.0
        %v1929 = vsel %vm1913, %v1121, 0.0
        %v1930 = vsel %vm1914, %v1121, 0.0
        %1931 = vadd.xlane.f32.xlu0 %v1915
        %v1932 = vpop.xlane.xlu0 %1931
        %1933 = vadd.xlane.f32.xlu0 %v1916
        %v1934 = vpop.xlane.xlu0 %1933
        %1935 = vadd.xlane.f32.xlu0 %v1917
        %v1936 = vpop.xlane.xlu0 %1935
        %1937 = vadd.xlane.f32.xlu0 %v1918
        %v1938 = vpop.xlane.xlu0 %1937
        %1939 = vadd.xlane.f32.xlu0 %v1919
        %v1940 = vpop.xlane.xlu0 %1939
        %1941 = vadd.xlane.f32.xlu0 %v1920
        %v1942 = vpop.xlane.xlu0 %1941
        %1943 = vadd.xlane.f32.xlu0 %v1921
        %v1944 = vpop.xlane.xlu0 %1943
        %1945 = vadd.xlane.f32.xlu0 %v1922
        %v1946 = vpop.xlane.xlu0 %1945
        %1947 = vadd.xlane.f32.xlu0 %v1923
        %v1948 = vpop.xlane.xlu0 %1947
        %1949 = vadd.xlane.f32.xlu0 %v1924
        %v1950 = vpop.xlane.xlu0 %1949
        %1951 = vadd.xlane.f32.xlu0 %v1925
        %v1952 = vpop.xlane.xlu0 %1951
        %1953 = vadd.xlane.f32.xlu0 %v1926
        %v1954 = vpop.xlane.xlu0 %1953
        %1955 = vadd.xlane.f32.xlu0 %v1927
        %v1956 = vpop.xlane.xlu0 %1955
        %1957 = vadd.xlane.f32.xlu0 %v1928
        %v1958 = vpop.xlane.xlu0 %1957
        %1959 = vadd.xlane.f32.xlu0 %v1929
        %v1960 = vpop.xlane.xlu0 %1959
        %1961 = vadd.xlane.f32.xlu0 %v1930
        %v1962 = vpop.xlane.xlu0 %1961
        %v1979 = vadd.s32 %v388, 4294967248
        %v1980 = vlaneseq
        %v1981 = vshrl.u32 %v1980, 7
        %v1982 = vsub.s32 %v1979, %v1981
        %v1983 = vrot.slane %v1932, %v1982
        %v1984 = vadd.s32 %v388, 4294967240
        %v1985 = vlaneseq
        %v1986 = vshrl.u32 %v1985, 7
        %v1987 = vsub.s32 %v1984, %v1986
        %v1988 = vrot.slane %v1934, %v1987
        %vm1989 = vcmask 523712
        %v1990 = vsel %vm1989, %v1988, %v1983
        %v1991 = vlaneseq
        %v1992 = vshrl.u32 %v1991, 7
        %v1993 = vsub.s32 %v1979, %v1992
        %v1994 = vrot.slane %v1936, %v1993
        %v1995 = vlaneseq
        %v1996 = vshrl.u32 %v1995, 7
        %v1997 = vsub.s32 %v1984, %v1996
        %v1998 = vrot.slane %v1938, %v1997
        %v1999 = vsel %vm1989, %v1998, %v1994
        %v2000 = vlaneseq
        %v2001 = vshrl.u32 %v2000, 7
        %v2002 = vsub.s32 %v1979, %v2001
        %v2003 = vrot.slane %v1940, %v2002
        %v2004 = vlaneseq
        %v2005 = vshrl.u32 %v2004, 7
        %v2006 = vsub.s32 %v1984, %v2005
        %v2007 = vrot.slane %v1942, %v2006
        %v2008 = vsel %vm1989, %v2007, %v2003
        %v2009 = vlaneseq
        %v2010 = vshrl.u32 %v2009, 7
        %v2011 = vsub.s32 %v1979, %v2010
        %v2012 = vrot.slane %v1944, %v2011
        %v2013 = vlaneseq
        %v2014 = vshrl.u32 %v2013, 7
        %v2015 = vsub.s32 %v1984, %v2014
        %v2016 = vrot.slane %v1946, %v2015
        %v2017 = vsel %vm1989, %v2016, %v2012
        %v2018 = vlaneseq
        %v2019 = vshrl.u32 %v2018, 7
        %v2020 = vsub.s32 %v1979, %v2019
        %v2021 = vrot.slane %v1948, %v2020
        %v2022 = vlaneseq
        %v2023 = vshrl.u32 %v2022, 7
        %v2024 = vsub.s32 %v1984, %v2023
        %v2025 = vrot.slane %v1950, %v2024
        %v2026 = vsel %vm1989, %v2025, %v2021
        %v2027 = vlaneseq
        %v2028 = vshrl.u32 %v2027, 7
        %v2029 = vsub.s32 %v1979, %v2028
        %v2030 = vrot.slane %v1952, %v2029
        %v2031 = vlaneseq
        %v2032 = vshrl.u32 %v2031, 7
        %v2033 = vsub.s32 %v1984, %v2032
        %v2034 = vrot.slane %v1954, %v2033
        %v2035 = vsel %vm1989, %v2034, %v2030
        %v2036 = vlaneseq
        %v2037 = vshrl.u32 %v2036, 7
        %v2038 = vsub.s32 %v1979, %v2037
        %v2039 = vrot.slane %v1956, %v2038
        %v2040 = vlaneseq
        %v2041 = vshrl.u32 %v2040, 7
        %v2042 = vsub.s32 %v1984, %v2041
        %v2043 = vrot.slane %v1958, %v2042
        %v2044 = vsel %vm1989, %v2043, %v2039
        %v2045 = vlaneseq
        %v2046 = vshrl.u32 %v2045, 7
        %v2047 = vsub.s32 %v1979, %v2046
        %v2048 = vrot.slane %v1960, %v2047
        %v2049 = vlaneseq
        %v2050 = vshrl.u32 %v2049, 7
        %v2051 = vsub.s32 %v1984, %v2050
        %v2052 = vrot.slane %v1962, %v2051
        %v2053 = vsel %vm1989, %v2052, %v2048
        %v2054 = vsel %vm605, %v1999, %v1990
        %v2055 = vsel %vm607, %v2008, %v2054
        %v2056 = vsel %vm609, %v2017, %v2055
        %v2057 = vsel %vm611, %v2026, %v2056
        %v2058 = vsel %vm613, %v2035, %v2057
        %v2059 = vsel %vm615, %v2044, %v2058
        %v2060 = vsel %vm617, %v2053, %v2059
        %vm2062 = vcmask 523648
        %2063 = vst.msk [vmem:[%s375] sm:$0xff] %vm2062, %v2060
        %v2064 = vld [vmem:[%s327] sm:$0xff]
        %v2065 = vlaneseq
        %v2066 = vshrl.u32 %v2065, 7
        %v2067 = vsub.s32 0, %v2066
        %v2068 = vrot.slane %v2064, %v2067
        %s2070 = sor.u32 256, 64
        %2071 = vbcast.lane.b32.xlu0 %v2068, %s2070
        %v2072 = vpop.permute.xlu0 %2071
        %s2074 = sor.u32 256, 72
        %2075 = vbcast.lane.b32.xlu0 %v2068, %s2074
        %v2076 = vpop.permute.xlu0 %2075
        %v2077 = vlaneseq
        %v2078 = vshrl.u32 %v2077, 7
        %v2079 = vsub.s32 1, %v2078
        %v2080 = vrot.slane %v2064, %v2079
        %s2082 = sor.u32 256, 64
        %2083 = vbcast.lane.b32.xlu0 %v2080, %s2082
        %v2084 = vpop.permute.xlu0 %2083
        %s2086 = sor.u32 256, 72
        %2087 = vbcast.lane.b32.xlu0 %v2080, %s2086
        %v2088 = vpop.permute.xlu0 %2087
        %v2089 = vlaneseq
        %v2090 = vshrl.u32 %v2089, 7
        %v2091 = vsub.s32 2, %v2090
        %v2092 = vrot.slane %v2064, %v2091
        %s2094 = sor.u32 256, 64
        %2095 = vbcast.lane.b32.xlu0 %v2092, %s2094
        %v2096 = vpop.permute.xlu0 %2095
        %s2098 = sor.u32 256, 72
        %2099 = vbcast.lane.b32.xlu0 %v2092, %s2098
        %v2100 = vpop.permute.xlu0 %2099
        %v2101 = vlaneseq
        %v2102 = vshrl.u32 %v2101, 7
        %v2103 = vsub.s32 3, %v2102
        %v2104 = vrot.slane %v2064, %v2103
        %s2106 = sor.u32 256, 64
        %2107 = vbcast.lane.b32.xlu0 %v2104, %s2106
        %v2108 = vpop.permute.xlu0 %2107
        %s2110 = sor.u32 256, 72
        %2111 = vbcast.lane.b32.xlu0 %v2104, %s2110
        %v2112 = vpop.permute.xlu0 %2111
        %v2113 = vlaneseq
        %v2114 = vshrl.u32 %v2113, 7
        %v2115 = vsub.s32 4, %v2114
        %v2116 = vrot.slane %v2064, %v2115
        %s2118 = sor.u32 256, 64
        %2119 = vbcast.lane.b32.xlu0 %v2116, %s2118
        %v2120 = vpop.permute.xlu0 %2119
        %s2122 = sor.u32 256, 72
        %2123 = vbcast.lane.b32.xlu0 %v2116, %s2122
        %v2124 = vpop.permute.xlu0 %2123
        %v2125 = vlaneseq
        %v2126 = vshrl.u32 %v2125, 7
        %v2127 = vsub.s32 5, %v2126
        %v2128 = vrot.slane %v2064, %v2127
        %s2130 = sor.u32 256, 64
        %2131 = vbcast.lane.b32.xlu0 %v2128, %s2130
        %v2132 = vpop.permute.xlu0 %2131
        %s2134 = sor.u32 256, 72
        %2135 = vbcast.lane.b32.xlu0 %v2128, %s2134
        %v2136 = vpop.permute.xlu0 %2135
        %v2137 = vlaneseq
        %v2138 = vshrl.u32 %v2137, 7
        %v2139 = vsub.s32 6, %v2138
        %v2140 = vrot.slane %v2064, %v2139
        %s2142 = sor.u32 256, 64
        %2143 = vbcast.lane.b32.xlu0 %v2140, %s2142
        %v2144 = vpop.permute.xlu0 %2143
        %s2146 = sor.u32 256, 72
        %2147 = vbcast.lane.b32.xlu0 %v2140, %s2146
        %v2148 = vpop.permute.xlu0 %2147
        %v2149 = vlaneseq
        %v2150 = vshrl.u32 %v2149, 7
        %v2151 = vsub.s32 7, %v2150
        %v2152 = vrot.slane %v2064, %v2151
        %s2154 = sor.u32 256, 64
        %2155 = vbcast.lane.b32.xlu0 %v2152, %s2154
        %v2156 = vpop.permute.xlu0 %2155
        %s2158 = sor.u32 256, 72
        %2159 = vbcast.lane.b32.xlu0 %v2152, %s2158
        %v2160 = vpop.permute.xlu0 %2159
        %vm2161 = vcmp.eq.s32.totalorder %v2072, %v388
        %vm2162 = vcmp.eq.s32.totalorder %v2076, %v388
        %vm2163 = vcmp.eq.s32.totalorder %v2084, %v388
        %vm2164 = vcmp.eq.s32.totalorder %v2088, %v388
        %vm2165 = vcmp.eq.s32.totalorder %v2096, %v388
        %vm2166 = vcmp.eq.s32.totalorder %v2100, %v388
        %vm2167 = vcmp.eq.s32.totalorder %v2108, %v388
        %vm2168 = vcmp.eq.s32.totalorder %v2112, %v388
        %vm2169 = vcmp.eq.s32.totalorder %v2120, %v388
        %vm2170 = vcmp.eq.s32.totalorder %v2124, %v388
        %vm2171 = vcmp.eq.s32.totalorder %v2132, %v388
        %vm2172 = vcmp.eq.s32.totalorder %v2136, %v388
        %vm2173 = vcmp.eq.s32.totalorder %v2144, %v388
        %vm2174 = vcmp.eq.s32.totalorder %v2148, %v388
        %vm2175 = vcmp.eq.s32.totalorder %v2156, %v388
        %vm2176 = vcmp.eq.s32.totalorder %v2160, %v388
        %v2177 = vsel %vm2161, %v1093, 0.0
        %v2178 = vsel %vm2162, %v1093, 0.0
        %v2179 = vsel %vm2163, %v1097, 0.0
        %v2180 = vsel %vm2164, %v1097, 0.0
        %v2181 = vsel %vm2165, %v1101, 0.0
        %v2182 = vsel %vm2166, %v1101, 0.0
        %v2183 = vsel %vm2167, %v1105, 0.0
        %v2184 = vsel %vm2168, %v1105, 0.0
        %v2185 = vsel %vm2169, %v1109, 0.0
        %v2186 = vsel %vm2170, %v1109, 0.0
        %v2187 = vsel %vm2171, %v1113, 0.0
        %v2188 = vsel %vm2172, %v1113, 0.0
        %v2189 = vsel %vm2173, %v1117, 0.0
        %v2190 = vsel %vm2174, %v1117, 0.0
        %v2191 = vsel %vm2175, %v1121, 0.0
        %v2192 = vsel %vm2176, %v1121, 0.0
        %2193 = vadd.xlane.f32.xlu0 %v2177
        %v2194 = vpop.xlane.xlu0 %2193
        %2195 = vadd.xlane.f32.xlu0 %v2178
        %v2196 = vpop.xlane.xlu0 %2195
        %2197 = vadd.xlane.f32.xlu0 %v2179
        %v2198 = vpop.xlane.xlu0 %2197
        %2199 = vadd.xlane.f32.xlu0 %v2180
        %v2200 = vpop.xlane.xlu0 %2199
        %2201 = vadd.xlane.f32.xlu0 %v2181
        %v2202 = vpop.xlane.xlu0 %2201
        %2203 = vadd.xlane.f32.xlu0 %v2182
        %v2204 = vpop.xlane.xlu0 %2203
        %2205 = vadd.xlane.f32.xlu0 %v2183
        %v2206 = vpop.xlane.xlu0 %2205
        %2207 = vadd.xlane.f32.xlu0 %v2184
        %v2208 = vpop.xlane.xlu0 %2207
        %2209 = vadd.xlane.f32.xlu0 %v2185
        %v2210 = vpop.xlane.xlu0 %2209
        %2211 = vadd.xlane.f32.xlu0 %v2186
        %v2212 = vpop.xlane.xlu0 %2211
        %2213 = vadd.xlane.f32.xlu0 %v2187
        %v2214 = vpop.xlane.xlu0 %2213
        %2215 = vadd.xlane.f32.xlu0 %v2188
        %v2216 = vpop.xlane.xlu0 %2215
        %2217 = vadd.xlane.f32.xlu0 %v2189
        %v2218 = vpop.xlane.xlu0 %2217
        %2219 = vadd.xlane.f32.xlu0 %v2190
        %v2220 = vpop.xlane.xlu0 %2219
        %2221 = vadd.xlane.f32.xlu0 %v2191
        %v2222 = vpop.xlane.xlu0 %2221
        %2223 = vadd.xlane.f32.xlu0 %v2192
        %v2224 = vpop.xlane.xlu0 %2223
        %v2241 = vadd.s32 %v388, 4294967232
        %v2242 = vlaneseq
        %v2243 = vshrl.u32 %v2242, 7
        %v2244 = vsub.s32 %v2241, %v2243
        %v2245 = vrot.slane %v2194, %v2244
        %v2246 = vadd.s32 %v388, 4294967224
        %v2247 = vlaneseq
        %v2248 = vshrl.u32 %v2247, 7
        %v2249 = vsub.s32 %v2246, %v2248
        %v2250 = vrot.slane %v2196, %v2249
        %vm2251 = vcmask 654912
        %v2252 = vsel %vm2251, %v2250, %v2245
        %v2253 = vlaneseq
        %v2254 = vshrl.u32 %v2253, 7
        %v2255 = vsub.s32 %v2241, %v2254
        %v2256 = vrot.slane %v2198, %v2255
        %v2257 = vlaneseq
        %v2258 = vshrl.u32 %v2257, 7
        %v2259 = vsub.s32 %v2246, %v2258
        %v2260 = vrot.slane %v2200, %v2259
        %v2261 = vsel %vm2251, %v2260, %v2256
        %v2262 = vlaneseq
        %v2263 = vshrl.u32 %v2262, 7
        %v2264 = vsub.s32 %v2241, %v2263
        %v2265 = vrot.slane %v2202, %v2264
        %v2266 = vlaneseq
        %v2267 = vshrl.u32 %v2266, 7
        %v2268 = vsub.s32 %v2246, %v2267
        %v2269 = vrot.slane %v2204, %v2268
        %v2270 = vsel %vm2251, %v2269, %v2265
        %v2271 = vlaneseq
        %v2272 = vshrl.u32 %v2271, 7
        %v2273 = vsub.s32 %v2241, %v2272
        %v2274 = vrot.slane %v2206, %v2273
        %v2275 = vlaneseq
        %v2276 = vshrl.u32 %v2275, 7
        %v2277 = vsub.s32 %v2246, %v2276
        %v2278 = vrot.slane %v2208, %v2277
        %v2279 = vsel %vm2251, %v2278, %v2274
        %v2280 = vlaneseq
        %v2281 = vshrl.u32 %v2280, 7
        %v2282 = vsub.s32 %v2241, %v2281
        %v2283 = vrot.slane %v2210, %v2282
        %v2284 = vlaneseq
        %v2285 = vshrl.u32 %v2284, 7
        %v2286 = vsub.s32 %v2246, %v2285
        %v2287 = vrot.slane %v2212, %v2286
        %v2288 = vsel %vm2251, %v2287, %v2283
        %v2289 = vlaneseq
        %v2290 = vshrl.u32 %v2289, 7
        %v2291 = vsub.s32 %v2241, %v2290
        %v2292 = vrot.slane %v2214, %v2291
        %v2293 = vlaneseq
        %v2294 = vshrl.u32 %v2293, 7
        %v2295 = vsub.s32 %v2246, %v2294
        %v2296 = vrot.slane %v2216, %v2295
        %v2297 = vsel %vm2251, %v2296, %v2292
        %v2298 = vlaneseq
        %v2299 = vshrl.u32 %v2298, 7
        %v2300 = vsub.s32 %v2241, %v2299
        %v2301 = vrot.slane %v2218, %v2300
        %v2302 = vlaneseq
        %v2303 = vshrl.u32 %v2302, 7
        %v2304 = vsub.s32 %v2246, %v2303
        %v2305 = vrot.slane %v2220, %v2304
        %v2306 = vsel %vm2251, %v2305, %v2301
        %v2307 = vlaneseq
        %v2308 = vshrl.u32 %v2307, 7
        %v2309 = vsub.s32 %v2241, %v2308
        %v2310 = vrot.slane %v2222, %v2309
        %v2311 = vlaneseq
        %v2312 = vshrl.u32 %v2311, 7
        %v2313 = vsub.s32 %v2246, %v2312
        %v2314 = vrot.slane %v2224, %v2313
        %v2315 = vsel %vm2251, %v2314, %v2310
        %v2316 = vsel %vm605, %v2261, %v2252
        %v2317 = vsel %vm607, %v2270, %v2316
        %v2318 = vsel %vm609, %v2279, %v2317
        %v2319 = vsel %vm611, %v2288, %v2318
        %v2320 = vsel %vm613, %v2297, %v2319
        %v2321 = vsel %vm615, %v2306, %v2320
        %v2322 = vsel %vm617, %v2315, %v2321
        %vm2324 = vcmask 654848
        %2325 = vst.msk [vmem:[%s375] sm:$0xff] %vm2324, %v2322
        %v2326 = vld [vmem:[%s327] sm:$0xff]
        %v2327 = vlaneseq
        %v2328 = vshrl.u32 %v2327, 7
        %v2329 = vsub.s32 0, %v2328
        %v2330 = vrot.slane %v2326, %v2329
        %s2332 = sor.u32 256, 80
        %2333 = vbcast.lane.b32.xlu0 %v2330, %s2332
        %v2334 = vpop.permute.xlu0 %2333
        %s2336 = sor.u32 256, 88
        %2337 = vbcast.lane.b32.xlu0 %v2330, %s2336
        %v2338 = vpop.permute.xlu0 %2337
        %v2339 = vlaneseq
        %v2340 = vshrl.u32 %v2339, 7
        %v2341 = vsub.s32 1, %v2340
        %v2342 = vrot.slane %v2326, %v2341
        %s2344 = sor.u32 256, 80
        %2345 = vbcast.lane.b32.xlu0 %v2342, %s2344
        %v2346 = vpop.permute.xlu0 %2345
        %s2348 = sor.u32 256, 88
        %2349 = vbcast.lane.b32.xlu0 %v2342, %s2348
        %v2350 = vpop.permute.xlu0 %2349
        %v2351 = vlaneseq
        %v2352 = vshrl.u32 %v2351, 7
        %v2353 = vsub.s32 2, %v2352
        %v2354 = vrot.slane %v2326, %v2353
        %s2356 = sor.u32 256, 80
        %2357 = vbcast.lane.b32.xlu0 %v2354, %s2356
        %v2358 = vpop.permute.xlu0 %2357
        %s2360 = sor.u32 256, 88
        %2361 = vbcast.lane.b32.xlu0 %v2354, %s2360
        %v2362 = vpop.permute.xlu0 %2361
        %v2363 = vlaneseq
        %v2364 = vshrl.u32 %v2363, 7
        %v2365 = vsub.s32 3, %v2364
        %v2366 = vrot.slane %v2326, %v2365
        %s2368 = sor.u32 256, 80
        %2369 = vbcast.lane.b32.xlu0 %v2366, %s2368
        %v2370 = vpop.permute.xlu0 %2369
        %s2372 = sor.u32 256, 88
        %2373 = vbcast.lane.b32.xlu0 %v2366, %s2372
        %v2374 = vpop.permute.xlu0 %2373
        %v2375 = vlaneseq
        %v2376 = vshrl.u32 %v2375, 7
        %v2377 = vsub.s32 4, %v2376
        %v2378 = vrot.slane %v2326, %v2377
        %s2380 = sor.u32 256, 80
        %2381 = vbcast.lane.b32.xlu0 %v2378, %s2380
        %v2382 = vpop.permute.xlu0 %2381
        %s2384 = sor.u32 256, 88
        %2385 = vbcast.lane.b32.xlu0 %v2378, %s2384
        %v2386 = vpop.permute.xlu0 %2385
        %v2387 = vlaneseq
        %v2388 = vshrl.u32 %v2387, 7
        %v2389 = vsub.s32 5, %v2388
        %v2390 = vrot.slane %v2326, %v2389
        %s2392 = sor.u32 256, 80
        %2393 = vbcast.lane.b32.xlu0 %v2390, %s2392
        %v2394 = vpop.permute.xlu0 %2393
        %s2396 = sor.u32 256, 88
        %2397 = vbcast.lane.b32.xlu0 %v2390, %s2396
        %v2398 = vpop.permute.xlu0 %2397
        %v2399 = vlaneseq
        %v2400 = vshrl.u32 %v2399, 7
        %v2401 = vsub.s32 6, %v2400
        %v2402 = vrot.slane %v2326, %v2401
        %s2404 = sor.u32 256, 80
        %2405 = vbcast.lane.b32.xlu0 %v2402, %s2404
        %v2406 = vpop.permute.xlu0 %2405
        %s2408 = sor.u32 256, 88
        %2409 = vbcast.lane.b32.xlu0 %v2402, %s2408
        %v2410 = vpop.permute.xlu0 %2409
        %v2411 = vlaneseq
        %v2412 = vshrl.u32 %v2411, 7
        %v2413 = vsub.s32 7, %v2412
        %v2414 = vrot.slane %v2326, %v2413
        %s2416 = sor.u32 256, 80
        %2417 = vbcast.lane.b32.xlu0 %v2414, %s2416
        %v2418 = vpop.permute.xlu0 %2417
        %s2420 = sor.u32 256, 88
        %2421 = vbcast.lane.b32.xlu0 %v2414, %s2420
        %v2422 = vpop.permute.xlu0 %2421
        %vm2423 = vcmp.eq.s32.totalorder %v2334, %v388
        %vm2424 = vcmp.eq.s32.totalorder %v2338, %v388
        %vm2425 = vcmp.eq.s32.totalorder %v2346, %v388
        %vm2426 = vcmp.eq.s32.totalorder %v2350, %v388
        %vm2427 = vcmp.eq.s32.totalorder %v2358, %v388
        %vm2428 = vcmp.eq.s32.totalorder %v2362, %v388
        %vm2429 = vcmp.eq.s32.totalorder %v2370, %v388
        %vm2430 = vcmp.eq.s32.totalorder %v2374, %v388
        %vm2431 = vcmp.eq.s32.totalorder %v2382, %v388
        %vm2432 = vcmp.eq.s32.totalorder %v2386, %v388
        %vm2433 = vcmp.eq.s32.totalorder %v2394, %v388
        %vm2434 = vcmp.eq.s32.totalorder %v2398, %v388
        %vm2435 = vcmp.eq.s32.totalorder %v2406, %v388
        %vm2436 = vcmp.eq.s32.totalorder %v2410, %v388
        %vm2437 = vcmp.eq.s32.totalorder %v2418, %v388
        %vm2438 = vcmp.eq.s32.totalorder %v2422, %v388
        %v2439 = vsel %vm2423, %v1093, 0.0
        %v2440 = vsel %vm2424, %v1093, 0.0
        %v2441 = vsel %vm2425, %v1097, 0.0
        %v2442 = vsel %vm2426, %v1097, 0.0
        %v2443 = vsel %vm2427, %v1101, 0.0
        %v2444 = vsel %vm2428, %v1101, 0.0
        %v2445 = vsel %vm2429, %v1105, 0.0
        %v2446 = vsel %vm2430, %v1105, 0.0
        %v2447 = vsel %vm2431, %v1109, 0.0
        %v2448 = vsel %vm2432, %v1109, 0.0
        %v2449 = vsel %vm2433, %v1113, 0.0
        %v2450 = vsel %vm2434, %v1113, 0.0
        %v2451 = vsel %vm2435, %v1117, 0.0
        %v2452 = vsel %vm2436, %v1117, 0.0
        %v2453 = vsel %vm2437, %v1121, 0.0
        %v2454 = vsel %vm2438, %v1121, 0.0
        %2455 = vadd.xlane.f32.xlu0 %v2439
        %v2456 = vpop.xlane.xlu0 %2455
        %2457 = vadd.xlane.f32.xlu0 %v2440
        %v2458 = vpop.xlane.xlu0 %2457
        %2459 = vadd.xlane.f32.xlu0 %v2441
        %v2460 = vpop.xlane.xlu0 %2459
        %2461 = vadd.xlane.f32.xlu0 %v2442
        %v2462 = vpop.xlane.xlu0 %2461
        %2463 = vadd.xlane.f32.xlu0 %v2443
        %v2464 = vpop.xlane.xlu0 %2463
        %2465 = vadd.xlane.f32.xlu0 %v2444
        %v2466 = vpop.xlane.xlu0 %2465
        %2467 = vadd.xlane.f32.xlu0 %v2445
        %v2468 = vpop.xlane.xlu0 %2467
        %2469 = vadd.xlane.f32.xlu0 %v2446
        %v2470 = vpop.xlane.xlu0 %2469
        %2471 = vadd.xlane.f32.xlu0 %v2447
        %v2472 = vpop.xlane.xlu0 %2471
        %2473 = vadd.xlane.f32.xlu0 %v2448
        %v2474 = vpop.xlane.xlu0 %2473
        %2475 = vadd.xlane.f32.xlu0 %v2449
        %v2476 = vpop.xlane.xlu0 %2475
        %2477 = vadd.xlane.f32.xlu0 %v2450
        %v2478 = vpop.xlane.xlu0 %2477
        %2479 = vadd.xlane.f32.xlu0 %v2451
        %v2480 = vpop.xlane.xlu0 %2479
        %2481 = vadd.xlane.f32.xlu0 %v2452
        %v2482 = vpop.xlane.xlu0 %2481
        %2483 = vadd.xlane.f32.xlu0 %v2453
        %v2484 = vpop.xlane.xlu0 %2483
        %2485 = vadd.xlane.f32.xlu0 %v2454
        %v2486 = vpop.xlane.xlu0 %2485
        %v2503 = vadd.s32 %v388, 4294967216
        %v2504 = vlaneseq
        %v2505 = vshrl.u32 %v2504, 7
        %v2506 = vsub.s32 %v2503, %v2505
        %v2507 = vrot.slane %v2456, %v2506
        %v2508 = vadd.s32 %v388, 4294967208
        %v2509 = vlaneseq
        %v2510 = vshrl.u32 %v2509, 7
        %v2511 = vsub.s32 %v2508, %v2510
        %v2512 = vrot.slane %v2458, %v2511
        %vm2513 = vcmask 786112
        %v2514 = vsel %vm2513, %v2512, %v2507
        %v2515 = vlaneseq
        %v2516 = vshrl.u32 %v2515, 7
        %v2517 = vsub.s32 %v2503, %v2516
        %v2518 = vrot.slane %v2460, %v2517
        %v2519 = vlaneseq
        %v2520 = vshrl.u32 %v2519, 7
        %v2521 = vsub.s32 %v2508, %v2520
        %v2522 = vrot.slane %v2462, %v2521
        %v2523 = vsel %vm2513, %v2522, %v2518
        %v2524 = vlaneseq
        %v2525 = vshrl.u32 %v2524, 7
        %v2526 = vsub.s32 %v2503, %v2525
        %v2527 = vrot.slane %v2464, %v2526
        %v2528 = vlaneseq
        %v2529 = vshrl.u32 %v2528, 7
        %v2530 = vsub.s32 %v2508, %v2529
        %v2531 = vrot.slane %v2466, %v2530
        %v2532 = vsel %vm2513, %v2531, %v2527
        %v2533 = vlaneseq
        %v2534 = vshrl.u32 %v2533, 7
        %v2535 = vsub.s32 %v2503, %v2534
        %v2536 = vrot.slane %v2468, %v2535
        %v2537 = vlaneseq
        %v2538 = vshrl.u32 %v2537, 7
        %v2539 = vsub.s32 %v2508, %v2538
        %v2540 = vrot.slane %v2470, %v2539
        %v2541 = vsel %vm2513, %v2540, %v2536
        %v2542 = vlaneseq
        %v2543 = vshrl.u32 %v2542, 7
        %v2544 = vsub.s32 %v2503, %v2543
        %v2545 = vrot.slane %v2472, %v2544
        %v2546 = vlaneseq
        %v2547 = vshrl.u32 %v2546, 7
        %v2548 = vsub.s32 %v2508, %v2547
        %v2549 = vrot.slane %v2474, %v2548
        %v2550 = vsel %vm2513, %v2549, %v2545
        %v2551 = vlaneseq
        %v2552 = vshrl.u32 %v2551, 7
        %v2553 = vsub.s32 %v2503, %v2552
        %v2554 = vrot.slane %v2476, %v2553
        %v2555 = vlaneseq
        %v2556 = vshrl.u32 %v2555, 7
        %v2557 = vsub.s32 %v2508, %v2556
        %v2558 = vrot.slane %v2478, %v2557
        %v2559 = vsel %vm2513, %v2558, %v2554
        %v2560 = vlaneseq
        %v2561 = vshrl.u32 %v2560, 7
        %v2562 = vsub.s32 %v2503, %v2561
        %v2563 = vrot.slane %v2480, %v2562
        %v2564 = vlaneseq
        %v2565 = vshrl.u32 %v2564, 7
        %v2566 = vsub.s32 %v2508, %v2565
        %v2567 = vrot.slane %v2482, %v2566
        %v2568 = vsel %vm2513, %v2567, %v2563
        %v2569 = vlaneseq
        %v2570 = vshrl.u32 %v2569, 7
        %v2571 = vsub.s32 %v2503, %v2570
        %v2572 = vrot.slane %v2484, %v2571
        %v2573 = vlaneseq
        %v2574 = vshrl.u32 %v2573, 7
        %v2575 = vsub.s32 %v2508, %v2574
        %v2576 = vrot.slane %v2486, %v2575
        %v2577 = vsel %vm2513, %v2576, %v2572
        %v2578 = vsel %vm605, %v2523, %v2514
        %v2579 = vsel %vm607, %v2532, %v2578
        %v2580 = vsel %vm609, %v2541, %v2579
        %v2581 = vsel %vm611, %v2550, %v2580
        %v2582 = vsel %vm613, %v2559, %v2581
        %v2583 = vsel %vm615, %v2568, %v2582
        %v2584 = vsel %vm617, %v2577, %v2583
        %vm2586 = vcmask 786048
        %2587 = vst.msk [vmem:[%s375] sm:$0xff] %vm2586, %v2584
        %v2588 = vld [vmem:[%s327] sm:$0xff]
        %v2589 = vlaneseq
        %v2590 = vshrl.u32 %v2589, 7
        %v2591 = vsub.s32 0, %v2590
        %v2592 = vrot.slane %v2588, %v2591
        %s2594 = sor.u32 256, 96
        %2595 = vbcast.lane.b32.xlu0 %v2592, %s2594
        %v2596 = vpop.permute.xlu0 %2595
        %s2598 = sor.u32 256, 104
        %2599 = vbcast.lane.b32.xlu0 %v2592, %s2598
        %v2600 = vpop.permute.xlu0 %2599
        %v2601 = vlaneseq
        %v2602 = vshrl.u32 %v2601, 7
        %v2603 = vsub.s32 1, %v2602
        %v2604 = vrot.slane %v2588, %v2603
        %s2606 = sor.u32 256, 96
        %2607 = vbcast.lane.b32.xlu0 %v2604, %s2606
        %v2608 = vpop.permute.xlu0 %2607
        %s2610 = sor.u32 256, 104
        %2611 = vbcast.lane.b32.xlu0 %v2604, %s2610
        %v2612 = vpop.permute.xlu0 %2611
        %v2613 = vlaneseq
        %v2614 = vshrl.u32 %v2613, 7
        %v2615 = vsub.s32 2, %v2614
        %v2616 = vrot.slane %v2588, %v2615
        %s2618 = sor.u32 256, 96
        %2619 = vbcast.lane.b32.xlu0 %v2616, %s2618
        %v2620 = vpop.permute.xlu0 %2619
        %s2622 = sor.u32 256, 104
        %2623 = vbcast.lane.b32.xlu0 %v2616, %s2622
        %v2624 = vpop.permute.xlu0 %2623
        %v2625 = vlaneseq
        %v2626 = vshrl.u32 %v2625, 7
        %v2627 = vsub.s32 3, %v2626
        %v2628 = vrot.slane %v2588, %v2627
        %s2630 = sor.u32 256, 96
        %2631 = vbcast.lane.b32.xlu0 %v2628, %s2630
        %v2632 = vpop.permute.xlu0 %2631
        %s2634 = sor.u32 256, 104
        %2635 = vbcast.lane.b32.xlu0 %v2628, %s2634
        %v2636 = vpop.permute.xlu0 %2635
        %v2637 = vlaneseq
        %v2638 = vshrl.u32 %v2637, 7
        %v2639 = vsub.s32 4, %v2638
        %v2640 = vrot.slane %v2588, %v2639
        %s2642 = sor.u32 256, 96
        %2643 = vbcast.lane.b32.xlu0 %v2640, %s2642
        %v2644 = vpop.permute.xlu0 %2643
        %s2646 = sor.u32 256, 104
        %2647 = vbcast.lane.b32.xlu0 %v2640, %s2646
        %v2648 = vpop.permute.xlu0 %2647
        %v2649 = vlaneseq
        %v2650 = vshrl.u32 %v2649, 7
        %v2651 = vsub.s32 5, %v2650
        %v2652 = vrot.slane %v2588, %v2651
        %s2654 = sor.u32 256, 96
        %2655 = vbcast.lane.b32.xlu0 %v2652, %s2654
        %v2656 = vpop.permute.xlu0 %2655
        %s2658 = sor.u32 256, 104
        %2659 = vbcast.lane.b32.xlu0 %v2652, %s2658
        %v2660 = vpop.permute.xlu0 %2659
        %v2661 = vlaneseq
        %v2662 = vshrl.u32 %v2661, 7
        %v2663 = vsub.s32 6, %v2662
        %v2664 = vrot.slane %v2588, %v2663
        %s2666 = sor.u32 256, 96
        %2667 = vbcast.lane.b32.xlu0 %v2664, %s2666
        %v2668 = vpop.permute.xlu0 %2667
        %s2670 = sor.u32 256, 104
        %2671 = vbcast.lane.b32.xlu0 %v2664, %s2670
        %v2672 = vpop.permute.xlu0 %2671
        %v2673 = vlaneseq
        %v2674 = vshrl.u32 %v2673, 7
        %v2675 = vsub.s32 7, %v2674
        %v2676 = vrot.slane %v2588, %v2675
        %s2678 = sor.u32 256, 96
        %2679 = vbcast.lane.b32.xlu0 %v2676, %s2678
        %v2680 = vpop.permute.xlu0 %2679
        %s2682 = sor.u32 256, 104
        %2683 = vbcast.lane.b32.xlu0 %v2676, %s2682
        %v2684 = vpop.permute.xlu0 %2683
        %vm2685 = vcmp.eq.s32.totalorder %v2596, %v388
        %vm2686 = vcmp.eq.s32.totalorder %v2600, %v388
        %vm2687 = vcmp.eq.s32.totalorder %v2608, %v388
        %vm2688 = vcmp.eq.s32.totalorder %v2612, %v388
        %vm2689 = vcmp.eq.s32.totalorder %v2620, %v388
        %vm2690 = vcmp.eq.s32.totalorder %v2624, %v388
        %vm2691 = vcmp.eq.s32.totalorder %v2632, %v388
        %vm2692 = vcmp.eq.s32.totalorder %v2636, %v388
        %vm2693 = vcmp.eq.s32.totalorder %v2644, %v388
        %vm2694 = vcmp.eq.s32.totalorder %v2648, %v388
        %vm2695 = vcmp.eq.s32.totalorder %v2656, %v388
        %vm2696 = vcmp.eq.s32.totalorder %v2660, %v388
        %vm2697 = vcmp.eq.s32.totalorder %v2668, %v388
        %vm2698 = vcmp.eq.s32.totalorder %v2672, %v388
        %vm2699 = vcmp.eq.s32.totalorder %v2680, %v388
        %vm2700 = vcmp.eq.s32.totalorder %v2684, %v388
        %v2701 = vsel %vm2685, %v1093, 0.0
        %v2702 = vsel %vm2686, %v1093, 0.0
        %v2703 = vsel %vm2687, %v1097, 0.0
        %v2704 = vsel %vm2688, %v1097, 0.0
        %v2705 = vsel %vm2689, %v1101, 0.0
        %v2706 = vsel %vm2690, %v1101, 0.0
        %v2707 = vsel %vm2691, %v1105, 0.0
        %v2708 = vsel %vm2692, %v1105, 0.0
        %v2709 = vsel %vm2693, %v1109, 0.0
        %v2710 = vsel %vm2694, %v1109, 0.0
        %v2711 = vsel %vm2695, %v1113, 0.0
        %v2712 = vsel %vm2696, %v1113, 0.0
        %v2713 = vsel %vm2697, %v1117, 0.0
        %v2714 = vsel %vm2698, %v1117, 0.0
        %v2715 = vsel %vm2699, %v1121, 0.0
        %v2716 = vsel %vm2700, %v1121, 0.0
        %2717 = vadd.xlane.f32.xlu0 %v2701
        %v2718 = vpop.xlane.xlu0 %2717
        %2719 = vadd.xlane.f32.xlu0 %v2702
        %v2720 = vpop.xlane.xlu0 %2719
        %2721 = vadd.xlane.f32.xlu0 %v2703
        %v2722 = vpop.xlane.xlu0 %2721
        %2723 = vadd.xlane.f32.xlu0 %v2704
        %v2724 = vpop.xlane.xlu0 %2723
        %2725 = vadd.xlane.f32.xlu0 %v2705
        %v2726 = vpop.xlane.xlu0 %2725
        %2727 = vadd.xlane.f32.xlu0 %v2706
        %v2728 = vpop.xlane.xlu0 %2727
        %2729 = vadd.xlane.f32.xlu0 %v2707
        %v2730 = vpop.xlane.xlu0 %2729
        %2731 = vadd.xlane.f32.xlu0 %v2708
        %v2732 = vpop.xlane.xlu0 %2731
        %2733 = vadd.xlane.f32.xlu0 %v2709
        %v2734 = vpop.xlane.xlu0 %2733
        %2735 = vadd.xlane.f32.xlu0 %v2710
        %v2736 = vpop.xlane.xlu0 %2735
        %2737 = vadd.xlane.f32.xlu0 %v2711
        %v2738 = vpop.xlane.xlu0 %2737
        %2739 = vadd.xlane.f32.xlu0 %v2712
        %v2740 = vpop.xlane.xlu0 %2739
        %2741 = vadd.xlane.f32.xlu0 %v2713
        %v2742 = vpop.xlane.xlu0 %2741
        %2743 = vadd.xlane.f32.xlu0 %v2714
        %v2744 = vpop.xlane.xlu0 %2743
        %2745 = vadd.xlane.f32.xlu0 %v2715
        %v2746 = vpop.xlane.xlu0 %2745
        %2747 = vadd.xlane.f32.xlu0 %v2716
        %v2748 = vpop.xlane.xlu0 %2747
        %v2765 = vadd.s32 %v388, 4294967200
        %v2766 = vlaneseq
        %v2767 = vshrl.u32 %v2766, 7
        %v2768 = vsub.s32 %v2765, %v2767
        %v2769 = vrot.slane %v2718, %v2768
        %v2770 = vadd.s32 %v388, 4294967192
        %v2771 = vlaneseq
        %v2772 = vshrl.u32 %v2771, 7
        %v2773 = vsub.s32 %v2770, %v2772
        %v2774 = vrot.slane %v2720, %v2773
        %vm2775 = vcmask 917312
        %v2776 = vsel %vm2775, %v2774, %v2769
        %v2777 = vlaneseq
        %v2778 = vshrl.u32 %v2777, 7
        %v2779 = vsub.s32 %v2765, %v2778
        %v2780 = vrot.slane %v2722, %v2779
        %v2781 = vlaneseq
        %v2782 = vshrl.u32 %v2781, 7
        %v2783 = vsub.s32 %v2770, %v2782
        %v2784 = vrot.slane %v2724, %v2783
        %v2785 = vsel %vm2775, %v2784, %v2780
        %v2786 = vlaneseq
        %v2787 = vshrl.u32 %v2786, 7
        %v2788 = vsub.s32 %v2765, %v2787
        %v2789 = vrot.slane %v2726, %v2788
        %v2790 = vlaneseq
        %v2791 = vshrl.u32 %v2790, 7
        %v2792 = vsub.s32 %v2770, %v2791
        %v2793 = vrot.slane %v2728, %v2792
        %v2794 = vsel %vm2775, %v2793, %v2789
        %v2795 = vlaneseq
        %v2796 = vshrl.u32 %v2795, 7
        %v2797 = vsub.s32 %v2765, %v2796
        %v2798 = vrot.slane %v2730, %v2797
        %v2799 = vlaneseq
        %v2800 = vshrl.u32 %v2799, 7
        %v2801 = vsub.s32 %v2770, %v2800
        %v2802 = vrot.slane %v2732, %v2801
        %v2803 = vsel %vm2775, %v2802, %v2798
        %v2804 = vlaneseq
        %v2805 = vshrl.u32 %v2804, 7
        %v2806 = vsub.s32 %v2765, %v2805
        %v2807 = vrot.slane %v2734, %v2806
        %v2808 = vlaneseq
        %v2809 = vshrl.u32 %v2808, 7
        %v2810 = vsub.s32 %v2770, %v2809
        %v2811 = vrot.slane %v2736, %v2810
        %v2812 = vsel %vm2775, %v2811, %v2807
        %v2813 = vlaneseq
        %v2814 = vshrl.u32 %v2813, 7
        %v2815 = vsub.s32 %v2765, %v2814
        %v2816 = vrot.slane %v2738, %v2815
        %v2817 = vlaneseq
        %v2818 = vshrl.u32 %v2817, 7
        %v2819 = vsub.s32 %v2770, %v2818
        %v2820 = vrot.slane %v2740, %v2819
        %v2821 = vsel %vm2775, %v2820, %v2816
        %v2822 = vlaneseq
        %v2823 = vshrl.u32 %v2822, 7
        %v2824 = vsub.s32 %v2765, %v2823
        %v2825 = vrot.slane %v2742, %v2824
        %v2826 = vlaneseq
        %v2827 = vshrl.u32 %v2826, 7
        %v2828 = vsub.s32 %v2770, %v2827
        %v2829 = vrot.slane %v2744, %v2828
        %v2830 = vsel %vm2775, %v2829, %v2825
        %v2831 = vlaneseq
        %v2832 = vshrl.u32 %v2831, 7
        %v2833 = vsub.s32 %v2765, %v2832
        %v2834 = vrot.slane %v2746, %v2833
        %v2835 = vlaneseq
        %v2836 = vshrl.u32 %v2835, 7
        %v2837 = vsub.s32 %v2770, %v2836
        %v2838 = vrot.slane %v2748, %v2837
        %v2839 = vsel %vm2775, %v2838, %v2834
        %v2840 = vsel %vm605, %v2785, %v2776
        %v2841 = vsel %vm607, %v2794, %v2840
        %v2842 = vsel %vm609, %v2803, %v2841
        %v2843 = vsel %vm611, %v2812, %v2842
        %v2844 = vsel %vm613, %v2821, %v2843
        %v2845 = vsel %vm615, %v2830, %v2844
        %v2846 = vsel %vm617, %v2839, %v2845
        %vm2848 = vcmask 917248
        %2849 = vst.msk [vmem:[%s375] sm:$0xff] %vm2848, %v2846
        %v2850 = vld [vmem:[%s327] sm:$0xff]
        %v2851 = vlaneseq
        %v2852 = vshrl.u32 %v2851, 7
        %v2853 = vsub.s32 0, %v2852
        %v2854 = vrot.slane %v2850, %v2853
        %s2856 = sor.u32 256, 112
        %2857 = vbcast.lane.b32.xlu0 %v2854, %s2856
        %v2858 = vpop.permute.xlu0 %2857
        %s2860 = sor.u32 256, 120
        %2861 = vbcast.lane.b32.xlu0 %v2854, %s2860
        %v2862 = vpop.permute.xlu0 %2861
        %v2863 = vlaneseq
        %v2864 = vshrl.u32 %v2863, 7
        %v2865 = vsub.s32 1, %v2864
        %v2866 = vrot.slane %v2850, %v2865
        %s2868 = sor.u32 256, 112
        %2869 = vbcast.lane.b32.xlu0 %v2866, %s2868
        %v2870 = vpop.permute.xlu0 %2869
        %s2872 = sor.u32 256, 120
        %2873 = vbcast.lane.b32.xlu0 %v2866, %s2872
        %v2874 = vpop.permute.xlu0 %2873
        %v2875 = vlaneseq
        %v2876 = vshrl.u32 %v2875, 7
        %v2877 = vsub.s32 2, %v2876
        %v2878 = vrot.slane %v2850, %v2877
        %s2880 = sor.u32 256, 112
        %2881 = vbcast.lane.b32.xlu0 %v2878, %s2880
        %v2882 = vpop.permute.xlu0 %2881
        %s2884 = sor.u32 256, 120
        %2885 = vbcast.lane.b32.xlu0 %v2878, %s2884
        %v2886 = vpop.permute.xlu0 %2885
        %v2887 = vlaneseq
        %v2888 = vshrl.u32 %v2887, 7
        %v2889 = vsub.s32 3, %v2888
        %v2890 = vrot.slane %v2850, %v2889
        %s2892 = sor.u32 256, 112
        %2893 = vbcast.lane.b32.xlu0 %v2890, %s2892
        %v2894 = vpop.permute.xlu0 %2893
        %s2896 = sor.u32 256, 120
        %2897 = vbcast.lane.b32.xlu0 %v2890, %s2896
        %v2898 = vpop.permute.xlu0 %2897
        %v2899 = vlaneseq
        %v2900 = vshrl.u32 %v2899, 7
        %v2901 = vsub.s32 4, %v2900
        %v2902 = vrot.slane %v2850, %v2901
        %s2904 = sor.u32 256, 112
        %2905 = vbcast.lane.b32.xlu0 %v2902, %s2904
        %v2906 = vpop.permute.xlu0 %2905
        %s2908 = sor.u32 256, 120
        %2909 = vbcast.lane.b32.xlu0 %v2902, %s2908
        %v2910 = vpop.permute.xlu0 %2909
        %v2911 = vlaneseq
        %v2912 = vshrl.u32 %v2911, 7
        %v2913 = vsub.s32 5, %v2912
        %v2914 = vrot.slane %v2850, %v2913
        %s2916 = sor.u32 256, 112
        %2917 = vbcast.lane.b32.xlu0 %v2914, %s2916
        %v2918 = vpop.permute.xlu0 %2917
        %s2920 = sor.u32 256, 120
        %2921 = vbcast.lane.b32.xlu0 %v2914, %s2920
        %v2922 = vpop.permute.xlu0 %2921
        %v2923 = vlaneseq
        %v2924 = vshrl.u32 %v2923, 7
        %v2925 = vsub.s32 6, %v2924
        %v2926 = vrot.slane %v2850, %v2925
        %s2928 = sor.u32 256, 112
        %2929 = vbcast.lane.b32.xlu0 %v2926, %s2928
        %v2930 = vpop.permute.xlu0 %2929
        %s2932 = sor.u32 256, 120
        %2933 = vbcast.lane.b32.xlu0 %v2926, %s2932
        %v2934 = vpop.permute.xlu0 %2933
        %v2935 = vlaneseq
        %v2936 = vshrl.u32 %v2935, 7
        %v2937 = vsub.s32 7, %v2936
        %v2938 = vrot.slane %v2850, %v2937
        %s2940 = sor.u32 256, 112
        %2941 = vbcast.lane.b32.xlu0 %v2938, %s2940
        %v2942 = vpop.permute.xlu0 %2941
        %s2944 = sor.u32 256, 120
        %2945 = vbcast.lane.b32.xlu0 %v2938, %s2944
        %v2946 = vpop.permute.xlu0 %2945
        %vm2947 = vcmp.eq.s32.totalorder %v2858, %v388
        %vm2948 = vcmp.eq.s32.totalorder %v2862, %v388
        %vm2949 = vcmp.eq.s32.totalorder %v2870, %v388
        %vm2950 = vcmp.eq.s32.totalorder %v2874, %v388
        %vm2951 = vcmp.eq.s32.totalorder %v2882, %v388
        %vm2952 = vcmp.eq.s32.totalorder %v2886, %v388
        %vm2953 = vcmp.eq.s32.totalorder %v2894, %v388
        %vm2954 = vcmp.eq.s32.totalorder %v2898, %v388
        %vm2955 = vcmp.eq.s32.totalorder %v2906, %v388
        %vm2956 = vcmp.eq.s32.totalorder %v2910, %v388
        %vm2957 = vcmp.eq.s32.totalorder %v2918, %v388
        %vm2958 = vcmp.eq.s32.totalorder %v2922, %v388
        %vm2959 = vcmp.eq.s32.totalorder %v2930, %v388
        %vm2960 = vcmp.eq.s32.totalorder %v2934, %v388
        %vm2961 = vcmp.eq.s32.totalorder %v2942, %v388
        %vm2962 = vcmp.eq.s32.totalorder %v2946, %v388
        %v2963 = vsel %vm2947, %v1093, 0.0
        %v2964 = vsel %vm2948, %v1093, 0.0
        %v2965 = vsel %vm2949, %v1097, 0.0
        %v2966 = vsel %vm2950, %v1097, 0.0
        %v2967 = vsel %vm2951, %v1101, 0.0
        %v2968 = vsel %vm2952, %v1101, 0.0
        %v2969 = vsel %vm2953, %v1105, 0.0
        %v2970 = vsel %vm2954, %v1105, 0.0
        %v2971 = vsel %vm2955, %v1109, 0.0
        %v2972 = vsel %vm2956, %v1109, 0.0
        %v2973 = vsel %vm2957, %v1113, 0.0
        %v2974 = vsel %vm2958, %v1113, 0.0
        %v2975 = vsel %vm2959, %v1117, 0.0
        %v2976 = vsel %vm2960, %v1117, 0.0
        %v2977 = vsel %vm2961, %v1121, 0.0
        %v2978 = vsel %vm2962, %v1121, 0.0
        %2979 = vadd.xlane.f32.xlu0 %v2963
        %v2980 = vpop.xlane.xlu0 %2979
        %2981 = vadd.xlane.f32.xlu0 %v2964
        %v2982 = vpop.xlane.xlu0 %2981
        %2983 = vadd.xlane.f32.xlu0 %v2965
        %v2984 = vpop.xlane.xlu0 %2983
        %2985 = vadd.xlane.f32.xlu0 %v2966
        %v2986 = vpop.xlane.xlu0 %2985
        %2987 = vadd.xlane.f32.xlu0 %v2967
        %v2988 = vpop.xlane.xlu0 %2987
        %2989 = vadd.xlane.f32.xlu0 %v2968
        %v2990 = vpop.xlane.xlu0 %2989
        %2991 = vadd.xlane.f32.xlu0 %v2969
        %v2992 = vpop.xlane.xlu0 %2991
        %2993 = vadd.xlane.f32.xlu0 %v2970
        %v2994 = vpop.xlane.xlu0 %2993
        %2995 = vadd.xlane.f32.xlu0 %v2971
        %v2996 = vpop.xlane.xlu0 %2995
        %2997 = vadd.xlane.f32.xlu0 %v2972
        %v2998 = vpop.xlane.xlu0 %2997
        %2999 = vadd.xlane.f32.xlu0 %v2973
        %v3000 = vpop.xlane.xlu0 %2999
        %3001 = vadd.xlane.f32.xlu0 %v2974
        %v3002 = vpop.xlane.xlu0 %3001
        %3003 = vadd.xlane.f32.xlu0 %v2975
        %v3004 = vpop.xlane.xlu0 %3003
        %3005 = vadd.xlane.f32.xlu0 %v2976
        %v3006 = vpop.xlane.xlu0 %3005
        %3007 = vadd.xlane.f32.xlu0 %v2977
        %v3008 = vpop.xlane.xlu0 %3007
        %3009 = vadd.xlane.f32.xlu0 %v2978
        %v3010 = vpop.xlane.xlu0 %3009
        %v3027 = vadd.s32 %v388, 4294967184
        %v3028 = vlaneseq
        %v3029 = vshrl.u32 %v3028, 7
        %v3030 = vsub.s32 %v3027, %v3029
        %v3031 = vrot.slane %v2980, %v3030
        %v3032 = vadd.s32 %v388, 4294967176
        %v3033 = vlaneseq
        %v3034 = vshrl.u32 %v3033, 7
        %v3035 = vsub.s32 %v3032, %v3034
        %v3036 = vrot.slane %v2982, %v3035
        %vm3037 = vcmask 1048512
        %v3038 = vsel %vm3037, %v3036, %v3031
        %v3039 = vlaneseq
        %v3040 = vshrl.u32 %v3039, 7
        %v3041 = vsub.s32 %v3027, %v3040
        %v3042 = vrot.slane %v2984, %v3041
        %v3043 = vlaneseq
        %v3044 = vshrl.u32 %v3043, 7
        %v3045 = vsub.s32 %v3032, %v3044
        %v3046 = vrot.slane %v2986, %v3045
        %v3047 = vsel %vm3037, %v3046, %v3042
        %v3048 = vlaneseq
        %v3049 = vshrl.u32 %v3048, 7
        %v3050 = vsub.s32 %v3027, %v3049
        %v3051 = vrot.slane %v2988, %v3050
        %v3052 = vlaneseq
        %v3053 = vshrl.u32 %v3052, 7
        %v3054 = vsub.s32 %v3032, %v3053
        %v3055 = vrot.slane %v2990, %v3054
        %v3056 = vsel %vm3037, %v3055, %v3051
        %v3057 = vlaneseq
        %v3058 = vshrl.u32 %v3057, 7
        %v3059 = vsub.s32 %v3027, %v3058
        %v3060 = vrot.slane %v2992, %v3059
        %v3061 = vlaneseq
        %v3062 = vshrl.u32 %v3061, 7
        %v3063 = vsub.s32 %v3032, %v3062
        %v3064 = vrot.slane %v2994, %v3063
        %v3065 = vsel %vm3037, %v3064, %v3060
        %v3066 = vlaneseq
        %v3067 = vshrl.u32 %v3066, 7
        %v3068 = vsub.s32 %v3027, %v3067
        %v3069 = vrot.slane %v2996, %v3068
        %v3070 = vlaneseq
        %v3071 = vshrl.u32 %v3070, 7
        %v3072 = vsub.s32 %v3032, %v3071
        %v3073 = vrot.slane %v2998, %v3072
        %v3074 = vsel %vm3037, %v3073, %v3069
        %v3075 = vlaneseq
        %v3076 = vshrl.u32 %v3075, 7
        %v3077 = vsub.s32 %v3027, %v3076
        %v3078 = vrot.slane %v3000, %v3077
        %v3079 = vlaneseq
        %v3080 = vshrl.u32 %v3079, 7
        %v3081 = vsub.s32 %v3032, %v3080
        %v3082 = vrot.slane %v3002, %v3081
        %v3083 = vsel %vm3037, %v3082, %v3078
        %v3084 = vlaneseq
        %v3085 = vshrl.u32 %v3084, 7
        %v3086 = vsub.s32 %v3027, %v3085
        %v3087 = vrot.slane %v3004, %v3086
        %v3088 = vlaneseq
        %v3089 = vshrl.u32 %v3088, 7
        %v3090 = vsub.s32 %v3032, %v3089
        %v3091 = vrot.slane %v3006, %v3090
        %v3092 = vsel %vm3037, %v3091, %v3087
        %v3093 = vlaneseq
        %v3094 = vshrl.u32 %v3093, 7
        %v3095 = vsub.s32 %v3027, %v3094
        %v3096 = vrot.slane %v3008, %v3095
        %v3097 = vlaneseq
        %v3098 = vshrl.u32 %v3097, 7
        %v3099 = vsub.s32 %v3032, %v3098
        %v3100 = vrot.slane %v3010, %v3099
        %v3101 = vsel %vm3037, %v3100, %v3096
        %v3102 = vsel %vm605, %v3047, %v3038
        %v3103 = vsel %vm607, %v3056, %v3102
        %v3104 = vsel %vm609, %v3065, %v3103
        %v3105 = vsel %vm611, %v3074, %v3104
        %v3106 = vsel %vm613, %v3083, %v3105
        %v3107 = vsel %vm615, %v3092, %v3106
        %v3108 = vsel %vm617, %v3101, %v3107
        %vm3110 = vcmask 1048448
        %3111 = vst.msk [vmem:[%s375] sm:$0xff] %vm3110, %v3108
        %s3112 = sand.u32 %s217, 1
        %s3113 = scalar_lea.sflag [#allocation4], %s3112
        %s3114 = sand.u32 %s217, 1
        %s3115 = smul.addr %s3114, 8
        %s3116 = scalar_lea.vmem [#allocation8], %s3115
        // Predicated region
        $region65: #{tpu_custom_call.1} parent=51 // pred_check
          %p3117 = pneg %p227
        $region66: #{tpu_custom_call.1} parent=51 // pred_check_branch
          %3119 = sbr.rel (%p3117) target = $region68
        $region67: #{tpu_custom_call.1} parent=51 // pred_region
          %s3121 = ssub.s32 128, 128
          %3122 = vsyncadd %s3113, %s3121
          %s3123 = smul.addr %s26, 128
          %s3124 = scalar_lea.hbm %s8, %s3123
          %s3126 = sshll.u32 %s3116, 4
          %s3127 = int_to_ptr.vmem [resolvable:$true] %s3126
          %3129 = dma.vmem_to_hbm [thread:$0]  %s3127, 128, %s3124, %s3113
        $region68: #{tpu_custom_call.1} parent=51 // pred_fallthru
          _
      $region52: #{tpu_custom_call.1} parent=5 // pred_fallthru
        _
      %p3130 = scmp.le.s32.totalorder 2, %s21
      // Predicated region
      $region69: #{tpu_custom_call.1} parent=5 // pred_check
        %p3131 = pneg %p3130
      $region70: #{tpu_custom_call.1} parent=5 // pred_check_branch
        %3133 = sbr.rel (%p3131) target = $region72
      $region71: #{tpu_custom_call.1} parent=5 // pred_region
        %s3134 = ssub.s32 %s21, 2
        // Predicated region
        $region73: #{tpu_custom_call.1} parent=71 // pred_check
          %p3135 = pneg %p233
        $region74: #{tpu_custom_call.1} parent=71 // pred_check_branch
          %3137 = sbr.rel (%p3135) target = $region76
        $region75: #{tpu_custom_call.1} parent=71 // pred_region
          %s3138 = sand.u32 %s218, 1
          %s3139 = scalar_lea.sflag [#allocation4], %s3138
          %s3140 = sand.u32 %s218, 1
          %s3141 = smul.addr %s3140, 8
          %s3142 = scalar_lea.vmem [#allocation8], %s3141
          %3143 = dma.done %s3139, 128
        $region76: #{tpu_custom_call.1} parent=71 // pred_fallthru
          _
      $region72: #{tpu_custom_call.1} parent=5 // pred_fallthru
        _
    $region6: #{tpu_custom_call.1} parent=1 // loop_footer
      %s25 = sadd.s32 1, %s21
    $region7: #{tpu_custom_call.1} parent=1 // loop_footer_branch
      %20 = sbr.rel target = $region3
    $region8: #{tpu_custom_call.1} parent=1 // loop_exit
      _
    %3144 = vsyncpa [#allocation3], 1
    %s3145 = scalar_lea.sflag [#allocation3], 1
    %3146 = vsyncpa %s3145, 1
    %3147 = vsyncpa [#allocation6], 1
    %3148 = vsyncpa [#allocation4], 1
    %s3149 = scalar_lea.sflag [#allocation4], 1
    %3150 = vsyncpa %s3149, 1

// kernel: tpu_custom_call.1
$region0: #{tpu_custom_call.1}
  #allocation0 [shape = 'u32[]', space=smem, size = 0x4, offset = 0x4, fixed_abs, tag = 'smem constant byte address 0x4 - core index']
  #allocation1 [shape = 'u32[144,128]{1,0:T(1,128)}', space=vmem, size = 0x12000, scoped, tag = 'internal scratch']
  %s0 = inlined_call_operand.vmem [shape: f32[16,8], index: 0, kind: input, shape index: {}]
  %s1 = inlined_call_operand.vmem [shape: s32[16,8], index: 1, kind: input, shape index: {}]
  %s2 = inlined_call_operand.hbm [shape: s32[16,128], index: 2, kind: input, shape index: {}]
  %s3 = inlined_call_operand.hbm [shape: bf16[128,128], index: 3, kind: input, shape index: {}]
  %s4 = inlined_call_operand.hbm [shape: bf16[128,128], index: 4, kind: input, shape index: {}]
  %s5 = inlined_call_operand.vmem [shape: f32[1,128], index: 5, kind: input, shape index: {}]
  %s6 = inlined_call_operand.vmem [shape: bf16[128,128], index: 6, kind: input, shape index: {}]
  %s7 = inlined_call_operand.vmem [shape: f32[1,128], index: 7, kind: input, shape index: {}]
  %s8 = inlined_call_operand.hbm [shape: f32[16,128], index: 8, kind: output, shape index: {}]
  %s9 = sld [smem:[#allocation0]]
  $region77: #{tpu_custom_call.1} parent=0
    _
  %s11 = ssub.s32 1, %s9
  %s12 = scalar_select 0, %s11, %s9
  $region1: #{tpu_custom_call.1} parent=0
    #allocation2 [shape = 'u8[8192]{0}', space=vmem, size = 0x2000, scoped, tag = 'input window, operand 2']
    #allocation3 [shape = 's32[2]{0}', space=sflag, size = 0x8, scoped, tag = 'scoped memory for tpu_custom_call.1']
    #allocation4 [shape = 's32[2]{0}', space=sflag, size = 0x8, scoped, tag = 'scoped memory for tpu_custom_call.1']
    #allocation5 [shape = 'u8[32768]{0}', space=vmem, size = 0x8000, scoped, tag = 'input window, operand 3, single buffered']
    #allocation6 [shape = 's32[1]{0}', space=sflag, size = 0x4, scoped, tag = 'scoped memory for tpu_custom_call.1']
    #allocation7 [shape = 'u8[32768]{0}', space=vmem, size = 0x8000, scoped, tag = 'input window, operand 4, single buffered']
    #allocation8 [shape = 'u8[8192]{0}', space=vmem, size = 0x2000, scoped, tag = 'output window, operand 0']
    %13 = vsyncpa [#allocation3], 0
    %s14 = scalar_lea.sflag [#allocation3], 1
    %15 = vsyncpa %s14, 0
    %16 = vsyncpa [#allocation6], 0
    %17 = vsyncpa [#allocation4], 0
    %s18 = scalar_lea.sflag [#allocation4], 1
    %19 = vsyncpa %s18, 0
    loop: start=0, step=1, limit=4
    $region2: #{tpu_custom_call.1} parent=1 // loop_pre_header
      _
    $region3: #{tpu_custom_call.1} parent=1 // loop_header
      %s21 = sphi 0, %s25
      %p22 = scmp.ge.s32.totalorder %s21, 4
      %s31 = sphi 0, %s33
      %s34 = sphi 0, %s31
      %s35 = sphi 0, %s34
      %s51 = sphi 0, %s35
      %s57 = sphi 0, %s59
      %s60 = sphi 0, %s57
      %s61 = sphi 0, %s60
      %s77 = sphi 0, %s61
      %s83 = sphi 0, %s85
      %s86 = sphi 0, %s83
      %s87 = sphi 0, %s86
      %s103 = sphi 0, %s87
      %s107 = sphi 0, %s107
      %s109 = sphi 0, %s107
      %s110 = sphi 0, %s109
      %s124 = sphi 0, %s110
      %s128 = sphi 0, %s128
      %s130 = sphi 0, %s128
      %s131 = sphi 0, %s130
      %s145 = sphi 0, %s131
      %s149 = sphi 0, %s149
      %s151 = sphi 0, %s149
      %s152 = sphi 0, %s151
      %s166 = sphi 0, %s152
      %s170 = sphi 0, %s170
      %s172 = sphi 0, %s170
      %s173 = sphi 0, %s172
      %s187 = sphi 0, %s173
      %s191 = sphi 0, %s191
      %s193 = sphi 0, %s191
      %s194 = sphi 0, %s193
      %s208 = sphi 0, %s194
      %s214 = sphi 0, %s216
      %s217 = sphi 0, %s214
      %s218 = sphi 0, %s217
      %s234 = sphi 0, %s218
    $region4: #{tpu_custom_call.1} parent=1 // loop_header_branch
      %24 = sbr.rel (%p22) target = $region8
    $region5: #{tpu_custom_call.1} parent=1 // loop_body
      %s26 = ssub.s32 %s21, 1
      %s27 = ssub.s32 %s21, 2
      %s28 = sadd.s32 %s21, 1
      %s29 = ssub.s32 %s21, %s28
      %p30 = scmp.eq.s32.totalorder %s29, 0
      %s32 = sadd.s32 %s31, 1
      %s33 = scalar_select %p30, %s31, %s32
      %p36 = pneg %p30
      %p37 = scmp.eq.s32.totalorder %s21, 1
      %p38 = por %p36, %p37
      %p39 = scmp.ne.s32.totalorder %s31, %s34
      %p40 = scmp.eq.s32.totalorder %s21, 0
      %p41 = por %p39, %p40
      %p42 = scmp.ne.s32.totalorder %s31, %s34
      %p43 = scmp.eq.s32.totalorder %s26, 1
      %p44 = por %p42, %p43
      %p45 = scmp.ne.s32.totalorder %s34, %s35
      %p46 = scmp.eq.s32.totalorder %s26, 0
      %p47 = por %p45, %p46
      %p48 = scmp.ne.s32.totalorder %s34, %s35
      %p49 = scmp.eq.s32.totalorder %s27, 1
      %p50 = por %p48, %p49
      %p52 = scmp.ne.s32.totalorder %s35, %s51
      %p53 = scmp.eq.s32.totalorder %s27, 0
      %p54 = por %p52, %p53
      %s55 = ssub.s32 %s21, %s28
      %p56 = scmp.eq.s32.totalorder %s55, 0
      %s58 = sadd.s32 %s57, 1
      %s59 = scalar_select %p56, %s57, %s58
      %p62 = pneg %p56
      %p63 = scmp.eq.s32.totalorder %s21, 1
      %p64 = por %p62, %p63
      %p65 = scmp.ne.s32.totalorder %s57, %s60
      %p66 = scmp.eq.s32.totalorder %s21, 0
      %p67 = por %p65, %p66
      %p68 = scmp.ne.s32.totalorder %s57, %s60
      %p69 = scmp.eq.s32.totalorder %s26, 1
      %p70 = por %p68, %p69
      %p71 = scmp.ne.s32.totalorder %s60, %s61
      %p72 = scmp.eq.s32.totalorder %s26, 0
      %p73 = por %p71, %p72
      %p74 = scmp.ne.s32.totalorder %s60, %s61
      %p75 = scmp.eq.s32.totalorder %s27, 1
      %p76 = por %p74, %p75
      %p78 = scmp.ne.s32.totalorder %s61, %s77
      %p79 = scmp.eq.s32.totalorder %s27, 0
      %p80 = por %p78, %p79
      %s81 = ssub.s32 %s21, %s28
      %p82 = scmp.eq.s32.totalorder %s81, 0
      %s84 = sadd.s32 %s83, 1
      %s85 = scalar_select %p82, %s83, %s84
      %p88 = pneg %p82
      %p89 = scmp.eq.s32.totalorder %s21, 1
      %p90 = por %p88, %p89
      %p91 = scmp.ne.s32.totalorder %s83, %s86
      %p92 = scmp.eq.s32.totalorder %s21, 0
      %p93 = por %p91, %p92
      %p94 = scmp.ne.s32.totalorder %s83, %s86
      %p95 = scmp.eq.s32.totalorder %s26, 1
      %p96 = por %p94, %p95
      %p97 = scmp.ne.s32.totalorder %s86, %s87
      %p98 = scmp.eq.s32.totalorder %s26, 0
      %p99 = por %p97, %p98
      %p100 = scmp.ne.s32.totalorder %s86, %s87
      %p101 = scmp.eq.s32.totalorder %s27, 1
      %p102 = por %p100, %p101
      %p104 = scmp.ne.s32.totalorder %s87, %s103
      %p105 = scmp.eq.s32.totalorder %s27, 0
      %p106 = por %p104, %p105
      %s108 = sadd.s32 %s107, 1
      %p111 = scmp.eq.s32.totalorder %s21, 1
      %p112 = scmp.ne.s32.totalorder %s107, %s109
      %p113 = scmp.eq.s32.totalorder %s21, 0
      %p114 = por %p112, %p113
      %p115 = scmp.ne.s32.totalorder %s107, %s109
      %p116 = scmp.eq.s32.totalorder %s26, 1
      %p117 = por %p115, %p116
      %p118 = scmp.ne.s32.totalorder %s109, %s110
      %p119 = scmp.eq.s32.totalorder %s26, 0
      %p120 = por %p118, %p119
      %p121 = scmp.ne.s32.totalorder %s109, %s110
      %p122 = scmp.eq.s32.totalorder %s27, 1
      %p123 = por %p121, %p122
      %p125 = scmp.ne.s32.totalorder %s110, %s124
      %p126 = scmp.eq.s32.totalorder %s27, 0
      %p127 = por %p125, %p126
      %s129 = sadd.s32 %s128, 1
      %p132 = scmp.eq.s32.totalorder %s21, 1
      %p133 = scmp.ne.s32.totalorder %s128, %s130
      %p134 = scmp.eq.s32.totalorder %s21, 0
      %p135 = por %p133, %p134
      %p136 = scmp.ne.s32.totalorder %s128, %s130
      %p137 = scmp.eq.s32.totalorder %s26, 1
      %p138 = por %p136, %p137
      %p139 = scmp.ne.s32.totalorder %s130, %s131
      %p140 = scmp.eq.s32.totalorder %s26, 0
      %p141 = por %p139, %p140
      %p142 = scmp.ne.s32.totalorder %s130, %s131
      %p143 = scmp.eq.s32.totalorder %s27, 1
      %p144 = por %p142, %p143
      %p146 = scmp.ne.s32.totalorder %s131, %s145
      %p147 = scmp.eq.s32.totalorder %s27, 0
      %p148 = por %p146, %p147
      %s150 = sadd.s32 %s149, 1
      %p153 = scmp.eq.s32.totalorder %s21, 1
      %p154 = scmp.ne.s32.totalorder %s149, %s151
      %p155 = scmp.eq.s32.totalorder %s21, 0
      %p156 = por %p154, %p155
      %p157 = scmp.ne.s32.totalorder %s149, %s151
      %p158 = scmp.eq.s32.totalorder %s26, 1
      %p159 = por %p157, %p158
      %p160 = scmp.ne.s32.totalorder %s151, %s152
      %p161 = scmp.eq.s32.totalorder %s26, 0
      %p162 = por %p160, %p161
      %p163 = scmp.ne.s32.totalorder %s151, %s152
      %p164 = scmp.eq.s32.totalorder %s27, 1
      %p165 = por %p163, %p164
      %p167 = scmp.ne.s32.totalorder %s152, %s166
      %p168 = scmp.eq.s32.totalorder %s27, 0
      %p169 = por %p167, %p168
      %s171 = sadd.s32 %s170, 1
      %p174 = scmp.eq.s32.totalorder %s21, 1
      %p175 = scmp.ne.s32.totalorder %s170, %s172
      %p176 = scmp.eq.s32.totalorder %s21, 0
      %p177 = por %p175, %p176
      %p178 = scmp.ne.s32.totalorder %s170, %s172
      %p179 = scmp.eq.s32.totalorder %s26, 1
      %p180 = por %p178, %p179
      %p181 = scmp.ne.s32.totalorder %s172, %s173
      %p182 = scmp.eq.s32.totalorder %s26, 0
      %p183 = por %p181, %p182
      %p184 = scmp.ne.s32.totalorder %s172, %s173
      %p185 = scmp.eq.s32.totalorder %s27, 1
      %p186 = por %p184, %p185
      %p188 = scmp.ne.s32.totalorder %s173, %s187
      %p189 = scmp.eq.s32.totalorder %s27, 0
      %p190 = por %p188, %p189
      %s192 = sadd.s32 %s191, 1
      %p195 = scmp.eq.s32.totalorder %s21, 1
      %p196 = scmp.ne.s32.totalorder %s191, %s193
      %p197 = scmp.eq.s32.totalorder %s21, 0
      %p198 = por %p196, %p197
      %p199 = scmp.ne.s32.totalorder %s191, %s193
      %p200 = scmp.eq.s32.totalorder %s26, 1
      %p201 = por %p199, %p200
      %p202 = scmp.ne.s32.totalorder %s193, %s194
      %p203 = scmp.eq.s32.totalorder %s26, 0
      %p204 = por %p202, %p203
      %p205 = scmp.ne.s32.totalorder %s193, %s194
      %p206 = scmp.eq.s32.totalorder %s27, 1
      %p207 = por %p205, %p206
      %p209 = scmp.ne.s32.totalorder %s194, %s208
      %p210 = scmp.eq.s32.totalorder %s27, 0
      %p211 = por %p209, %p210
      %s212 = ssub.s32 %s21, %s28
      %p213 = scmp.eq.s32.totalorder %s212, 0
      %s215 = sadd.s32 %s214, 1
      %s216 = scalar_select %p213, %s214, %s215
      %p219 = pneg %p213
      %p220 = scmp.eq.s32.totalorder %s21, 1
      %p221 = por %p219, %p220
      %p222 = scmp.ne.s32.totalorder %s214, %s217
      %p223 = scmp.eq.s32.totalorder %s21, 0
      %p224 = por %p222, %p223
      %p225 = scmp.ne.s32.totalorder %s214, %s217
      %p226 = scmp.eq.s32.totalorder %s26, 1
      %p227 = por %p225, %p226
      %p228 = scmp.ne.s32.totalorder %s217, %s218
      %p229 = scmp.eq.s32.totalorder %s26, 0
      %p230 = por %p228, %p229
      %p231 = scmp.ne.s32.totalorder %s217, %s218
      %p232 = scmp.eq.s32.totalorder %s27, 1
      %p233 = por %p231, %p232
      %p235 = scmp.ne.s32.totalorder %s218, %s234
      %p236 = scmp.eq.s32.totalorder %s27, 0
      %p237 = por %p235, %p236
      %p238 = scmp.le.s32.totalorder 1, %s21
      %p239 = scmp.lt.s32.totalorder %s21, 3
      %p240 = pnand %p238, %p239
      %p241 = pneg %p240
      // Predicated region
      $region9: #{tpu_custom_call.1} parent=5 // pred_check
        _
      $region10: #{tpu_custom_call.1} parent=5 // pred_check_branch
        %243 = sbr.rel (%p240) target = $region12
      $region11: #{tpu_custom_call.1} parent=5 // pred_region
        %s244 = ssub.s32 %s21, 1
        // Predicated region
        $region13: #{tpu_custom_call.1} parent=11 // pred_check
          %p245 = pneg %p120
        $region14: #{tpu_custom_call.1} parent=11 // pred_check_branch
          %247 = sbr.rel (%p245) target = $region16
        $region15: #{tpu_custom_call.1} parent=11 // pred_region
          %s249 = ssub.s32 1024, 1024
          %250 = vsyncadd [#allocation6], %s249
          %s251 = sshll.u32 [#allocation5], 4
          %s252 = int_to_ptr.vmem [resolvable:$true] %s251
          %257 = dma.hbm_to_vmem [thread:$0]  %s3, 1024, %s252, [#allocation6], 64, 64, 4
        $region16: #{tpu_custom_call.1} parent=11 // pred_fallthru
          _
        // Predicated region
        $region17: #{tpu_custom_call.1} parent=11 // pred_check
          %p258 = pneg %p141
        $region18: #{tpu_custom_call.1} parent=11 // pred_check_branch
          %260 = sbr.rel (%p258) target = $region20
        $region19: #{tpu_custom_call.1} parent=11 // pred_region
          %s262 = ssub.s32 1024, 1024
          %263 = vsyncadd [#allocation6], %s262
          %s264 = sshll.u32 [#allocation7], 4
          %s265 = int_to_ptr.vmem [resolvable:$true] %s264
          %270 = dma.hbm_to_vmem [thread:$0]  %s4, 1024, %s265, [#allocation6], 64, 64, 4
        $region20: #{tpu_custom_call.1} parent=11 // pred_fallthru
          _
        // Predicated region
        $region21: #{tpu_custom_call.1} parent=11 // pred_check
          %p271 = pneg %p162
        $region22: #{tpu_custom_call.1} parent=11 // pred_check_branch
          %273 = sbr.rel (%p271) target = $region24
        $region23: #{tpu_custom_call.1} parent=11 // pred_region
          _
        $region24: #{tpu_custom_call.1} parent=11 // pred_fallthru
          _
        // Predicated region
        $region25: #{tpu_custom_call.1} parent=11 // pred_check
          %p274 = pneg %p183
        $region26: #{tpu_custom_call.1} parent=11 // pred_check_branch
          %276 = sbr.rel (%p274) target = $region28
        $region27: #{tpu_custom_call.1} parent=11 // pred_region
          _
        $region28: #{tpu_custom_call.1} parent=11 // pred_fallthru
          _
        // Predicated region
        $region29: #{tpu_custom_call.1} parent=11 // pred_check
          %p277 = pneg %p204
        $region30: #{tpu_custom_call.1} parent=11 // pred_check_branch
          %279 = sbr.rel (%p277) target = $region32
        $region31: #{tpu_custom_call.1} parent=11 // pred_region
          _
        $region32: #{tpu_custom_call.1} parent=11 // pred_fallthru
          _
      $region12: #{tpu_custom_call.1} parent=5 // pred_fallthru
        _
      %p280 = scmp.lt.s32.totalorder %s21, 2
      // Predicated region
      $region33: #{tpu_custom_call.1} parent=5 // pred_check
        %p281 = pneg %p280
      $region34: #{tpu_custom_call.1} parent=5 // pred_check_branch
        %283 = sbr.rel (%p281) target = $region36
      $region35: #{tpu_custom_call.1} parent=5 // pred_region
        // Predicated region
        $region37: #{tpu_custom_call.1} parent=35 // pred_check
          %p284 = pneg %p41
        $region38: #{tpu_custom_call.1} parent=35 // pred_check_branch
          %286 = sbr.rel (%p284) target = $region40
        $region39: #{tpu_custom_call.1} parent=35 // pred_region
          %p287 = scmp.lt.s32.totalorder %s21, 1
          %s288 = scalar_select %p287, %s21, 1
          %s289 = smul.addr %s288, 8
          %s290 = scalar_lea.vmem %s0, %s289
        $region40: #{tpu_custom_call.1} parent=35 // pred_fallthru
          _
        // Predicated region
        $region41: #{tpu_custom_call.1} parent=35 // pred_check
          %p291 = pneg %p67
        $region42: #{tpu_custom_call.1} parent=35 // pred_check_branch
          %293 = sbr.rel (%p291) target = $region44
        $region43: #{tpu_custom_call.1} parent=35 // pred_region
          %p294 = scmp.lt.s32.totalorder %s21, 1
          %s295 = scalar_select %p294, %s21, 1
          %s296 = smul.addr %s295, 8
          %s297 = scalar_lea.vmem %s1, %s296
        $region44: #{tpu_custom_call.1} parent=35 // pred_fallthru
          _
        // Predicated region
        $region45: #{tpu_custom_call.1} parent=35 // pred_check
          %p298 = pneg %p93
        $region46: #{tpu_custom_call.1} parent=35 // pred_check_branch
          %300 = sbr.rel (%p298) target = $region48
        $region47: #{tpu_custom_call.1} parent=35 // pred_region
          %s301 = sand.u32 %s83, 1
          %s302 = scalar_lea.sflag [#allocation3], %s301
          %s303 = sand.u32 %s83, 1
          %s304 = smul.addr %s303, 8
          %s305 = scalar_lea.vmem [#allocation2], %s304
          %s307 = ssub.s32 128, 128
          %308 = vsyncadd %s302, %s307
          %s309 = smul.addr %s21, 128
          %s310 = scalar_lea.hbm %s2, %s309
          %s312 = sshll.u32 %s305, 4
          %s313 = int_to_ptr.vmem [resolvable:$true] %s312
          %315 = dma.hbm_to_vmem [thread:$0]  %s310, 128, %s313, %s302
        $region48: #{tpu_custom_call.1} parent=35 // pred_fallthru
          _
      $region36: #{tpu_custom_call.1} parent=5 // pred_fallthru
        _
      %p316 = scmp.le.s32.totalorder 1, %s21
      %p317 = scmp.lt.s32.totalorder %s21, 3
      %p318 = pnand %p316, %p317
      %p319 = pneg %p318
      // Predicated region
      $region49: #{tpu_custom_call.1} parent=5 // pred_check
        _
      $region50: #{tpu_custom_call.1} parent=5 // pred_check_branch
        %321 = sbr.rel (%p318) target = $region52
      $region51: #{tpu_custom_call.1} parent=5 // pred_region
        %s322 = ssub.s32 %s21, 1
        %s323 = sand.u32 %s86, 1
        %s324 = scalar_lea.sflag [#allocation3], %s323
        %s325 = sand.u32 %s86, 1
        %s326 = smul.addr %s325, 8
        %s327 = scalar_lea.vmem [#allocation2], %s326
        // Predicated region
        $region53: #{tpu_custom_call.1} parent=51 // pred_check
          %p328 = pneg %p99
        $region54: #{tpu_custom_call.1} parent=51 // pred_check_branch
          %330 = sbr.rel (%p328) target = $region56
        $region55: #{tpu_custom_call.1} parent=51 // pred_region
          %331 = dma.done %s324, 128
        $region56: #{tpu_custom_call.1} parent=51 // pred_fallthru
          _
        // Predicated region
        $region57: #{tpu_custom_call.1} parent=51 // pred_check
          %p332 = pneg %p120
        $region58: #{tpu_custom_call.1} parent=51 // pred_check_branch
          %334 = sbr.rel (%p332) target = $region60
        $region59: #{tpu_custom_call.1} parent=51 // pred_region
          %335 = dma.done [#allocation6], 1024
        $region60: #{tpu_custom_call.1} parent=51 // pred_fallthru
          _
        // Predicated region
        $region61: #{tpu_custom_call.1} parent=51 // pred_check
          %p336 = pneg %p141
        $region62: #{tpu_custom_call.1} parent=51 // pred_check_branch
          %338 = sbr.rel (%p336) target = $region64
        $region63: #{tpu_custom_call.1} parent=51 // pred_region
          %339 = dma.done [#allocation6], 1024
        $region64: #{tpu_custom_call.1} parent=51 // pred_fallthru
          _
        %p340 = scmp.lt.s32.totalorder %s26, 1
        %s341 = scalar_select %p340, %s26, 1
        %s342 = smul.addr %s341, 8
        %s343 = scalar_lea.vmem %s0, %s342
        %p344 = pneg %p47
        %p345 = pneg %p44
        %p346 = scmp.lt.s32.totalorder %s26, 1
        %s347 = scalar_select %p346, %s26, 1
        %s348 = smul.addr %s347, 8
        %s349 = scalar_lea.vmem %s1, %s348
        %p350 = pneg %p73
        %p351 = pneg %p70
        %s352 = sand.u32 %s86, 1
        %s353 = scalar_lea.sflag [#allocation3], %s352
        %s354 = sand.u32 %s86, 1
        %s355 = smul.addr %s354, 8
        %s356 = scalar_lea.vmem [#allocation2], %s355
        %p357 = pneg %p99
        %p358 = pneg %p96
        %p359 = pneg %p120
        %p360 = pneg %p117
        %p361 = pneg %p141
        %p362 = pneg %p138
        %p363 = pneg %p162
        %p364 = pneg %p159
        %p365 = pneg %p183
        %p366 = pneg %p180
        %p367 = pneg %p204
        %p368 = pneg %p201
        %p369 = pneg %p230
        %p370 = pneg %p227
        %s371 = sand.u32 %s217, 1
        %s372 = scalar_lea.sflag [#allocation4], %s371
        %s373 = sand.u32 %s217, 1
        %s374 = smul.addr %s373, 8
        %s375 = scalar_lea.vmem [#allocation8], %s374
        %p376 = scmp.lt.s32.totalorder %s26, 1
        %s377 = scalar_select %p376, %s26, 1
        %s378 = smul.addr %s377, 8
        %s379 = scalar_lea.vmem %s0, %s378
        %p380 = scmp.lt.s32.totalorder %s26, 1
        %s381 = scalar_select %p380, %s26, 1
        %s382 = smul.addr %s381, 8
        %s383 = scalar_lea.vmem %s1, %s382
        %v385 = vld [vmem:[%s383] sm:$0xff]
        %v386 = vld [vmem:[%s379] sm:$0xff]
        %v387 = vlaneseq
        %v388 = vand.u32 %v387, 127
        %v389 = vlaneseq
        %v390 = vshrl.u32 %v389, 7
        %v391 = vsub.s32 0, %v390
        %v392 = vrot.slane %v385, %v391
        %394 = vbcast.lane.b32.xlu0 %v392, 256
        %v395 = vpop.permute.xlu0 %394
        %v396 = vlaneseq
        %v397 = vshrl.u32 %v396, 7
        %v398 = vsub.s32 1, %v397
        %v399 = vrot.slane %v385, %v398
        %401 = vbcast.lane.b32.xlu0 %v399, 256
        %v402 = vpop.permute.xlu0 %401
        %v403 = vlaneseq
        %v404 = vshrl.u32 %v403, 7
        %v405 = vsub.s32 2, %v404
        %v406 = vrot.slane %v385, %v405
        %408 = vbcast.lane.b32.xlu0 %v406, 256
        %v409 = vpop.permute.xlu0 %408
        %v410 = vlaneseq
        %v411 = vshrl.u32 %v410, 7
        %v412 = vsub.s32 3, %v411
        %v413 = vrot.slane %v385, %v412
        %415 = vbcast.lane.b32.xlu0 %v413, 256
        %v416 = vpop.permute.xlu0 %415
        %v417 = vlaneseq
        %v418 = vshrl.u32 %v417, 7
        %v419 = vsub.s32 4, %v418
        %v420 = vrot.slane %v385, %v419
        %422 = vbcast.lane.b32.xlu0 %v420, 256
        %v423 = vpop.permute.xlu0 %422
        %v424 = vlaneseq
        %v425 = vshrl.u32 %v424, 7
        %v426 = vsub.s32 5, %v425
        %v427 = vrot.slane %v385, %v426
        %429 = vbcast.lane.b32.xlu0 %v427, 256
        %v430 = vpop.permute.xlu0 %429
        %v431 = vlaneseq
        %v432 = vshrl.u32 %v431, 7
        %v433 = vsub.s32 6, %v432
        %v434 = vrot.slane %v385, %v433
        %436 = vbcast.lane.b32.xlu0 %v434, 256
        %v437 = vpop.permute.xlu0 %436
        %v438 = vlaneseq
        %v439 = vshrl.u32 %v438, 7
        %v440 = vsub.s32 7, %v439
        %v441 = vrot.slane %v385, %v440
        %443 = vbcast.lane.b32.xlu0 %v441, 256
        %v444 = vpop.permute.xlu0 %443
        %vm445 = vcmp.eq.s32.totalorder %v395, %v388
        %vm446 = vcmp.eq.s32.totalorder %v402, %v388
        %vm447 = vcmp.eq.s32.totalorder %v409, %v388
        %vm448 = vcmp.eq.s32.totalorder %v416, %v388
        %vm449 = vcmp.eq.s32.totalorder %v423, %v388
        %vm450 = vcmp.eq.s32.totalorder %v430, %v388
        %vm451 = vcmp.eq.s32.totalorder %v437, %v388
        %vm452 = vcmp.eq.s32.totalorder %v444, %v388
        %v453 = vlaneseq
        %v454 = vshrl.u32 %v453, 7
        %v455 = vsub.s32 0, %v454
        %v456 = vrot.slane %v386, %v455
        %458 = vbcast.lane.b32.xlu0 %v456, 256
        %v459 = vpop.permute.xlu0 %458
        %v460 = vlaneseq
        %v461 = vshrl.u32 %v460, 7
        %v462 = vsub.s32 1, %v461
        %v463 = vrot.slane %v386, %v462
        %465 = vbcast.lane.b32.xlu0 %v463, 256
        %v466 = vpop.permute.xlu0 %465
        %v467 = vlaneseq
        %v468 = vshrl.u32 %v467, 7
        %v469 = vsub.s32 2, %v468
        %v470 = vrot.slane %v386, %v469
        %472 = vbcast.lane.b32.xlu0 %v470, 256
        %v473 = vpop.permute.xlu0 %472
        %v474 = vlaneseq
        %v475 = vshrl.u32 %v474, 7
        %v476 = vsub.s32 3, %v475
        %v477 = vrot.slane %v386, %v476
        %479 = vbcast.lane.b32.xlu0 %v477, 256
        %v480 = vpop.permute.xlu0 %479
        %v481 = vlaneseq
        %v482 = vshrl.u32 %v481, 7
        %v483 = vsub.s32 4, %v482
        %v484 = vrot.slane %v386, %v483
        %486 = vbcast.lane.b32.xlu0 %v484, 256
        %v487 = vpop.permute.xlu0 %486
        %v488 = vlaneseq
        %v489 = vshrl.u32 %v488, 7
        %v490 = vsub.s32 5, %v489
        %v491 = vrot.slane %v386, %v490
        %493 = vbcast.lane.b32.xlu0 %v491, 256
        %v494 = vpop.permute.xlu0 %493
        %v495 = vlaneseq
        %v496 = vshrl.u32 %v495, 7
        %v497 = vsub.s32 6, %v496
        %v498 = vrot.slane %v386, %v497
        %500 = vbcast.lane.b32.xlu0 %v498, 256
        %v501 = vpop.permute.xlu0 %500
        %v502 = vlaneseq
        %v503 = vshrl.u32 %v502, 7
        %v504 = vsub.s32 7, %v503
        %v505 = vrot.slane %v386, %v504
        %507 = vbcast.lane.b32.xlu0 %v505, 256
        %v508 = vpop.permute.xlu0 %507
        %v509 = vsel %vm445, %v459, 0.0
        %v510 = vsel %vm446, %v466, 0.0
        %v511 = vsel %vm447, %v473, 0.0
        %v512 = vsel %vm448, %v480, 0.0
        %v513 = vsel %vm449, %v487, 0.0
        %v514 = vsel %vm450, %v494, 0.0
        %v515 = vsel %vm451, %v501, 0.0
        %v516 = vsel %vm452, %v508, 0.0
        %v517 = vrot.slane %v509, 4
        %v518 = vadd.f32 %v509, %v517
        %v519 = vrot.slane %v518, 2
        %v520 = vadd.f32 %v518, %v519
        %v521 = vrot.slane %v520, 1
        %v522 = vadd.f32 %v520, %v521
        %v523 = vrot.slane %v510, 4
        %v524 = vadd.f32 %v510, %v523
        %v525 = vrot.slane %v524, 2
        %v526 = vadd.f32 %v524, %v525
        %v527 = vrot.slane %v526, 1
        %v528 = vadd.f32 %v526, %v527
        %v529 = vrot.slane %v511, 4
        %v530 = vadd.f32 %v511, %v529
        %v531 = vrot.slane %v530, 2
        %v532 = vadd.f32 %v530, %v531
        %v533 = vrot.slane %v532, 1
        %v534 = vadd.f32 %v532, %v533
        %v535 = vrot.slane %v512, 4
        %v536 = vadd.f32 %v512, %v535
        %v537 = vrot.slane %v536, 2
        %v538 = vadd.f32 %v536, %v537
        %v539 = vrot.slane %v538, 1
        %v540 = vadd.f32 %v538, %v539
        %v541 = vrot.slane %v513, 4
        %v542 = vadd.f32 %v513, %v541
        %v543 = vrot.slane %v542, 2
        %v544 = vadd.f32 %v542, %v543
        %v545 = vrot.slane %v544, 1
        %v546 = vadd.f32 %v544, %v545
        %v547 = vrot.slane %v514, 4
        %v548 = vadd.f32 %v514, %v547
        %v549 = vrot.slane %v548, 2
        %v550 = vadd.f32 %v548, %v549
        %v551 = vrot.slane %v550, 1
        %v552 = vadd.f32 %v550, %v551
        %v553 = vrot.slane %v515, 4
        %v554 = vadd.f32 %v515, %v553
        %v555 = vrot.slane %v554, 2
        %v556 = vadd.f32 %v554, %v555
        %v557 = vrot.slane %v556, 1
        %v558 = vadd.f32 %v556, %v557
        %v559 = vrot.slane %v516, 4
        %v560 = vadd.f32 %v516, %v559
        %v561 = vrot.slane %v560, 2
        %v562 = vadd.f32 %v560, %v561
        %v563 = vrot.slane %v562, 1
        %v564 = vadd.f32 %v562, %v563
        %v565 = vpack.c.bf16 %v522, %v522
        %v566 = vpack.c.bf16 %v528, %v528
        %v567 = vpack.c.bf16 %v534, %v534
        %v568 = vpack.c.bf16 %v540, %v540
        %v569 = vpack.c.bf16 %v546, %v546
        %v570 = vpack.c.bf16 %v552, %v552
        %v571 = vpack.c.bf16 %v558, %v558
        %v572 = vpack.c.bf16 %v564, %v564
        %v573 = vld [vmem:[#allocation5] sm:$0xf]
        %v574 = vld [vmem:[#allocation5 + $0x4] sm:$0xf]
        %v575 = vld [vmem:[#allocation5 + $0x8] sm:$0xf]
        %v576 = vld [vmem:[#allocation5 + $0xc] sm:$0xf]
        %v577 = vld [vmem:[#allocation5 + $0x10] sm:$0xf]
        %v578 = vld [vmem:[#allocation5 + $0x14] sm:$0xf]
        %v579 = vld [vmem:[#allocation5 + $0x18] sm:$0xf]
        %v580 = vld [vmem:[#allocation5 + $0x1c] sm:$0xf]
        %v581 = vld [vmem:[#allocation5 + $0x20] sm:$0xf]
        %v582 = vld [vmem:[#allocation5 + $0x24] sm:$0xf]
        %v583 = vld [vmem:[#allocation5 + $0x28] sm:$0xf]
        %v584 = vld [vmem:[#allocation5 + $0x2c] sm:$0xf]
        %v585 = vld [vmem:[#allocation5 + $0x30] sm:$0xf]
        %v586 = vld [vmem:[#allocation5 + $0x34] sm:$0xf]
        %v587 = vld [vmem:[#allocation5 + $0x38] sm:$0xf]
        %v588 = vld [vmem:[#allocation5 + $0x3c] sm:$0xf]
        %v597 = vunpack.c.l.b16 %v565
        %v598 = vunpack.c.l.b16 %v566
        %v599 = vunpack.c.l.b16 %v567
        %v600 = vunpack.c.l.b16 %v568
        %v601 = vunpack.c.l.b16 %v569
        %v602 = vunpack.c.l.b16 %v570
        %v603 = vunpack.c.l.b16 %v571
        %v604 = vunpack.c.l.b16 %v572
        %vm605 = vcmask 1041409
        %v606 = vsel %vm605, %v598, %v597
        %vm607 = vcmask 1042434
        %v608 = vsel %vm607, %v599, %v606
        %vm609 = vcmask 1043459
        %v610 = vsel %vm609, %v600, %v608
        %vm611 = vcmask 1044484
        %v612 = vsel %vm611, %v601, %v610
        %vm613 = vcmask 1045509
        %v614 = vsel %vm613, %v602, %v612
        %vm615 = vcmask 1046534
        %v616 = vsel %vm615, %v603, %v614
        %vm617 = vcmask 1047559
        %v618 = vsel %vm617, %v604, %v616
        %v619 = vpack.c.b16 %v618, %v618
        %v637 = vunpack.c.l.b16 %v573
        %v638 = vunpack.c.l.b16 %v574
        %v639 = vunpack.c.l.b16 %v575
        %v640 = vunpack.c.l.b16 %v576
        %v641 = vunpack.c.l.b16 %v577
        %v642 = vunpack.c.l.b16 %v578
        %v643 = vunpack.c.l.b16 %v579
        %v644 = vunpack.c.l.b16 %v580
        %v645 = vunpack.c.l.b16 %v581
        %v646 = vunpack.c.l.b16 %v582
        %v647 = vunpack.c.l.b16 %v583
        %v648 = vunpack.c.l.b16 %v584
        %v649 = vunpack.c.l.b16 %v585
        %v650 = vunpack.c.l.b16 %v586
        %v651 = vunpack.c.l.b16 %v587
        %v652 = vunpack.c.l.b16 %v588
        %v653 = vpack.c.b16 %v638, %v637
        %v654 = vpack.c.b16 %v640, %v639
        %v655 = vpack.c.b16 %v642, %v641
        %v656 = vpack.c.b16 %v644, %v643
        %v657 = vpack.c.b16 %v646, %v645
        %v658 = vpack.c.b16 %v648, %v647
        %v659 = vpack.c.b16 %v650, %v649
        %v660 = vpack.c.b16 %v652, %v651
        %669 = vmatprep.subr.bf16.mxu0 0
        %670 = vmatpush1.bf16.msra.mxu0 %v653
        %671 = vmatprep.subr.bf16.mxu0 0
        %672 = vmatpush1.bf16.msra.mxu0 %v654
        %673 = vmatprep.subr.bf16.mxu0 0
        %674 = vmatpush1.bf16.msra.mxu0 %v655
        %675 = vmatprep.subr.bf16.mxu0 0
        %676 = vmatpush1.bf16.msra.mxu0 %v656
        %677 = vmatprep.subr.bf16.mxu0 0
        %678 = vmatpush1.bf16.msra.mxu0 %v657
        %679 = vmatprep.subr.bf16.mxu0 0
        %680 = vmatpush1.bf16.msra.mxu0 %v658
        %681 = vmatprep.subr.bf16.mxu0 0
        %682 = vmatpush1.bf16.msra.mxu0 %v659
        %683 = vmatprep.subr.bf16.mxu0 0
        %684 = vmatpush1.bf16.msra.mxu0 %v660
        %685 = vmatprep.subr.bf16.mxu0 0
        %686 = vmatpush1.bf16.msra.mxu0 0
        %687 = vmatprep.subr.bf16.mxu0 0
        %688 = vmatpush1.bf16.msra.mxu0 0
        %689 = vmatprep.subr.bf16.mxu0 0
        %690 = vmatpush1.bf16.msra.mxu0 0
        %691 = vmatprep.subr.bf16.mxu0 0
        %692 = vmatpush1.bf16.msra.mxu0 0
        %693 = vmatprep.subr.bf16.mxu0 0
        %694 = vmatpush1.bf16.msra.mxu0 0
        %695 = vmatprep.subr.bf16.mxu0 0
        %696 = vmatpush1.bf16.msra.mxu0 0
        %697 = vmatprep.subr.bf16.mxu0 0
        %698 = vmatpush1.bf16.msra.mxu0 0
        %699 = vmatprep.subr.bf16.mxu0 0
        %700 = vmatpush1.bf16.msra.mxu0 0
        %701 = vmatprep.mubr.bf16.mxu0 0
        %702 = vmatmul.mubr.bf16.gmra.mrb[0].mxu0 %v619
        %v703 = vpop.f32.mrb[0].mxu0
        %v704 = vadd.f32 0.0, %v703
        %v705 = vpop.f32.mrb[0].mxu0
        %v706 = vpop.f32.mrb[0].mxu0
        %v707 = vpop.f32.mrb[0].mxu0
        %708 = vdwg.mxu0
        %v709 = vpack.c.bf16 %v704, %v704
        %v710 = vld [vmem:[#allocation7] sm:$0xf]
        %v711 = vld [vmem:[#allocation7 + $0x4] sm:$0xf]
        %v712 = vld [vmem:[#allocation7 + $0x8] sm:$0xf]
        %v713 = vld [vmem:[#allocation7 + $0xc] sm:$0xf]
        %v714 = vld [vmem:[#allocation7 + $0x10] sm:$0xf]
        %v715 = vld [vmem:[#allocation7 + $0x14] sm:$0xf]
        %v716 = vld [vmem:[#allocation7 + $0x18] sm:$0xf]
        %v717 = vld [vmem:[#allocation7 + $0x1c] sm:$0xf]
        %v718 = vld [vmem:[#allocation7 + $0x20] sm:$0xf]
        %v719 = vld [vmem:[#allocation7 + $0x24] sm:$0xf]
        %v720 = vld [vmem:[#allocation7 + $0x28] sm:$0xf]
        %v721 = vld [vmem:[#allocation7 + $0x2c] sm:$0xf]
        %v722 = vld [vmem:[#allocation7 + $0x30] sm:$0xf]
        %v723 = vld [vmem:[#allocation7 + $0x34] sm:$0xf]
        %v724 = vld [vmem:[#allocation7 + $0x38] sm:$0xf]
        %v725 = vld [vmem:[#allocation7 + $0x3c] sm:$0xf]
        %v726 = vld [vmem:[%s5] sm:$0x1]
        %v728 = vlaneseq
        %v729 = vshrl.u32 %v728, 7
        %v730 = vsub.s32 0, %v729
        %v731 = vrot.slane %v726, %v730
        %v749 = vunpack.c.l.b16 %v710
        %v750 = vunpack.c.l.b16 %v711
        %v751 = vunpack.c.l.b16 %v712
        %v752 = vunpack.c.l.b16 %v713
        %v753 = vunpack.c.l.b16 %v714
        %v754 = vunpack.c.l.b16 %v715
        %v755 = vunpack.c.l.b16 %v716
        %v756 = vunpack.c.l.b16 %v717
        %v757 = vunpack.c.l.b16 %v718
        %v758 = vunpack.c.l.b16 %v719
        %v759 = vunpack.c.l.b16 %v720
        %v760 = vunpack.c.l.b16 %v721
        %v761 = vunpack.c.l.b16 %v722
        %v762 = vunpack.c.l.b16 %v723
        %v763 = vunpack.c.l.b16 %v724
        %v764 = vunpack.c.l.b16 %v725
        %v765 = vpack.c.b16 %v750, %v749
        %v766 = vpack.c.b16 %v752, %v751
        %v767 = vpack.c.b16 %v754, %v753
        %v768 = vpack.c.b16 %v756, %v755
        %v769 = vpack.c.b16 %v758, %v757
        %v770 = vpack.c.b16 %v760, %v759
        %v771 = vpack.c.b16 %v762, %v761
        %v772 = vpack.c.b16 %v764, %v763
        %781 = vmatprep.subr.bf16.mxu0 0
        %782 = vmatpush1.bf16.msra.mxu0 %v765
        %783 = vmatprep.subr.bf16.mxu0 0
        %784 = vmatpush1.bf16.msra.mxu0 %v766
        %785 = vmatprep.subr.bf16.mxu0 0
        %786 = vmatpush1.bf16.msra.mxu0 %v767
        %787 = vmatprep.subr.bf16.mxu0 0
        %788 = vmatpush1.bf16.msra.mxu0 %v768
        %789 = vmatprep.subr.bf16.mxu0 0
        %790 = vmatpush1.bf16.msra.mxu0 %v769
        %791 = vmatprep.subr.bf16.mxu0 0
        %792 = vmatpush1.bf16.msra.mxu0 %v770
        %793 = vmatprep.subr.bf16.mxu0 0
        %794 = vmatpush1.bf16.msra.mxu0 %v771
        %795 = vmatprep.subr.bf16.mxu0 0
        %796 = vmatpush1.bf16.msra.mxu0 %v772
        %797 = vmatprep.subr.bf16.mxu0 0
        %798 = vmatpush1.bf16.msra.mxu0 0
        %799 = vmatprep.subr.bf16.mxu0 0
        %800 = vmatpush1.bf16.msra.mxu0 0
        %801 = vmatprep.subr.bf16.mxu0 0
        %802 = vmatpush1.bf16.msra.mxu0 0
        %803 = vmatprep.subr.bf16.mxu0 0
        %804 = vmatpush1.bf16.msra.mxu0 0
        %805 = vmatprep.subr.bf16.mxu0 0
        %806 = vmatpush1.bf16.msra.mxu0 0
        %807 = vmatprep.subr.bf16.mxu0 0
        %808 = vmatpush1.bf16.msra.mxu0 0
        %809 = vmatprep.subr.bf16.mxu0 0
        %810 = vmatpush1.bf16.msra.mxu0 0
        %811 = vmatprep.subr.bf16.mxu0 0
        %812 = vmatpush1.bf16.msra.mxu0 0
        %813 = vmatprep.mubr.bf16.mxu0 0
        %814 = vmatmul.mubr.bf16.gmra.mrb[0].mxu0 %v709
        %v815 = vpop.f32.mrb[0].mxu0
        %v816 = vadd.f32 %v731, %v815
        %v817 = vpop.f32.mrb[0].mxu0
        %v818 = vpop.f32.mrb[0].mxu0
        %v819 = vpop.f32.mrb[0].mxu0
        %820 = vdwg.mxu0
        %v821 = vmax.f32 %v816, 0.0
        %v822 = vadd.f32 %v821, %v704
        %v823 = vpack.c.bf16 %v822, %v822
        %v824 = vld [vmem:[%s6] sm:$0xf]
        %v825 = vld [vmem:[%s6 + $0x4] sm:$0xf]
        %v826 = vld [vmem:[%s6 + $0x8] sm:$0xf]
        %v827 = vld [vmem:[%s6 + $0xc] sm:$0xf]
        %v828 = vld [vmem:[%s6 + $0x10] sm:$0xf]
        %v829 = vld [vmem:[%s6 + $0x14] sm:$0xf]
        %v830 = vld [vmem:[%s6 + $0x18] sm:$0xf]
        %v831 = vld [vmem:[%s6 + $0x1c] sm:$0xf]
        %v832 = vld [vmem:[%s6 + $0x20] sm:$0xf]
        %v833 = vld [vmem:[%s6 + $0x24] sm:$0xf]
        %v834 = vld [vmem:[%s6 + $0x28] sm:$0xf]
        %v835 = vld [vmem:[%s6 + $0x2c] sm:$0xf]
        %v836 = vld [vmem:[%s6 + $0x30] sm:$0xf]
        %v837 = vld [vmem:[%s6 + $0x34] sm:$0xf]
        %v838 = vld [vmem:[%s6 + $0x38] sm:$0xf]
        %v839 = vld [vmem:[%s6 + $0x3c] sm:$0xf]
        %v840 = vld [vmem:[%s7] sm:$0x1]
        %v842 = vlaneseq
        %v843 = vshrl.u32 %v842, 7
        %v844 = vsub.s32 0, %v843
        %v845 = vrot.slane %v840, %v844
        %v863 = vunpack.c.l.b16 %v824
        %v864 = vunpack.c.l.b16 %v825
        %v865 = vunpack.c.l.b16 %v826
        %v866 = vunpack.c.l.b16 %v827
        %v867 = vunpack.c.l.b16 %v828
        %v868 = vunpack.c.l.b16 %v829
        %v869 = vunpack.c.l.b16 %v830
        %v870 = vunpack.c.l.b16 %v831
        %v871 = vunpack.c.l.b16 %v832
        %v872 = vunpack.c.l.b16 %v833
        %v873 = vunpack.c.l.b16 %v834
        %v874 = vunpack.c.l.b16 %v835
        %v875 = vunpack.c.l.b16 %v836
        %v876 = vunpack.c.l.b16 %v837
        %v877 = vunpack.c.l.b16 %v838
        %v878 = vunpack.c.l.b16 %v839
        %v879 = vpack.c.b16 %v864, %v863
        %v880 = vpack.c.b16 %v866, %v865
        %v881 = vpack.c.b16 %v868, %v867
        %v882 = vpack.c.b16 %v870, %v869
        %v883 = vpack.c.b16 %v872, %v871
        %v884 = vpack.c.b16 %v874, %v873
        %v885 = vpack.c.b16 %v876, %v875
        %v886 = vpack.c.b16 %v878, %v877
        %895 = vmatprep.subr.bf16.mxu0 0
        %896 = vmatpush1.bf16.msra.mxu0 %v879
        %897 = vmatprep.subr.bf16.mxu0 0
        %898 = vmatpush1.bf16.msra.mxu0 %v880
        %899 = vmatprep.subr.bf16.mxu0 0
        %900 = vmatpush1.bf16.msra.mxu0 %v881
        %901 = vmatprep.subr.bf16.mxu0 0
        %902 = vmatpush1.bf16.msra.mxu0 %v882
        %903 = vmatprep.subr.bf16.mxu0 0
        %904 = vmatpush1.bf16.msra.mxu0 %v883
        %905 = vmatprep.subr.bf16.mxu0 0
        %906 = vmatpush1.bf16.msra.mxu0 %v884
        %907 = vmatprep.subr.bf16.mxu0 0
        %908 = vmatpush1.bf16.msra.mxu0 %v885
        %909 = vmatprep.subr.bf16.mxu0 0
        %910 = vmatpush1.bf16.msra.mxu0 %v886
        %911 = vmatprep.subr.bf16.mxu0 0
        %912 = vmatpush1.bf16.msra.mxu0 0
        %913 = vmatprep.subr.bf16.mxu0 0
        %914 = vmatpush1.bf16.msra.mxu0 0
        %915 = vmatprep.subr.bf16.mxu0 0
        %916 = vmatpush1.bf16.msra.mxu0 0
        %917 = vmatprep.subr.bf16.mxu0 0
        %918 = vmatpush1.bf16.msra.mxu0 0
        %919 = vmatprep.subr.bf16.mxu0 0
        %920 = vmatpush1.bf16.msra.mxu0 0
        %921 = vmatprep.subr.bf16.mxu0 0
        %922 = vmatpush1.bf16.msra.mxu0 0
        %923 = vmatprep.subr.bf16.mxu0 0
        %924 = vmatpush1.bf16.msra.mxu0 0
        %925 = vmatprep.subr.bf16.mxu0 0
        %926 = vmatpush1.bf16.msra.mxu0 0
        %927 = vmatprep.mubr.bf16.mxu0 0
        %928 = vmatmul.mubr.bf16.gmra.mrb[0].mxu0 %v823
        %v929 = vpop.f32.mrb[0].mxu0
        %v930 = vadd.f32 %v845, %v929
        %v931 = vpop.f32.mrb[0].mxu0
        %v932 = vpop.f32.mrb[0].mxu0
        %v933 = vpop.f32.mrb[0].mxu0
        %934 = vdwg.mxu0
        %v936 = vcombine.high %v930, %v930
        %v938 = vunpack.c.l.s4 1966171168
        %v939 = vunpack.c.0.s8 %v938
        %v940 = vlaneseq
        %v941 = vshrl.u32 %v940, 7
        %v942 = vsub.s32 %v939, %v941
        %v943 = vrot.slane %v930, %v942
        %v945 = vunpack.c.l.s4 1966171168
        %v946 = vunpack.c.0.s8 %v945
        %v947 = vlaneseq
        %v948 = vshrl.u32 %v947, 7
        %v949 = vsub.s32 %v946, %v948
        %v950 = vrot.slane %v936, %v949
        %v951 = vcombine.high %v943, %v943
        %v952 = vcombine.high %v950, %v950
        %v954 = vunpack.c.l.s4 1966171168
        %v955 = vunpack.c.0.s8 %v954
        %v956 = vlaneseq
        %v957 = vshrl.u32 %v956, 7
        %v958 = vsub.s32 %v955, %v957
        %v959 = vrot.slane %v943, %v958
        %v961 = vunpack.c.l.s4 1966171168
        %v962 = vunpack.c.0.s8 %v961
        %v963 = vlaneseq
        %v964 = vshrl.u32 %v963, 7
        %v965 = vsub.s32 %v962, %v964
        %v966 = vrot.slane %v950, %v965
        %v968 = vunpack.c.l.s4 1966171168
        %v969 = vunpack.c.0.s8 %v968
        %v970 = vlaneseq
        %v971 = vshrl.u32 %v970, 7
        %v972 = vsub.s32 %v969, %v971
        %v973 = vrot.slane %v951, %v972
        %v975 = vunpack.c.l.s4 1966171168
        %v976 = vunpack.c.0.s8 %v975
        %v977 = vlaneseq
        %v978 = vshrl.u32 %v977, 7
        %v979 = vsub.s32 %v976, %v978
        %v980 = vrot.slane %v952, %v979
        %v981 = vcombine.high %v959, %v959
        %v982 = vcombine.high %v966, %v966
        %v983 = vcombine.high %v973, %v973
        %v984 = vcombine.high %v980, %v980
        %v985 = vld [vmem:[%s327] sm:$0xff]
        %v986 = vlaneseq
        %v987 = vshrl.u32 %v986, 7
        %v988 = vsub.s32 0, %v987
        %v989 = vrot.slane %v985, %v988
        %991 = vbcast.lane.b32.xlu0 %v989, 256
        %v992 = vpop.permute.xlu0 %991
        %s994 = sor.u32 256, 8
        %995 = vbcast.lane.b32.xlu0 %v989, %s994
        %v996 = vpop.permute.xlu0 %995
        %v997 = vlaneseq
        %v998 = vshrl.u32 %v997, 7
        %v999 = vsub.s32 1, %v998
        %v1000 = vrot.slane %v985, %v999
        %1002 = vbcast.lane.b32.xlu0 %v1000, 256
        %v1003 = vpop.permute.xlu0 %1002
        %s1005 = sor.u32 256, 8
        %1006 = vbcast.lane.b32.xlu0 %v1000, %s1005
        %v1007 = vpop.permute.xlu0 %1006
        %v1008 = vlaneseq
        %v1009 = vshrl.u32 %v1008, 7
        %v1010 = vsub.s32 2, %v1009
        %v1011 = vrot.slane %v985, %v1010
        %1013 = vbcast.lane.b32.xlu0 %v1011, 256
        %v1014 = vpop.permute.xlu0 %1013
        %s1016 = sor.u32 256, 8
        %1017 = vbcast.lane.b32.xlu0 %v1011, %s1016
        %v1018 = vpop.permute.xlu0 %1017
        %v1019 = vlaneseq
        %v1020 = vshrl.u32 %v1019, 7
        %v1021 = vsub.s32 3, %v1020
        %v1022 = vrot.slane %v985, %v1021
        %1024 = vbcast.lane.b32.xlu0 %v1022, 256
        %v1025 = vpop.permute.xlu0 %1024
        %s1027 = sor.u32 256, 8
        %1028 = vbcast.lane.b32.xlu0 %v1022, %s1027
        %v1029 = vpop.permute.xlu0 %1028
        %v1030 = vlaneseq
        %v1031 = vshrl.u32 %v1030, 7
        %v1032 = vsub.s32 4, %v1031
        %v1033 = vrot.slane %v985, %v1032
        %1035 = vbcast.lane.b32.xlu0 %v1033, 256
        %v1036 = vpop.permute.xlu0 %1035
        %s1038 = sor.u32 256, 8
        %1039 = vbcast.lane.b32.xlu0 %v1033, %s1038
        %v1040 = vpop.permute.xlu0 %1039
        %v1041 = vlaneseq
        %v1042 = vshrl.u32 %v1041, 7
        %v1043 = vsub.s32 5, %v1042
        %v1044 = vrot.slane %v985, %v1043
        %1046 = vbcast.lane.b32.xlu0 %v1044, 256
        %v1047 = vpop.permute.xlu0 %1046
        %s1049 = sor.u32 256, 8
        %1050 = vbcast.lane.b32.xlu0 %v1044, %s1049
        %v1051 = vpop.permute.xlu0 %1050
        %v1052 = vlaneseq
        %v1053 = vshrl.u32 %v1052, 7
        %v1054 = vsub.s32 6, %v1053
        %v1055 = vrot.slane %v985, %v1054
        %1057 = vbcast.lane.b32.xlu0 %v1055, 256
        %v1058 = vpop.permute.xlu0 %1057
        %s1060 = sor.u32 256, 8
        %1061 = vbcast.lane.b32.xlu0 %v1055, %s1060
        %v1062 = vpop.permute.xlu0 %1061
        %v1063 = vlaneseq
        %v1064 = vshrl.u32 %v1063, 7
        %v1065 = vsub.s32 7, %v1064
        %v1066 = vrot.slane %v985, %v1065
        %1068 = vbcast.lane.b32.xlu0 %v1066, 256
        %v1069 = vpop.permute.xlu0 %1068
        %s1071 = sor.u32 256, 8
        %1072 = vbcast.lane.b32.xlu0 %v1066, %s1071
        %v1073 = vpop.permute.xlu0 %1072
        %vm1074 = vcmp.eq.s32.totalorder %v992, %v388
        %vm1075 = vcmp.eq.s32.totalorder %v996, %v388
        %vm1076 = vcmp.eq.s32.totalorder %v1003, %v388
        %vm1077 = vcmp.eq.s32.totalorder %v1007, %v388
        %vm1078 = vcmp.eq.s32.totalorder %v1014, %v388
        %vm1079 = vcmp.eq.s32.totalorder %v1018, %v388
        %vm1080 = vcmp.eq.s32.totalorder %v1025, %v388
        %vm1081 = vcmp.eq.s32.totalorder %v1029, %v388
        %vm1082 = vcmp.eq.s32.totalorder %v1036, %v388
        %vm1083 = vcmp.eq.s32.totalorder %v1040, %v388
        %vm1084 = vcmp.eq.s32.totalorder %v1047, %v388
        %vm1085 = vcmp.eq.s32.totalorder %v1051, %v388
        %vm1086 = vcmp.eq.s32.totalorder %v1058, %v388
        %vm1087 = vcmp.eq.s32.totalorder %v1062, %v388
        %vm1088 = vcmp.eq.s32.totalorder %v1069, %v388
        %vm1089 = vcmp.eq.s32.totalorder %v1073, %v388
        %v1090 = vlaneseq
        %v1091 = vshrl.u32 %v1090, 7
        %v1092 = vsub.s32 0, %v1091
        %v1093 = vrot.slane %v959, %v1092
        %v1094 = vlaneseq
        %v1095 = vshrl.u32 %v1094, 7
        %v1096 = vsub.s32 0, %v1095
        %v1097 = vrot.slane %v973, %v1096
        %v1098 = vlaneseq
        %v1099 = vshrl.u32 %v1098, 7
        %v1100 = vsub.s32 0, %v1099
        %v1101 = vrot.slane %v981, %v1100
        %v1102 = vlaneseq
        %v1103 = vshrl.u32 %v1102, 7
        %v1104 = vsub.s32 0, %v1103
        %v1105 = vrot.slane %v983, %v1104
        %v1106 = vlaneseq
        %v1107 = vshrl.u32 %v1106, 7
        %v1108 = vsub.s32 0, %v1107
        %v1109 = vrot.slane %v966, %v1108
        %v1110 = vlaneseq
        %v1111 = vshrl.u32 %v1110, 7
        %v1112 = vsub.s32 0, %v1111
        %v1113 = vrot.slane %v980, %v1112
        %v1114 = vlaneseq
        %v1115 = vshrl.u32 %v1114, 7
        %v1116 = vsub.s32 0, %v1115
        %v1117 = vrot.slane %v982, %v1116
        %v1118 = vlaneseq
        %v1119 = vshrl.u32 %v1118, 7
        %v1120 = vsub.s32 0, %v1119
        %v1121 = vrot.slane %v984, %v1120
        %v1130 = vsel %vm1074, %v1093, 0.0
        %v1131 = vsel %vm1075, %v1093, 0.0
        %v1132 = vsel %vm1076, %v1097, 0.0
        %v1133 = vsel %vm1077, %v1097, 0.0
        %v1134 = vsel %vm1078, %v1101, 0.0
        %v1135 = vsel %vm1079, %v1101, 0.0
        %v1136 = vsel %vm1080, %v1105, 0.0
        %v1137 = vsel %vm1081, %v1105, 0.0
        %v1138 = vsel %vm1082, %v1109, 0.0
        %v1139 = vsel %vm1083, %v1109, 0.0
        %v1140 = vsel %vm1084, %v1113, 0.0
        %v1141 = vsel %vm1085, %v1113, 0.0
        %v1142 = vsel %vm1086, %v1117, 0.0
        %v1143 = vsel %vm1087, %v1117, 0.0
        %v1144 = vsel %vm1088, %v1121, 0.0
        %v1145 = vsel %vm1089, %v1121, 0.0
        %1146 = vadd.xlane.f32.xlu0 %v1130
        %v1147 = vpop.xlane.xlu0 %1146
        %1148 = vadd.xlane.f32.xlu0 %v1131
        %v1149 = vpop.xlane.xlu0 %1148
        %1150 = vadd.xlane.f32.xlu0 %v1132
        %v1151 = vpop.xlane.xlu0 %1150
        %1152 = vadd.xlane.f32.xlu0 %v1133
        %v1153 = vpop.xlane.xlu0 %1152
        %1154 = vadd.xlane.f32.xlu0 %v1134
        %v1155 = vpop.xlane.xlu0 %1154
        %1156 = vadd.xlane.f32.xlu0 %v1135
        %v1157 = vpop.xlane.xlu0 %1156
        %1158 = vadd.xlane.f32.xlu0 %v1136
        %v1159 = vpop.xlane.xlu0 %1158
        %1160 = vadd.xlane.f32.xlu0 %v1137
        %v1161 = vpop.xlane.xlu0 %1160
        %1162 = vadd.xlane.f32.xlu0 %v1138
        %v1163 = vpop.xlane.xlu0 %1162
        %1164 = vadd.xlane.f32.xlu0 %v1139
        %v1165 = vpop.xlane.xlu0 %1164
        %1166 = vadd.xlane.f32.xlu0 %v1140
        %v1167 = vpop.xlane.xlu0 %1166
        %1168 = vadd.xlane.f32.xlu0 %v1141
        %v1169 = vpop.xlane.xlu0 %1168
        %1170 = vadd.xlane.f32.xlu0 %v1142
        %v1171 = vpop.xlane.xlu0 %1170
        %1172 = vadd.xlane.f32.xlu0 %v1143
        %v1173 = vpop.xlane.xlu0 %1172
        %1174 = vadd.xlane.f32.xlu0 %v1144
        %v1175 = vpop.xlane.xlu0 %1174
        %1176 = vadd.xlane.f32.xlu0 %v1145
        %v1177 = vpop.xlane.xlu0 %1176
        %v1194 = vlaneseq
        %v1195 = vshrl.u32 %v1194, 7
        %v1196 = vsub.s32 %v388, %v1195
        %v1197 = vrot.slane %v1147, %v1196
        %v1198 = vadd.s32 %v388, 4294967288
        %v1199 = vlaneseq
        %v1200 = vshrl.u32 %v1199, 7
        %v1201 = vsub.s32 %v1198, %v1200
        %v1202 = vrot.slane %v1149, %v1201
        %vm1203 = vcmask 130112
        %v1204 = vsel %vm1203, %v1202, %v1197
        %v1205 = vlaneseq
        %v1206 = vshrl.u32 %v1205, 7
        %v1207 = vsub.s32 %v388, %v1206
        %v1208 = vrot.slane %v1151, %v1207
        %v1209 = vlaneseq
        %v1210 = vshrl.u32 %v1209, 7
        %v1211 = vsub.s32 %v1198, %v1210
        %v1212 = vrot.slane %v1153, %v1211
        %v1213 = vsel %vm1203, %v1212, %v1208
        %v1214 = vlaneseq
        %v1215 = vshrl.u32 %v1214, 7
        %v1216 = vsub.s32 %v388, %v1215
        %v1217 = vrot.slane %v1155, %v1216
        %v1218 = vlaneseq
        %v1219 = vshrl.u32 %v1218, 7
        %v1220 = vsub.s32 %v1198, %v1219
        %v1221 = vrot.slane %v1157, %v1220
        %v1222 = vsel %vm1203, %v1221, %v1217
        %v1223 = vlaneseq
        %v1224 = vshrl.u32 %v1223, 7
        %v1225 = vsub.s32 %v388, %v1224
        %v1226 = vrot.slane %v1159, %v1225
        %v1227 = vlaneseq
        %v1228 = vshrl.u32 %v1227, 7
        %v1229 = vsub.s32 %v1198, %v1228
        %v1230 = vrot.slane %v1161, %v1229
        %v1231 = vsel %vm1203, %v1230, %v1226
        %v1232 = vlaneseq
        %v1233 = vshrl.u32 %v1232, 7
        %v1234 = vsub.s32 %v388, %v1233
        %v1235 = vrot.slane %v1163, %v1234
        %v1236 = vlaneseq
        %v1237 = vshrl.u32 %v1236, 7
        %v1238 = vsub.s32 %v1198, %v1237
        %v1239 = vrot.slane %v1165, %v1238
        %v1240 = vsel %vm1203, %v1239, %v1235
        %v1241 = vlaneseq
        %v1242 = vshrl.u32 %v1241, 7
        %v1243 = vsub.s32 %v388, %v1242
        %v1244 = vrot.slane %v1167, %v1243
        %v1245 = vlaneseq
        %v1246 = vshrl.u32 %v1245, 7
        %v1247 = vsub.s32 %v1198, %v1246
        %v1248 = vrot.slane %v1169, %v1247
        %v1249 = vsel %vm1203, %v1248, %v1244
        %v1250 = vlaneseq
        %v1251 = vshrl.u32 %v1250, 7
        %v1252 = vsub.s32 %v388, %v1251
        %v1253 = vrot.slane %v1171, %v1252
        %v1254 = vlaneseq
        %v1255 = vshrl.u32 %v1254, 7
        %v1256 = vsub.s32 %v1198, %v1255
        %v1257 = vrot.slane %v1173, %v1256
        %v1258 = vsel %vm1203, %v1257, %v1253
        %v1259 = vlaneseq
        %v1260 = vshrl.u32 %v1259, 7
        %v1261 = vsub.s32 %v388, %v1260
        %v1262 = vrot.slane %v1175, %v1261
        %v1263 = vlaneseq
        %v1264 = vshrl.u32 %v1263, 7
        %v1265 = vsub.s32 %v1198, %v1264
        %v1266 = vrot.slane %v1177, %v1265
        %v1267 = vsel %vm1203, %v1266, %v1262
        %v1268 = vsel %vm605, %v1213, %v1204
        %v1269 = vsel %vm607, %v1222, %v1268
        %v1270 = vsel %vm609, %v1231, %v1269
        %v1271 = vsel %vm611, %v1240, %v1270
        %v1272 = vsel %vm613, %v1249, %v1271
        %v1273 = vsel %vm615, %v1258, %v1272
        %v1274 = vsel %vm617, %v1267, %v1273
        %vm1276 = vcmask 130048
        %1277 = vst.msk [vmem:[%s375] sm:$0xff] %vm1276, %v1274
        %v1278 = vld [vmem:[%s327] sm:$0xff]
        %v1279 = vlaneseq
        %v1280 = vshrl.u32 %v1279, 7
        %v1281 = vsub.s32 0, %v1280
        %v1282 = vrot.slane %v1278, %v1281
        %s1284 = sor.u32 256, 16
        %1285 = vbcast.lane.b32.xlu0 %v1282, %s1284
        %v1286 = vpop.permute.xlu0 %1285
        %s1288 = sor.u32 256, 24
        %1289 = vbcast.lane.b32.xlu0 %v1282, %s1288
        %v1290 = vpop.permute.xlu0 %1289
        %v1291 = vlaneseq
        %v1292 = vshrl.u32 %v1291, 7
        %v1293 = vsub.s32 1, %v1292
        %v1294 = vrot.slane %v1278, %v1293
        %s1296 = sor.u32 256, 16
        %1297 = vbcast.lane.b32.xlu0 %v1294, %s1296
        %v1298 = vpop.permute.xlu0 %1297
        %s1300 = sor.u32 256, 24
        %1301 = vbcast.lane.b32.xlu0 %v1294, %s1300
        %v1302 = vpop.permute.xlu0 %1301
        %v1303 = vlaneseq
        %v1304 = vshrl.u32 %v1303, 7
        %v1305 = vsub.s32 2, %v1304
        %v1306 = vrot.slane %v1278, %v1305
        %s1308 = sor.u32 256, 16
        %1309 = vbcast.lane.b32.xlu0 %v1306, %s1308
        %v1310 = vpop.permute.xlu0 %1309
        %s1312 = sor.u32 256, 24
        %1313 = vbcast.lane.b32.xlu0 %v1306, %s1312
        %v1314 = vpop.permute.xlu0 %1313
        %v1315 = vlaneseq
        %v1316 = vshrl.u32 %v1315, 7
        %v1317 = vsub.s32 3, %v1316
        %v1318 = vrot.slane %v1278, %v1317
        %s1320 = sor.u32 256, 16
        %1321 = vbcast.lane.b32.xlu0 %v1318, %s1320
        %v1322 = vpop.permute.xlu0 %1321
        %s1324 = sor.u32 256, 24
        %1325 = vbcast.lane.b32.xlu0 %v1318, %s1324
        %v1326 = vpop.permute.xlu0 %1325
        %v1327 = vlaneseq
        %v1328 = vshrl.u32 %v1327, 7
        %v1329 = vsub.s32 4, %v1328
        %v1330 = vrot.slane %v1278, %v1329
        %s1332 = sor.u32 256, 16
        %1333 = vbcast.lane.b32.xlu0 %v1330, %s1332
        %v1334 = vpop.permute.xlu0 %1333
        %s1336 = sor.u32 256, 24
        %1337 = vbcast.lane.b32.xlu0 %v1330, %s1336
        %v1338 = vpop.permute.xlu0 %1337
        %v1339 = vlaneseq
        %v1340 = vshrl.u32 %v1339, 7
        %v1341 = vsub.s32 5, %v1340
        %v1342 = vrot.slane %v1278, %v1341
        %s1344 = sor.u32 256, 16
        %1345 = vbcast.lane.b32.xlu0 %v1342, %s1344
        %v1346 = vpop.permute.xlu0 %1345
        %s1348 = sor.u32 256, 24
        %1349 = vbcast.lane.b32.xlu0 %v1342, %s1348
        %v1350 = vpop.permute.xlu0 %1349
        %v1351 = vlaneseq
        %v1352 = vshrl.u32 %v1351, 7
        %v1353 = vsub.s32 6, %v1352
        %v1354 = vrot.slane %v1278, %v1353
        %s1356 = sor.u32 256, 16
        %1357 = vbcast.lane.b32.xlu0 %v1354, %s1356
        %v1358 = vpop.permute.xlu0 %1357
        %s1360 = sor.u32 256, 24
        %1361 = vbcast.lane.b32.xlu0 %v1354, %s1360
        %v1362 = vpop.permute.xlu0 %1361
        %v1363 = vlaneseq
        %v1364 = vshrl.u32 %v1363, 7
        %v1365 = vsub.s32 7, %v1364
        %v1366 = vrot.slane %v1278, %v1365
        %s1368 = sor.u32 256, 16
        %1369 = vbcast.lane.b32.xlu0 %v1366, %s1368
        %v1370 = vpop.permute.xlu0 %1369
        %s1372 = sor.u32 256, 24
        %1373 = vbcast.lane.b32.xlu0 %v1366, %s1372
        %v1374 = vpop.permute.xlu0 %1373
        %vm1375 = vcmp.eq.s32.totalorder %v1286, %v388
        %vm1376 = vcmp.eq.s32.totalorder %v1290, %v388
        %vm1377 = vcmp.eq.s32.totalorder %v1298, %v388
        %vm1378 = vcmp.eq.s32.totalorder %v1302, %v388
        %vm1379 = vcmp.eq.s32.totalorder %v1310, %v388
        %vm1380 = vcmp.eq.s32.totalorder %v1314, %v388
        %vm1381 = vcmp.eq.s32.totalorder %v1322, %v388
        %vm1382 = vcmp.eq.s32.totalorder %v1326, %v388
        %vm1383 = vcmp.eq.s32.totalorder %v1334, %v388
        %vm1384 = vcmp.eq.s32.totalorder %v1338, %v388
        %vm1385 = vcmp.eq.s32.totalorder %v1346, %v388
        %vm1386 = vcmp.eq.s32.totalorder %v1350, %v388
        %vm1387 = vcmp.eq.s32.totalorder %v1358, %v388
        %vm1388 = vcmp.eq.s32.totalorder %v1362, %v388
        %vm1389 = vcmp.eq.s32.totalorder %v1370, %v388
        %vm1390 = vcmp.eq.s32.totalorder %v1374, %v388
        %v1391 = vsel %vm1375, %v1093, 0.0
        %v1392 = vsel %vm1376, %v1093, 0.0
        %v1393 = vsel %vm1377, %v1097, 0.0
        %v1394 = vsel %vm1378, %v1097, 0.0
        %v1395 = vsel %vm1379, %v1101, 0.0
        %v1396 = vsel %vm1380, %v1101, 0.0
        %v1397 = vsel %vm1381, %v1105, 0.0
        %v1398 = vsel %vm1382, %v1105, 0.0
        %v1399 = vsel %vm1383, %v1109, 0.0
        %v1400 = vsel %vm1384, %v1109, 0.0
        %v1401 = vsel %vm1385, %v1113, 0.0
        %v1402 = vsel %vm1386, %v1113, 0.0
        %v1403 = vsel %vm1387, %v1117, 0.0
        %v1404 = vsel %vm1388, %v1117, 0.0
        %v1405 = vsel %vm1389, %v1121, 0.0
        %v1406 = vsel %vm1390, %v1121, 0.0
        %1407 = vadd.xlane.f32.xlu0 %v1391
        %v1408 = vpop.xlane.xlu0 %1407
        %1409 = vadd.xlane.f32.xlu0 %v1392
        %v1410 = vpop.xlane.xlu0 %1409
        %1411 = vadd.xlane.f32.xlu0 %v1393
        %v1412 = vpop.xlane.xlu0 %1411
        %1413 = vadd.xlane.f32.xlu0 %v1394
        %v1414 = vpop.xlane.xlu0 %1413
        %1415 = vadd.xlane.f32.xlu0 %v1395
        %v1416 = vpop.xlane.xlu0 %1415
        %1417 = vadd.xlane.f32.xlu0 %v1396
        %v1418 = vpop.xlane.xlu0 %1417
        %1419 = vadd.xlane.f32.xlu0 %v1397
        %v1420 = vpop.xlane.xlu0 %1419
        %1421 = vadd.xlane.f32.xlu0 %v1398
        %v1422 = vpop.xlane.xlu0 %1421
        %1423 = vadd.xlane.f32.xlu0 %v1399
        %v1424 = vpop.xlane.xlu0 %1423
        %1425 = vadd.xlane.f32.xlu0 %v1400
        %v1426 = vpop.xlane.xlu0 %1425
        %1427 = vadd.xlane.f32.xlu0 %v1401
        %v1428 = vpop.xlane.xlu0 %1427
        %1429 = vadd.xlane.f32.xlu0 %v1402
        %v1430 = vpop.xlane.xlu0 %1429
        %1431 = vadd.xlane.f32.xlu0 %v1403
        %v1432 = vpop.xlane.xlu0 %1431
        %1433 = vadd.xlane.f32.xlu0 %v1404
        %v1434 = vpop.xlane.xlu0 %1433
        %1435 = vadd.xlane.f32.xlu0 %v1405
        %v1436 = vpop.xlane.xlu0 %1435
        %1437 = vadd.xlane.f32.xlu0 %v1406
        %v1438 = vpop.xlane.xlu0 %1437
        %v1455 = vadd.s32 %v388, 4294967280
        %v1456 = vlaneseq
        %v1457 = vshrl.u32 %v1456, 7
        %v1458 = vsub.s32 %v1455, %v1457
        %v1459 = vrot.slane %v1408, %v1458
        %v1460 = vadd.s32 %v388, 4294967272
        %v1461 = vlaneseq
        %v1462 = vshrl.u32 %v1461, 7
        %v1463 = vsub.s32 %v1460, %v1462
        %v1464 = vrot.slane %v1410, %v1463
        %vm1465 = vcmask 261312
        %v1466 = vsel %vm1465, %v1464, %v1459
        %v1467 = vlaneseq
        %v1468 = vshrl.u32 %v1467, 7
        %v1469 = vsub.s32 %v1455, %v1468
        %v1470 = vrot.slane %v1412, %v1469
        %v1471 = vlaneseq
        %v1472 = vshrl.u32 %v1471, 7
        %v1473 = vsub.s32 %v1460, %v1472
        %v1474 = vrot.slane %v1414, %v1473
        %v1475 = vsel %vm1465, %v1474, %v1470
        %v1476 = vlaneseq
        %v1477 = vshrl.u32 %v1476, 7
        %v1478 = vsub.s32 %v1455, %v1477
        %v1479 = vrot.slane %v1416, %v1478
        %v1480 = vlaneseq
        %v1481 = vshrl.u32 %v1480, 7
        %v1482 = vsub.s32 %v1460, %v1481
        %v1483 = vrot.slane %v1418, %v1482
        %v1484 = vsel %vm1465, %v1483, %v1479
        %v1485 = vlaneseq
        %v1486 = vshrl.u32 %v1485, 7
        %v1487 = vsub.s32 %v1455, %v1486
        %v1488 = vrot.slane %v1420, %v1487
        %v1489 = vlaneseq
        %v1490 = vshrl.u32 %v1489, 7
        %v1491 = vsub.s32 %v1460, %v1490
        %v1492 = vrot.slane %v1422, %v1491
        %v1493 = vsel %vm1465, %v1492, %v1488
        %v1494 = vlaneseq
        %v1495 = vshrl.u32 %v1494, 7
        %v1496 = vsub.s32 %v1455, %v1495
        %v1497 = vrot.slane %v1424, %v1496
        %v1498 = vlaneseq
        %v1499 = vshrl.u32 %v1498, 7
        %v1500 = vsub.s32 %v1460, %v1499
        %v1501 = vrot.slane %v1426, %v1500
        %v1502 = vsel %vm1465, %v1501, %v1497
        %v1503 = vlaneseq
        %v1504 = vshrl.u32 %v1503, 7
        %v1505 = vsub.s32 %v1455, %v1504
        %v1506 = vrot.slane %v1428, %v1505
        %v1507 = vlaneseq
        %v1508 = vshrl.u32 %v1507, 7
        %v1509 = vsub.s32 %v1460, %v1508
        %v1510 = vrot.slane %v1430, %v1509
        %v1511 = vsel %vm1465, %v1510, %v1506
        %v1512 = vlaneseq
        %v1513 = vshrl.u32 %v1512, 7
        %v1514 = vsub.s32 %v1455, %v1513
        %v1515 = vrot.slane %v1432, %v1514
        %v1516 = vlaneseq
        %v1517 = vshrl.u32 %v1516, 7
        %v1518 = vsub.s32 %v1460, %v1517
        %v1519 = vrot.slane %v1434, %v1518
        %v1520 = vsel %vm1465, %v1519, %v1515
        %v1521 = vlaneseq
        %v1522 = vshrl.u32 %v1521, 7
        %v1523 = vsub.s32 %v1455, %v1522
        %v1524 = vrot.slane %v1436, %v1523
        %v1525 = vlaneseq
        %v1526 = vshrl.u32 %v1525, 7
        %v1527 = vsub.s32 %v1460, %v1526
        %v1528 = vrot.slane %v1438, %v1527
        %v1529 = vsel %vm1465, %v1528, %v1524
        %v1530 = vsel %vm605, %v1475, %v1466
        %v1531 = vsel %vm607, %v1484, %v1530
        %v1532 = vsel %vm609, %v1493, %v1531
        %v1533 = vsel %vm611, %v1502, %v1532
        %v1534 = vsel %vm613, %v1511, %v1533
        %v1535 = vsel %vm615, %v1520, %v1534
        %v1536 = vsel %vm617, %v1529, %v1535
        %vm1538 = vcmask 261248
        %1539 = vst.msk [vmem:[%s375] sm:$0xff] %vm1538, %v1536
        %v1540 = vld [vmem:[%s327] sm:$0xff]
        %v1541 = vlaneseq
        %v1542 = vshrl.u32 %v1541, 7
        %v1543 = vsub.s32 0, %v1542
        %v1544 = vrot.slane %v1540, %v1543
        %s1546 = sor.u32 256, 32
        %1547 = vbcast.lane.b32.xlu0 %v1544, %s1546
        %v1548 = vpop.permute.xlu0 %1547
        %s1550 = sor.u32 256, 40
        %1551 = vbcast.lane.b32.xlu0 %v1544, %s1550
        %v1552 = vpop.permute.xlu0 %1551
        %v1553 = vlaneseq
        %v1554 = vshrl.u32 %v1553, 7
        %v1555 = vsub.s32 1, %v1554
        %v1556 = vrot.slane %v1540, %v1555
        %s1558 = sor.u32 256, 32
        %1559 = vbcast.lane.b32.xlu0 %v1556, %s1558
        %v1560 = vpop.permute.xlu0 %1559
        %s1562 = sor.u32 256, 40
        %1563 = vbcast.lane.b32.xlu0 %v1556, %s1562
        %v1564 = vpop.permute.xlu0 %1563
        %v1565 = vlaneseq
        %v1566 = vshrl.u32 %v1565, 7
        %v1567 = vsub.s32 2, %v1566
        %v1568 = vrot.slane %v1540, %v1567
        %s1570 = sor.u32 256, 32
        %1571 = vbcast.lane.b32.xlu0 %v1568, %s1570
        %v1572 = vpop.permute.xlu0 %1571
        %s1574 = sor.u32 256, 40
        %1575 = vbcast.lane.b32.xlu0 %v1568, %s1574
        %v1576 = vpop.permute.xlu0 %1575
        %v1577 = vlaneseq
        %v1578 = vshrl.u32 %v1577, 7
        %v1579 = vsub.s32 3, %v1578
        %v1580 = vrot.slane %v1540, %v1579
        %s1582 = sor.u32 256, 32
        %1583 = vbcast.lane.b32.xlu0 %v1580, %s1582
        %v1584 = vpop.permute.xlu0 %1583
        %s1586 = sor.u32 256, 40
        %1587 = vbcast.lane.b32.xlu0 %v1580, %s1586
        %v1588 = vpop.permute.xlu0 %1587
        %v1589 = vlaneseq
        %v1590 = vshrl.u32 %v1589, 7
        %v1591 = vsub.s32 4, %v1590
        %v1592 = vrot.slane %v1540, %v1591
        %s1594 = sor.u32 256, 32
        %1595 = vbcast.lane.b32.xlu0 %v1592, %s1594
        %v1596 = vpop.permute.xlu0 %1595
        %s1598 = sor.u32 256, 40
        %1599 = vbcast.lane.b32.xlu0 %v1592, %s1598
        %v1600 = vpop.permute.xlu0 %1599
        %v1601 = vlaneseq
        %v1602 = vshrl.u32 %v1601, 7
        %v1603 = vsub.s32 5, %v1602
        %v1604 = vrot.slane %v1540, %v1603
        %s1606 = sor.u32 256, 32
        %1607 = vbcast.lane.b32.xlu0 %v1604, %s1606
        %v1608 = vpop.permute.xlu0 %1607
        %s1610 = sor.u32 256, 40
        %1611 = vbcast.lane.b32.xlu0 %v1604, %s1610
        %v1612 = vpop.permute.xlu0 %1611
        %v1613 = vlaneseq
        %v1614 = vshrl.u32 %v1613, 7
        %v1615 = vsub.s32 6, %v1614
        %v1616 = vrot.slane %v1540, %v1615
        %s1618 = sor.u32 256, 32
        %1619 = vbcast.lane.b32.xlu0 %v1616, %s1618
        %v1620 = vpop.permute.xlu0 %1619
        %s1622 = sor.u32 256, 40
        %1623 = vbcast.lane.b32.xlu0 %v1616, %s1622
        %v1624 = vpop.permute.xlu0 %1623
        %v1625 = vlaneseq
        %v1626 = vshrl.u32 %v1625, 7
        %v1627 = vsub.s32 7, %v1626
        %v1628 = vrot.slane %v1540, %v1627
        %s1630 = sor.u32 256, 32
        %1631 = vbcast.lane.b32.xlu0 %v1628, %s1630
        %v1632 = vpop.permute.xlu0 %1631
        %s1634 = sor.u32 256, 40
        %1635 = vbcast.lane.b32.xlu0 %v1628, %s1634
        %v1636 = vpop.permute.xlu0 %1635
        %vm1637 = vcmp.eq.s32.totalorder %v1548, %v388
        %vm1638 = vcmp.eq.s32.totalorder %v1552, %v388
        %vm1639 = vcmp.eq.s32.totalorder %v1560, %v388
        %vm1640 = vcmp.eq.s32.totalorder %v1564, %v388
        %vm1641 = vcmp.eq.s32.totalorder %v1572, %v388
        %vm1642 = vcmp.eq.s32.totalorder %v1576, %v388
        %vm1643 = vcmp.eq.s32.totalorder %v1584, %v388
        %vm1644 = vcmp.eq.s32.totalorder %v1588, %v388
        %vm1645 = vcmp.eq.s32.totalorder %v1596, %v388
        %vm1646 = vcmp.eq.s32.totalorder %v1600, %v388
        %vm1647 = vcmp.eq.s32.totalorder %v1608, %v388
        %vm1648 = vcmp.eq.s32.totalorder %v1612, %v388
        %vm1649 = vcmp.eq.s32.totalorder %v1620, %v388
        %vm1650 = vcmp.eq.s32.totalorder %v1624, %v388
        %vm1651 = vcmp.eq.s32.totalorder %v1632, %v388
        %vm1652 = vcmp.eq.s32.totalorder %v1636, %v388
        %v1653 = vsel %vm1637, %v1093, 0.0
        %v1654 = vsel %vm1638, %v1093, 0.0
        %v1655 = vsel %vm1639, %v1097, 0.0
        %v1656 = vsel %vm1640, %v1097, 0.0
        %v1657 = vsel %vm1641, %v1101, 0.0
        %v1658 = vsel %vm1642, %v1101, 0.0
        %v1659 = vsel %vm1643, %v1105, 0.0
        %v1660 = vsel %vm1644, %v1105, 0.0
        %v1661 = vsel %vm1645, %v1109, 0.0
        %v1662 = vsel %vm1646, %v1109, 0.0
        %v1663 = vsel %vm1647, %v1113, 0.0
        %v1664 = vsel %vm1648, %v1113, 0.0
        %v1665 = vsel %vm1649, %v1117, 0.0
        %v1666 = vsel %vm1650, %v1117, 0.0
        %v1667 = vsel %vm1651, %v1121, 0.0
        %v1668 = vsel %vm1652, %v1121, 0.0
        %1669 = vadd.xlane.f32.xlu0 %v1653
        %v1670 = vpop.xlane.xlu0 %1669
        %1671 = vadd.xlane.f32.xlu0 %v1654
        %v1672 = vpop.xlane.xlu0 %1671
        %1673 = vadd.xlane.f32.xlu0 %v1655
        %v1674 = vpop.xlane.xlu0 %1673
        %1675 = vadd.xlane.f32.xlu0 %v1656
        %v1676 = vpop.xlane.xlu0 %1675
        %1677 = vadd.xlane.f32.xlu0 %v1657
        %v1678 = vpop.xlane.xlu0 %1677
        %1679 = vadd.xlane.f32.xlu0 %v1658
        %v1680 = vpop.xlane.xlu0 %1679
        %1681 = vadd.xlane.f32.xlu0 %v1659
        %v1682 = vpop.xlane.xlu0 %1681
        %1683 = vadd.xlane.f32.xlu0 %v1660
        %v1684 = vpop.xlane.xlu0 %1683
        %1685 = vadd.xlane.f32.xlu0 %v1661
        %v1686 = vpop.xlane.xlu0 %1685
        %1687 = vadd.xlane.f32.xlu0 %v1662
        %v1688 = vpop.xlane.xlu0 %1687
        %1689 = vadd.xlane.f32.xlu0 %v1663
        %v1690 = vpop.xlane.xlu0 %1689
        %1691 = vadd.xlane.f32.xlu0 %v1664
        %v1692 = vpop.xlane.xlu0 %1691
        %1693 = vadd.xlane.f32.xlu0 %v1665
        %v1694 = vpop.xlane.xlu0 %1693
        %1695 = vadd.xlane.f32.xlu0 %v1666
        %v1696 = vpop.xlane.xlu0 %1695
        %1697 = vadd.xlane.f32.xlu0 %v1667
        %v1698 = vpop.xlane.xlu0 %1697
        %1699 = vadd.xlane.f32.xlu0 %v1668
        %v1700 = vpop.xlane.xlu0 %1699
        %v1717 = vadd.s32 %v388, 4294967264
        %v1718 = vlaneseq
        %v1719 = vshrl.u32 %v1718, 7
        %v1720 = vsub.s32 %v1717, %v1719
        %v1721 = vrot.slane %v1670, %v1720
        %v1722 = vadd.s32 %v388, 4294967256
        %v1723 = vlaneseq
        %v1724 = vshrl.u32 %v1723, 7
        %v1725 = vsub.s32 %v1722, %v1724
        %v1726 = vrot.slane %v1672, %v1725
        %vm1727 = vcmask 392512
        %v1728 = vsel %vm1727, %v1726, %v1721
        %v1729 = vlaneseq
        %v1730 = vshrl.u32 %v1729, 7
        %v1731 = vsub.s32 %v1717, %v1730
        %v1732 = vrot.slane %v1674, %v1731
        %v1733 = vlaneseq
        %v1734 = vshrl.u32 %v1733, 7
        %v1735 = vsub.s32 %v1722, %v1734
        %v1736 = vrot.slane %v1676, %v1735
        %v1737 = vsel %vm1727, %v1736, %v1732
        %v1738 = vlaneseq
        %v1739 = vshrl.u32 %v1738, 7
        %v1740 = vsub.s32 %v1717, %v1739
        %v1741 = vrot.slane %v1678, %v1740
        %v1742 = vlaneseq
        %v1743 = vshrl.u32 %v1742, 7
        %v1744 = vsub.s32 %v1722, %v1743
        %v1745 = vrot.slane %v1680, %v1744
        %v1746 = vsel %vm1727, %v1745, %v1741
        %v1747 = vlaneseq
        %v1748 = vshrl.u32 %v1747, 7
        %v1749 = vsub.s32 %v1717, %v1748
        %v1750 = vrot.slane %v1682, %v1749
        %v1751 = vlaneseq
        %v1752 = vshrl.u32 %v1751, 7
        %v1753 = vsub.s32 %v1722, %v1752
        %v1754 = vrot.slane %v1684, %v1753
        %v1755 = vsel %vm1727, %v1754, %v1750
        %v1756 = vlaneseq
        %v1757 = vshrl.u32 %v1756, 7
        %v1758 = vsub.s32 %v1717, %v1757
        %v1759 = vrot.slane %v1686, %v1758
        %v1760 = vlaneseq
        %v1761 = vshrl.u32 %v1760, 7
        %v1762 = vsub.s32 %v1722, %v1761
        %v1763 = vrot.slane %v1688, %v1762
        %v1764 = vsel %vm1727, %v1763, %v1759
        %v1765 = vlaneseq
        %v1766 = vshrl.u32 %v1765, 7
        %v1767 = vsub.s32 %v1717, %v1766
        %v1768 = vrot.slane %v1690, %v1767
        %v1769 = vlaneseq
        %v1770 = vshrl.u32 %v1769, 7
        %v1771 = vsub.s32 %v1722, %v1770
        %v1772 = vrot.slane %v1692, %v1771
        %v1773 = vsel %vm1727, %v1772, %v1768
        %v1774 = vlaneseq
        %v1775 = vshrl.u32 %v1774, 7
        %v1776 = vsub.s32 %v1717, %v1775
        %v1777 = vrot.slane %v1694, %v1776
        %v1778 = vlaneseq
        %v1779 = vshrl.u32 %v1778, 7
        %v1780 = vsub.s32 %v1722, %v1779
        %v1781 = vrot.slane %v1696, %v1780
        %v1782 = vsel %vm1727, %v1781, %v1777
        %v1783 = vlaneseq
        %v1784 = vshrl.u32 %v1783, 7
        %v1785 = vsub.s32 %v1717, %v1784
        %v1786 = vrot.slane %v1698, %v1785
        %v1787 = vlaneseq
        %v1788 = vshrl.u32 %v1787, 7
        %v1789 = vsub.s32 %v1722, %v1788
        %v1790 = vrot.slane %v1700, %v1789
        %v1791 = vsel %vm1727, %v1790, %v1786
        %v1792 = vsel %vm605, %v1737, %v1728
        %v1793 = vsel %vm607, %v1746, %v1792
        %v1794 = vsel %vm609, %v1755, %v1793
        %v1795 = vsel %vm611, %v1764, %v1794
        %v1796 = vsel %vm613, %v1773, %v1795
        %v1797 = vsel %vm615, %v1782, %v1796
        %v1798 = vsel %vm617, %v1791, %v1797
        %vm1800 = vcmask 392448
        %1801 = vst.msk [vmem:[%s375] sm:$0xff] %vm1800, %v1798
        %v1802 = vld [vmem:[%s327] sm:$0xff]
        %v1803 = vlaneseq
        %v1804 = vshrl.u32 %v1803, 7
        %v1805 = vsub.s32 0, %v1804
        %v1806 = vrot.slane %v1802, %v1805
        %s1808 = sor.u32 256, 48
        %1809 = vbcast.lane.b32.xlu0 %v1806, %s1808
        %v1810 = vpop.permute.xlu0 %1809
        %s1812 = sor.u32 256, 56
        %1813 = vbcast.lane.b32.xlu0 %v1806, %s1812
        %v1814 = vpop.permute.xlu0 %1813
        %v1815 = vlaneseq
        %v1816 = vshrl.u32 %v1815, 7
        %v1817 = vsub.s32 1, %v1816
        %v1818 = vrot.slane %v1802, %v1817
        %s1820 = sor.u32 256, 48
        %1821 = vbcast.lane.b32.xlu0 %v1818, %s1820
        %v1822 = vpop.permute.xlu0 %1821
        %s1824 = sor.u32 256, 56
        %1825 = vbcast.lane.b32.xlu0 %v1818, %s1824
        %v1826 = vpop.permute.xlu0 %1825
        %v1827 = vlaneseq
        %v1828 = vshrl.u32 %v1827, 7
        %v1829 = vsub.s32 2, %v1828
        %v1830 = vrot.slane %v1802, %v1829
        %s1832 = sor.u32 256, 48
        %1833 = vbcast.lane.b32.xlu0 %v1830, %s1832
        %v1834 = vpop.permute.xlu0 %1833
        %s1836 = sor.u32 256, 56
        %1837 = vbcast.lane.b32.xlu0 %v1830, %s1836
        %v1838 = vpop.permute.xlu0 %1837
        %v1839 = vlaneseq
        %v1840 = vshrl.u32 %v1839, 7
        %v1841 = vsub.s32 3, %v1840
        %v1842 = vrot.slane %v1802, %v1841
        %s1844 = sor.u32 256, 48
        %1845 = vbcast.lane.b32.xlu0 %v1842, %s1844
        %v1846 = vpop.permute.xlu0 %1845
        %s1848 = sor.u32 256, 56
        %1849 = vbcast.lane.b32.xlu0 %v1842, %s1848
        %v1850 = vpop.permute.xlu0 %1849
        %v1851 = vlaneseq
        %v1852 = vshrl.u32 %v1851, 7
        %v1853 = vsub.s32 4, %v1852
        %v1854 = vrot.slane %v1802, %v1853
        %s1856 = sor.u32 256, 48
        %1857 = vbcast.lane.b32.xlu0 %v1854, %s1856
        %v1858 = vpop.permute.xlu0 %1857
        %s1860 = sor.u32 256, 56
        %1861 = vbcast.lane.b32.xlu0 %v1854, %s1860
        %v1862 = vpop.permute.xlu0 %1861
        %v1863 = vlaneseq
        %v1864 = vshrl.u32 %v1863, 7
        %v1865 = vsub.s32 5, %v1864
        %v1866 = vrot.slane %v1802, %v1865
        %s1868 = sor.u32 256, 48
        %1869 = vbcast.lane.b32.xlu0 %v1866, %s1868
        %v1870 = vpop.permute.xlu0 %1869
        %s1872 = sor.u32 256, 56
        %1873 = vbcast.lane.b32.xlu0 %v1866, %s1872
        %v1874 = vpop.permute.xlu0 %1873
        %v1875 = vlaneseq
        %v1876 = vshrl.u32 %v1875, 7
        %v1877 = vsub.s32 6, %v1876
        %v1878 = vrot.slane %v1802, %v1877
        %s1880 = sor.u32 256, 48
        %1881 = vbcast.lane.b32.xlu0 %v1878, %s1880
        %v1882 = vpop.permute.xlu0 %1881
        %s1884 = sor.u32 256, 56
        %1885 = vbcast.lane.b32.xlu0 %v1878, %s1884
        %v1886 = vpop.permute.xlu0 %1885
        %v1887 = vlaneseq
        %v1888 = vshrl.u32 %v1887, 7
        %v1889 = vsub.s32 7, %v1888
        %v1890 = vrot.slane %v1802, %v1889
        %s1892 = sor.u32 256, 48
        %1893 = vbcast.lane.b32.xlu0 %v1890, %s1892
        %v1894 = vpop.permute.xlu0 %1893
        %s1896 = sor.u32 256, 56
        %1897 = vbcast.lane.b32.xlu0 %v1890, %s1896
        %v1898 = vpop.permute.xlu0 %1897
        %vm1899 = vcmp.eq.s32.totalorder %v1810, %v388
        %vm1900 = vcmp.eq.s32.totalorder %v1814, %v388
        %vm1901 = vcmp.eq.s32.totalorder %v1822, %v388
        %vm1902 = vcmp.eq.s32.totalorder %v1826, %v388
        %vm1903 = vcmp.eq.s32.totalorder %v1834, %v388
        %vm1904 = vcmp.eq.s32.totalorder %v1838, %v388
        %vm1905 = vcmp.eq.s32.totalorder %v1846, %v388
        %vm1906 = vcmp.eq.s32.totalorder %v1850, %v388
        %vm1907 = vcmp.eq.s32.totalorder %v1858, %v388
        %vm1908 = vcmp.eq.s32.totalorder %v1862, %v388
        %vm1909 = vcmp.eq.s32.totalorder %v1870, %v388
        %vm1910 = vcmp.eq.s32.totalorder %v1874, %v388
        %vm1911 = vcmp.eq.s32.totalorder %v1882, %v388
        %vm1912 = vcmp.eq.s32.totalorder %v1886, %v388
        %vm1913 = vcmp.eq.s32.totalorder %v1894, %v388
        %vm1914 = vcmp.eq.s32.totalorder %v1898, %v388
        %v1915 = vsel %vm1899, %v1093, 0.0
        %v1916 = vsel %vm1900, %v1093, 0.0
        %v1917 = vsel %vm1901, %v1097, 0.0
        %v1918 = vsel %vm1902, %v1097, 0.0
        %v1919 = vsel %vm1903, %v1101, 0.0
        %v1920 = vsel %vm1904, %v1101, 0.0
        %v1921 = vsel %vm1905, %v1105, 0.0
        %v1922 = vsel %vm1906, %v1105, 0.0
        %v1923 = vsel %vm1907, %v1109, 0.0
        %v1924 = vsel %vm1908, %v1109, 0.0
        %v1925 = vsel %vm1909, %v1113, 0.0
        %v1926 = vsel %vm1910, %v1113, 0.0
        %v1927 = vsel %vm1911, %v1117, 0.0
        %v1928 = vsel %vm1912, %v1117, 0.0
        %v1929 = vsel %vm1913, %v1121, 0.0
        %v1930 = vsel %vm1914, %v1121, 0.0
        %1931 = vadd.xlane.f32.xlu0 %v1915
        %v1932 = vpop.xlane.xlu0 %1931
        %1933 = vadd.xlane.f32.xlu0 %v1916
        %v1934 = vpop.xlane.xlu0 %1933
        %1935 = vadd.xlane.f32.xlu0 %v1917
        %v1936 = vpop.xlane.xlu0 %1935
        %1937 = vadd.xlane.f32.xlu0 %v1918
        %v1938 = vpop.xlane.xlu0 %1937
        %1939 = vadd.xlane.f32.xlu0 %v1919
        %v1940 = vpop.xlane.xlu0 %1939
        %1941 = vadd.xlane.f32.xlu0 %v1920
        %v1942 = vpop.xlane.xlu0 %1941
        %1943 = vadd.xlane.f32.xlu0 %v1921
        %v1944 = vpop.xlane.xlu0 %1943
        %1945 = vadd.xlane.f32.xlu0 %v1922
        %v1946 = vpop.xlane.xlu0 %1945
        %1947 = vadd.xlane.f32.xlu0 %v1923
        %v1948 = vpop.xlane.xlu0 %1947
        %1949 = vadd.xlane.f32.xlu0 %v1924
        %v1950 = vpop.xlane.xlu0 %1949
        %1951 = vadd.xlane.f32.xlu0 %v1925
        %v1952 = vpop.xlane.xlu0 %1951
        %1953 = vadd.xlane.f32.xlu0 %v1926
        %v1954 = vpop.xlane.xlu0 %1953
        %1955 = vadd.xlane.f32.xlu0 %v1927
        %v1956 = vpop.xlane.xlu0 %1955
        %1957 = vadd.xlane.f32.xlu0 %v1928
        %v1958 = vpop.xlane.xlu0 %1957
        %1959 = vadd.xlane.f32.xlu0 %v1929
        %v1960 = vpop.xlane.xlu0 %1959
        %1961 = vadd.xlane.f32.xlu0 %v1930
        %v1962 = vpop.xlane.xlu0 %1961
        %v1979 = vadd.s32 %v388, 4294967248
        %v1980 = vlaneseq
        %v1981 = vshrl.u32 %v1980, 7
        %v1982 = vsub.s32 %v1979, %v1981
        %v1983 = vrot.slane %v1932, %v1982
        %v1984 = vadd.s32 %v388, 4294967240
        %v1985 = vlaneseq
        %v1986 = vshrl.u32 %v1985, 7
        %v1987 = vsub.s32 %v1984, %v1986
        %v1988 = vrot.slane %v1934, %v1987
        %vm1989 = vcmask 523712
        %v1990 = vsel %vm1989, %v1988, %v1983
        %v1991 = vlaneseq
        %v1992 = vshrl.u32 %v1991, 7
        %v1993 = vsub.s32 %v1979, %v1992
        %v1994 = vrot.slane %v1936, %v1993
        %v1995 = vlaneseq
        %v1996 = vshrl.u32 %v1995, 7
        %v1997 = vsub.s32 %v1984, %v1996
        %v1998 = vrot.slane %v1938, %v1997
        %v1999 = vsel %vm1989, %v1998, %v1994
        %v2000 = vlaneseq
        %v2001 = vshrl.u32 %v2000, 7
        %v2002 = vsub.s32 %v1979, %v2001
        %v2003 = vrot.slane %v1940, %v2002
        %v2004 = vlaneseq
        %v2005 = vshrl.u32 %v2004, 7
        %v2006 = vsub.s32 %v1984, %v2005
        %v2007 = vrot.slane %v1942, %v2006
        %v2008 = vsel %vm1989, %v2007, %v2003
        %v2009 = vlaneseq
        %v2010 = vshrl.u32 %v2009, 7
        %v2011 = vsub.s32 %v1979, %v2010
        %v2012 = vrot.slane %v1944, %v2011
        %v2013 = vlaneseq
        %v2014 = vshrl.u32 %v2013, 7
        %v2015 = vsub.s32 %v1984, %v2014
        %v2016 = vrot.slane %v1946, %v2015
        %v2017 = vsel %vm1989, %v2016, %v2012
        %v2018 = vlaneseq
        %v2019 = vshrl.u32 %v2018, 7
        %v2020 = vsub.s32 %v1979, %v2019
        %v2021 = vrot.slane %v1948, %v2020
        %v2022 = vlaneseq
        %v2023 = vshrl.u32 %v2022, 7
        %v2024 = vsub.s32 %v1984, %v2023
        %v2025 = vrot.slane %v1950, %v2024
        %v2026 = vsel %vm1989, %v2025, %v2021
        %v2027 = vlaneseq
        %v2028 = vshrl.u32 %v2027, 7
        %v2029 = vsub.s32 %v1979, %v2028
        %v2030 = vrot.slane %v1952, %v2029
        %v2031 = vlaneseq
        %v2032 = vshrl.u32 %v2031, 7
        %v2033 = vsub.s32 %v1984, %v2032
        %v2034 = vrot.slane %v1954, %v2033
        %v2035 = vsel %vm1989, %v2034, %v2030
        %v2036 = vlaneseq
        %v2037 = vshrl.u32 %v2036, 7
        %v2038 = vsub.s32 %v1979, %v2037
        %v2039 = vrot.slane %v1956, %v2038
        %v2040 = vlaneseq
        %v2041 = vshrl.u32 %v2040, 7
        %v2042 = vsub.s32 %v1984, %v2041
        %v2043 = vrot.slane %v1958, %v2042
        %v2044 = vsel %vm1989, %v2043, %v2039
        %v2045 = vlaneseq
        %v2046 = vshrl.u32 %v2045, 7
        %v2047 = vsub.s32 %v1979, %v2046
        %v2048 = vrot.slane %v1960, %v2047
        %v2049 = vlaneseq
        %v2050 = vshrl.u32 %v2049, 7
        %v2051 = vsub.s32 %v1984, %v2050
        %v2052 = vrot.slane %v1962, %v2051
        %v2053 = vsel %vm1989, %v2052, %v2048
        %v2054 = vsel %vm605, %v1999, %v1990
        %v2055 = vsel %vm607, %v2008, %v2054
        %v2056 = vsel %vm609, %v2017, %v2055
        %v2057 = vsel %vm611, %v2026, %v2056
        %v2058 = vsel %vm613, %v2035, %v2057
        %v2059 = vsel %vm615, %v2044, %v2058
        %v2060 = vsel %vm617, %v2053, %v2059
        %vm2062 = vcmask 523648
        %2063 = vst.msk [vmem:[%s375] sm:$0xff] %vm2062, %v2060
        %v2064 = vld [vmem:[%s327] sm:$0xff]
        %v2065 = vlaneseq
        %v2066 = vshrl.u32 %v2065, 7
        %v2067 = vsub.s32 0, %v2066
        %v2068 = vrot.slane %v2064, %v2067
        %s2070 = sor.u32 256, 64
        %2071 = vbcast.lane.b32.xlu0 %v2068, %s2070
        %v2072 = vpop.permute.xlu0 %2071
        %s2074 = sor.u32 256, 72
        %2075 = vbcast.lane.b32.xlu0 %v2068, %s2074
        %v2076 = vpop.permute.xlu0 %2075
        %v2077 = vlaneseq
        %v2078 = vshrl.u32 %v2077, 7
        %v2079 = vsub.s32 1, %v2078
        %v2080 = vrot.slane %v2064, %v2079
        %s2082 = sor.u32 256, 64
        %2083 = vbcast.lane.b32.xlu0 %v2080, %s2082
        %v2084 = vpop.permute.xlu0 %2083
        %s2086 = sor.u32 256, 72
        %2087 = vbcast.lane.b32.xlu0 %v2080, %s2086
        %v2088 = vpop.permute.xlu0 %2087
        %v2089 = vlaneseq
        %v2090 = vshrl.u32 %v2089, 7
        %v2091 = vsub.s32 2, %v2090
        %v2092 = vrot.slane %v2064, %v2091
        %s2094 = sor.u32 256, 64
        %2095 = vbcast.lane.b32.xlu0 %v2092, %s2094
        %v2096 = vpop.permute.xlu0 %2095
        %s2098 = sor.u32 256, 72
        %2099 = vbcast.lane.b32.xlu0 %v2092, %s2098
        %v2100 = vpop.permute.xlu0 %2099
        %v2101 = vlaneseq
        %v2102 = vshrl.u32 %v2101, 7
        %v2103 = vsub.s32 3, %v2102
        %v2104 = vrot.slane %v2064, %v2103
        %s2106 = sor.u32 256, 64
        %2107 = vbcast.lane.b32.xlu0 %v2104, %s2106
        %v2108 = vpop.permute.xlu0 %2107
        %s2110 = sor.u32 256, 72
        %2111 = vbcast.lane.b32.xlu0 %v2104, %s2110
        %v2112 = vpop.permute.xlu0 %2111
        %v2113 = vlaneseq
        %v2114 = vshrl.u32 %v2113, 7
        %v2115 = vsub.s32 4, %v2114
        %v2116 = vrot.slane %v2064, %v2115
        %s2118 = sor.u32 256, 64
        %2119 = vbcast.lane.b32.xlu0 %v2116, %s2118
        %v2120 = vpop.permute.xlu0 %2119
        %s2122 = sor.u32 256, 72
        %2123 = vbcast.lane.b32.xlu0 %v2116, %s2122
        %v2124 = vpop.permute.xlu0 %2123
        %v2125 = vlaneseq
        %v2126 = vshrl.u32 %v2125, 7
        %v2127 = vsub.s32 5, %v2126
        %v2128 = vrot.slane %v2064, %v2127
        %s2130 = sor.u32 256, 64
        %2131 = vbcast.lane.b32.xlu0 %v2128, %s2130
        %v2132 = vpop.permute.xlu0 %2131
        %s2134 = sor.u32 256, 72
        %2135 = vbcast.lane.b32.xlu0 %v2128, %s2134
        %v2136 = vpop.permute.xlu0 %2135
        %v2137 = vlaneseq
        %v2138 = vshrl.u32 %v2137, 7
        %v2139 = vsub.s32 6, %v2138
        %v2140 = vrot.slane %v2064, %v2139
        %s2142 = sor.u32 256, 64
        %2143 = vbcast.lane.b32.xlu0 %v2140, %s2142
        %v2144 = vpop.permute.xlu0 %2143
        %s2146 = sor.u32 256, 72
        %2147 = vbcast.lane.b32.xlu0 %v2140, %s2146
        %v2148 = vpop.permute.xlu0 %2147
        %v2149 = vlaneseq
        %v2150 = vshrl.u32 %v2149, 7
        %v2151 = vsub.s32 7, %v2150
        %v2152 = vrot.slane %v2064, %v2151
        %s2154 = sor.u32 256, 64
        %2155 = vbcast.lane.b32.xlu0 %v2152, %s2154
        %v2156 = vpop.permute.xlu0 %2155
        %s2158 = sor.u32 256, 72
        %2159 = vbcast.lane.b32.xlu0 %v2152, %s2158
        %v2160 = vpop.permute.xlu0 %2159
        %vm2161 = vcmp.eq.s32.totalorder %v2072, %v388
        %vm2162 = vcmp.eq.s32.totalorder %v2076, %v388
        %vm2163 = vcmp.eq.s32.totalorder %v2084, %v388
        %vm2164 = vcmp.eq.s32.totalorder %v2088, %v388
        %vm2165 = vcmp.eq.s32.totalorder %v2096, %v388
        %vm2166 = vcmp.eq.s32.totalorder %v2100, %v388
        %vm2167 = vcmp.eq.s32.totalorder %v2108, %v388
        %vm2168 = vcmp.eq.s32.totalorder %v2112, %v388
        %vm2169 = vcmp.eq.s32.totalorder %v2120, %v388
        %vm2170 = vcmp.eq.s32.totalorder %v2124, %v388
        %vm2171 = vcmp.eq.s32.totalorder %v2132, %v388
        %vm2172 = vcmp.eq.s32.totalorder %v2136, %v388
        %vm2173 = vcmp.eq.s32.totalorder %v2144, %v388
        %vm2174 = vcmp.eq.s32.totalorder %v2148, %v388
        %vm2175 = vcmp.eq.s32.totalorder %v2156, %v388
        %vm2176 = vcmp.eq.s32.totalorder %v2160, %v388
        %v2177 = vsel %vm2161, %v1093, 0.0
        %v2178 = vsel %vm2162, %v1093, 0.0
        %v2179 = vsel %vm2163, %v1097, 0.0
        %v2180 = vsel %vm2164, %v1097, 0.0
        %v2181 = vsel %vm2165, %v1101, 0.0
        %v2182 = vsel %vm2166, %v1101, 0.0
        %v2183 = vsel %vm2167, %v1105, 0.0
        %v2184 = vsel %vm2168, %v1105, 0.0
        %v2185 = vsel %vm2169, %v1109, 0.0
        %v2186 = vsel %vm2170, %v1109, 0.0
        %v2187 = vsel %vm2171, %v1113, 0.0
        %v2188 = vsel %vm2172, %v1113, 0.0
        %v2189 = vsel %vm2173, %v1117, 0.0
        %v2190 = vsel %vm2174, %v1117, 0.0
        %v2191 = vsel %vm2175, %v1121, 0.0
        %v2192 = vsel %vm2176, %v1121, 0.0
        %2193 = vadd.xlane.f32.xlu0 %v2177
        %v2194 = vpop.xlane.xlu0 %2193
        %2195 = vadd.xlane.f32.xlu0 %v2178
        %v2196 = vpop.xlane.xlu0 %2195
        %2197 = vadd.xlane.f32.xlu0 %v2179
        %v2198 = vpop.xlane.xlu0 %2197
        %2199 = vadd.xlane.f32.xlu0 %v2180
        %v2200 = vpop.xlane.xlu0 %2199
        %2201 = vadd.xlane.f32.xlu0 %v2181
        %v2202 = vpop.xlane.xlu0 %2201
        %2203 = vadd.xlane.f32.xlu0 %v2182
        %v2204 = vpop.xlane.xlu0 %2203
        %2205 = vadd.xlane.f32.xlu0 %v2183
        %v2206 = vpop.xlane.xlu0 %2205
        %2207 = vadd.xlane.f32.xlu0 %v2184
        %v2208 = vpop.xlane.xlu0 %2207
        %2209 = vadd.xlane.f32.xlu0 %v2185
        %v2210 = vpop.xlane.xlu0 %2209
        %2211 = vadd.xlane.f32.xlu0 %v2186
        %v2212 = vpop.xlane.xlu0 %2211
        %2213 = vadd.xlane.f32.xlu0 %v2187
        %v2214 = vpop.xlane.xlu0 %2213
        %2215 = vadd.xlane.f32.xlu0 %v2188
        %v2216 = vpop.xlane.xlu0 %2215
        %2217 = vadd.xlane.f32.xlu0 %v2189
        %v2218 = vpop.xlane.xlu0 %2217
        %2219 = vadd.xlane.f32.xlu0 %v2190
        %v2220 = vpop.xlane.xlu0 %2219
        %2221 = vadd.xlane.f32.xlu0 %v2191
        %v2222 = vpop.xlane.xlu0 %2221
        %2223 = vadd.xlane.f32.xlu0 %v2192
        %v2224 = vpop.xlane.xlu0 %2223
        %v2241 = vadd.s32 %v388, 4294967232
        %v2242 = vlaneseq
        %v2243 = vshrl.u32 %v2242, 7
        %v2244 = vsub.s32 %v2241, %v2243
        %v2245 = vrot.slane %v2194, %v2244
        %v2246 = vadd.s32 %v388, 4294967224
        %v2247 = vlaneseq
        %v2248 = vshrl.u32 %v2247, 7
        %v2249 = vsub.s32 %v2246, %v2248
        %v2250 = vrot.slane %v2196, %v2249
        %vm2251 = vcmask 654912
        %v2252 = vsel %vm2251, %v2250, %v2245
        %v2253 = vlaneseq
        %v2254 = vshrl.u32 %v2253, 7
        %v2255 = vsub.s32 %v2241, %v2254
        %v2256 = vrot.slane %v2198, %v2255
        %v2257 = vlaneseq
        %v2258 = vshrl.u32 %v2257, 7
        %v2259 = vsub.s32 %v2246, %v2258
        %v2260 = vrot.slane %v2200, %v2259
        %v2261 = vsel %vm2251, %v2260, %v2256
        %v2262 = vlaneseq
        %v2263 = vshrl.u32 %v2262, 7
        %v2264 = vsub.s32 %v2241, %v2263
        %v2265 = vrot.slane %v2202, %v2264
        %v2266 = vlaneseq
        %v2267 = vshrl.u32 %v2266, 7
        %v2268 = vsub.s32 %v2246, %v2267
        %v2269 = vrot.slane %v2204, %v2268
        %v2270 = vsel %vm2251, %v2269, %v2265
        %v2271 = vlaneseq
        %v2272 = vshrl.u32 %v2271, 7
        %v2273 = vsub.s32 %v2241, %v2272
        %v2274 = vrot.slane %v2206, %v2273
        %v2275 = vlaneseq
        %v2276 = vshrl.u32 %v2275, 7
        %v2277 = vsub.s32 %v2246, %v2276
        %v2278 = vrot.slane %v2208, %v2277
        %v2279 = vsel %vm2251, %v2278, %v2274
        %v2280 = vlaneseq
        %v2281 = vshrl.u32 %v2280, 7
        %v2282 = vsub.s32 %v2241, %v2281
        %v2283 = vrot.slane %v2210, %v2282
        %v2284 = vlaneseq
        %v2285 = vshrl.u32 %v2284, 7
        %v2286 = vsub.s32 %v2246, %v2285
        %v2287 = vrot.slane %v2212, %v2286
        %v2288 = vsel %vm2251, %v2287, %v2283
        %v2289 = vlaneseq
        %v2290 = vshrl.u32 %v2289, 7
        %v2291 = vsub.s32 %v2241, %v2290
        %v2292 = vrot.slane %v2214, %v2291
        %v2293 = vlaneseq
        %v2294 = vshrl.u32 %v2293, 7
        %v2295 = vsub.s32 %v2246, %v2294
        %v2296 = vrot.slane %v2216, %v2295
        %v2297 = vsel %vm2251, %v2296, %v2292
        %v2298 = vlaneseq
        %v2299 = vshrl.u32 %v2298, 7
        %v2300 = vsub.s32 %v2241, %v2299
        %v2301 = vrot.slane %v2218, %v2300
        %v2302 = vlaneseq
        %v2303 = vshrl.u32 %v2302, 7
        %v2304 = vsub.s32 %v2246, %v2303
        %v2305 = vrot.slane %v2220, %v2304
        %v2306 = vsel %vm2251, %v2305, %v2301
        %v2307 = vlaneseq
        %v2308 = vshrl.u32 %v2307, 7
        %v2309 = vsub.s32 %v2241, %v2308
        %v2310 = vrot.slane %v2222, %v2309
        %v2311 = vlaneseq
        %v2312 = vshrl.u32 %v2311, 7
        %v2313 = vsub.s32 %v2246, %v2312
        %v2314 = vrot.slane %v2224, %v2313
        %v2315 = vsel %vm2251, %v2314, %v2310
        %v2316 = vsel %vm605, %v2261, %v2252
        %v2317 = vsel %vm607, %v2270, %v2316
        %v2318 = vsel %vm609, %v2279, %v2317
        %v2319 = vsel %vm611, %v2288, %v2318
        %v2320 = vsel %vm613, %v2297, %v2319
        %v2321 = vsel %vm615, %v2306, %v2320
        %v2322 = vsel %vm617, %v2315, %v2321
        %vm2324 = vcmask 654848
        %2325 = vst.msk [vmem:[%s375] sm:$0xff] %vm2324, %v2322
        %v2326 = vld [vmem:[%s327] sm:$0xff]
        %v2327 = vlaneseq
        %v2328 = vshrl.u32 %v2327, 7
        %v2329 = vsub.s32 0, %v2328
        %v2330 = vrot.slane %v2326, %v2329
        %s2332 = sor.u32 256, 80
        %2333 = vbcast.lane.b32.xlu0 %v2330, %s2332
        %v2334 = vpop.permute.xlu0 %2333
        %s2336 = sor.u32 256, 88
        %2337 = vbcast.lane.b32.xlu0 %v2330, %s2336
        %v2338 = vpop.permute.xlu0 %2337
        %v2339 = vlaneseq
        %v2340 = vshrl.u32 %v2339, 7
        %v2341 = vsub.s32 1, %v2340
        %v2342 = vrot.slane %v2326, %v2341
        %s2344 = sor.u32 256, 80
        %2345 = vbcast.lane.b32.xlu0 %v2342, %s2344
        %v2346 = vpop.permute.xlu0 %2345
        %s2348 = sor.u32 256, 88
        %2349 = vbcast.lane.b32.xlu0 %v2342, %s2348
        %v2350 = vpop.permute.xlu0 %2349
        %v2351 = vlaneseq
        %v2352 = vshrl.u32 %v2351, 7
        %v2353 = vsub.s32 2, %v2352
        %v2354 = vrot.slane %v2326, %v2353
        %s2356 = sor.u32 256, 80
        %2357 = vbcast.lane.b32.xlu0 %v2354, %s2356
        %v2358 = vpop.permute.xlu0 %2357
        %s2360 = sor.u32 256, 88
        %2361 = vbcast.lane.b32.xlu0 %v2354, %s2360
        %v2362 = vpop.permute.xlu0 %2361
        %v2363 = vlaneseq
        %v2364 = vshrl.u32 %v2363, 7
        %v2365 = vsub.s32 3, %v2364
        %v2366 = vrot.slane %v2326, %v2365
        %s2368 = sor.u32 256, 80
        %2369 = vbcast.lane.b32.xlu0 %v2366, %s2368
        %v2370 = vpop.permute.xlu0 %2369
        %s2372 = sor.u32 256, 88
        %2373 = vbcast.lane.b32.xlu0 %v2366, %s2372
        %v2374 = vpop.permute.xlu0 %2373
        %v2375 = vlaneseq
        %v2376 = vshrl.u32 %v2375, 7
        %v2377 = vsub.s32 4, %v2376
        %v2378 = vrot.slane %v2326, %v2377
        %s2380 = sor.u32 256, 80
        %2381 = vbcast.lane.b32.xlu0 %v2378, %s2380
        %v2382 = vpop.permute.xlu0 %2381
        %s2384 = sor.u32 256, 88
        %2385 = vbcast.lane.b32.xlu0 %v2378, %s2384
        %v2386 = vpop.permute.xlu0 %2385
        %v2387 = vlaneseq
        %v2388 = vshrl.u32 %v2387, 7
        %v2389 = vsub.s32 5, %v2388
        %v2390 = vrot.slane %v2326, %v2389
        %s2392 = sor.u32 256, 80
        %2393 = vbcast.lane.b32.xlu0 %v2390, %s2392
        %v2394 = vpop.permute.xlu0 %2393
        %s2396 = sor.u32 256, 88
        %2397 = vbcast.lane.b32.xlu0 %v2390, %s2396
        %v2398 = vpop.permute.xlu0 %2397
        %v2399 = vlaneseq
        %v2400 = vshrl.u32 %v2399, 7
        %v2401 = vsub.s32 6, %v2400
        %v2402 = vrot.slane %v2326, %v2401
        %s2404 = sor.u32 256, 80
        %2405 = vbcast.lane.b32.xlu0 %v2402, %s2404
        %v2406 = vpop.permute.xlu0 %2405
        %s2408 = sor.u32 256, 88
        %2409 = vbcast.lane.b32.xlu0 %v2402, %s2408
        %v2410 = vpop.permute.xlu0 %2409
        %v2411 = vlaneseq
        %v2412 = vshrl.u32 %v2411, 7
        %v2413 = vsub.s32 7, %v2412
        %v2414 = vrot.slane %v2326, %v2413
        %s2416 = sor.u32 256, 80
        %2417 = vbcast.lane.b32.xlu0 %v2414, %s2416
        %v2418 = vpop.permute.xlu0 %2417
        %s2420 = sor.u32 256, 88
        %2421 = vbcast.lane.b32.xlu0 %v2414, %s2420
        %v2422 = vpop.permute.xlu0 %2421
        %vm2423 = vcmp.eq.s32.totalorder %v2334, %v388
        %vm2424 = vcmp.eq.s32.totalorder %v2338, %v388
        %vm2425 = vcmp.eq.s32.totalorder %v2346, %v388
        %vm2426 = vcmp.eq.s32.totalorder %v2350, %v388
        %vm2427 = vcmp.eq.s32.totalorder %v2358, %v388
        %vm2428 = vcmp.eq.s32.totalorder %v2362, %v388
        %vm2429 = vcmp.eq.s32.totalorder %v2370, %v388
        %vm2430 = vcmp.eq.s32.totalorder %v2374, %v388
        %vm2431 = vcmp.eq.s32.totalorder %v2382, %v388
        %vm2432 = vcmp.eq.s32.totalorder %v2386, %v388
        %vm2433 = vcmp.eq.s32.totalorder %v2394, %v388
        %vm2434 = vcmp.eq.s32.totalorder %v2398, %v388
        %vm2435 = vcmp.eq.s32.totalorder %v2406, %v388
        %vm2436 = vcmp.eq.s32.totalorder %v2410, %v388
        %vm2437 = vcmp.eq.s32.totalorder %v2418, %v388
        %vm2438 = vcmp.eq.s32.totalorder %v2422, %v388
        %v2439 = vsel %vm2423, %v1093, 0.0
        %v2440 = vsel %vm2424, %v1093, 0.0
        %v2441 = vsel %vm2425, %v1097, 0.0
        %v2442 = vsel %vm2426, %v1097, 0.0
        %v2443 = vsel %vm2427, %v1101, 0.0
        %v2444 = vsel %vm2428, %v1101, 0.0
        %v2445 = vsel %vm2429, %v1105, 0.0
        %v2446 = vsel %vm2430, %v1105, 0.0
        %v2447 = vsel %vm2431, %v1109, 0.0
        %v2448 = vsel %vm2432, %v1109, 0.0
        %v2449 = vsel %vm2433, %v1113, 0.0
        %v2450 = vsel %vm2434, %v1113, 0.0
        %v2451 = vsel %vm2435, %v1117, 0.0
        %v2452 = vsel %vm2436, %v1117, 0.0
        %v2453 = vsel %vm2437, %v1121, 0.0
        %v2454 = vsel %vm2438, %v1121, 0.0
        %2455 = vadd.xlane.f32.xlu0 %v2439
        %v2456 = vpop.xlane.xlu0 %2455
        %2457 = vadd.xlane.f32.xlu0 %v2440
        %v2458 = vpop.xlane.xlu0 %2457
        %2459 = vadd.xlane.f32.xlu0 %v2441
        %v2460 = vpop.xlane.xlu0 %2459
        %2461 = vadd.xlane.f32.xlu0 %v2442
        %v2462 = vpop.xlane.xlu0 %2461
        %2463 = vadd.xlane.f32.xlu0 %v2443
        %v2464 = vpop.xlane.xlu0 %2463
        %2465 = vadd.xlane.f32.xlu0 %v2444
        %v2466 = vpop.xlane.xlu0 %2465
        %2467 = vadd.xlane.f32.xlu0 %v2445
        %v2468 = vpop.xlane.xlu0 %2467
        %2469 = vadd.xlane.f32.xlu0 %v2446
        %v2470 = vpop.xlane.xlu0 %2469
        %2471 = vadd.xlane.f32.xlu0 %v2447
        %v2472 = vpop.xlane.xlu0 %2471
        %2473 = vadd.xlane.f32.xlu0 %v2448
        %v2474 = vpop.xlane.xlu0 %2473
        %2475 = vadd.xlane.f32.xlu0 %v2449
        %v2476 = vpop.xlane.xlu0 %2475
        %2477 = vadd.xlane.f32.xlu0 %v2450
        %v2478 = vpop.xlane.xlu0 %2477
        %2479 = vadd.xlane.f32.xlu0 %v2451
        %v2480 = vpop.xlane.xlu0 %2479
        %2481 = vadd.xlane.f32.xlu0 %v2452
        %v2482 = vpop.xlane.xlu0 %2481
        %2483 = vadd.xlane.f32.xlu0 %v2453
        %v2484 = vpop.xlane.xlu0 %2483
        %2485 = vadd.xlane.f32.xlu0 %v2454
        %v2486 = vpop.xlane.xlu0 %2485
        %v2503 = vadd.s32 %v388, 4294967216
        %v2504 = vlaneseq
        %v2505 = vshrl.u32 %v2504, 7
        %v2506 = vsub.s32 %v2503, %v2505
        %v2507 = vrot.slane %v2456, %v2506
        %v2508 = vadd.s32 %v388, 4294967208
        %v2509 = vlaneseq
        %v2510 = vshrl.u32 %v2509, 7
        %v2511 = vsub.s32 %v2508, %v2510
        %v2512 = vrot.slane %v2458, %v2511
        %vm2513 = vcmask 786112
        %v2514 = vsel %vm2513, %v2512, %v2507
        %v2515 = vlaneseq
        %v2516 = vshrl.u32 %v2515, 7
        %v2517 = vsub.s32 %v2503, %v2516
        %v2518 = vrot.slane %v2460, %v2517
        %v2519 = vlaneseq
        %v2520 = vshrl.u32 %v2519, 7
        %v2521 = vsub.s32 %v2508, %v2520
        %v2522 = vrot.slane %v2462, %v2521
        %v2523 = vsel %vm2513, %v2522, %v2518
        %v2524 = vlaneseq
        %v2525 = vshrl.u32 %v2524, 7
        %v2526 = vsub.s32 %v2503, %v2525
        %v2527 = vrot.slane %v2464, %v2526
        %v2528 = vlaneseq
        %v2529 = vshrl.u32 %v2528, 7
        %v2530 = vsub.s32 %v2508, %v2529
        %v2531 = vrot.slane %v2466, %v2530
        %v2532 = vsel %vm2513, %v2531, %v2527
        %v2533 = vlaneseq
        %v2534 = vshrl.u32 %v2533, 7
        %v2535 = vsub.s32 %v2503, %v2534
        %v2536 = vrot.slane %v2468, %v2535
        %v2537 = vlaneseq
        %v2538 = vshrl.u32 %v2537, 7
        %v2539 = vsub.s32 %v2508, %v2538
        %v2540 = vrot.slane %v2470, %v2539
        %v2541 = vsel %vm2513, %v2540, %v2536
        %v2542 = vlaneseq
        %v2543 = vshrl.u32 %v2542, 7
        %v2544 = vsub.s32 %v2503, %v2543
        %v2545 = vrot.slane %v2472, %v2544
        %v2546 = vlaneseq
        %v2547 = vshrl.u32 %v2546, 7
        %v2548 = vsub.s32 %v2508, %v2547
        %v2549 = vrot.slane %v2474, %v2548
        %v2550 = vsel %vm2513, %v2549, %v2545
        %v2551 = vlaneseq
        %v2552 = vshrl.u32 %v2551, 7
        %v2553 = vsub.s32 %v2503, %v2552
        %v2554 = vrot.slane %v2476, %v2553
        %v2555 = vlaneseq
        %v2556 = vshrl.u32 %v2555, 7
        %v2557 = vsub.s32 %v2508, %v2556
        %v2558 = vrot.slane %v2478, %v2557
        %v2559 = vsel %vm2513, %v2558, %v2554
        %v2560 = vlaneseq
        %v2561 = vshrl.u32 %v2560, 7
        %v2562 = vsub.s32 %v2503, %v2561
        %v2563 = vrot.slane %v2480, %v2562
        %v2564 = vlaneseq
        %v2565 = vshrl.u32 %v2564, 7
        %v2566 = vsub.s32 %v2508, %v2565
        %v2567 = vrot.slane %v2482, %v2566
        %v2568 = vsel %vm2513, %v2567, %v2563
        %v2569 = vlaneseq
        %v2570 = vshrl.u32 %v2569, 7
        %v2571 = vsub.s32 %v2503, %v2570
        %v2572 = vrot.slane %v2484, %v2571
        %v2573 = vlaneseq
        %v2574 = vshrl.u32 %v2573, 7
        %v2575 = vsub.s32 %v2508, %v2574
        %v2576 = vrot.slane %v2486, %v2575
        %v2577 = vsel %vm2513, %v2576, %v2572
        %v2578 = vsel %vm605, %v2523, %v2514
        %v2579 = vsel %vm607, %v2532, %v2578
        %v2580 = vsel %vm609, %v2541, %v2579
        %v2581 = vsel %vm611, %v2550, %v2580
        %v2582 = vsel %vm613, %v2559, %v2581
        %v2583 = vsel %vm615, %v2568, %v2582
        %v2584 = vsel %vm617, %v2577, %v2583
        %vm2586 = vcmask 786048
        %2587 = vst.msk [vmem:[%s375] sm:$0xff] %vm2586, %v2584
        %v2588 = vld [vmem:[%s327] sm:$0xff]
        %v2589 = vlaneseq
        %v2590 = vshrl.u32 %v2589, 7
        %v2591 = vsub.s32 0, %v2590
        %v2592 = vrot.slane %v2588, %v2591
        %s2594 = sor.u32 256, 96
        %2595 = vbcast.lane.b32.xlu0 %v2592, %s2594
        %v2596 = vpop.permute.xlu0 %2595
        %s2598 = sor.u32 256, 104
        %2599 = vbcast.lane.b32.xlu0 %v2592, %s2598
        %v2600 = vpop.permute.xlu0 %2599
        %v2601 = vlaneseq
        %v2602 = vshrl.u32 %v2601, 7
        %v2603 = vsub.s32 1, %v2602
        %v2604 = vrot.slane %v2588, %v2603
        %s2606 = sor.u32 256, 96
        %2607 = vbcast.lane.b32.xlu0 %v2604, %s2606
        %v2608 = vpop.permute.xlu0 %2607
        %s2610 = sor.u32 256, 104
        %2611 = vbcast.lane.b32.xlu0 %v2604, %s2610
        %v2612 = vpop.permute.xlu0 %2611
        %v2613 = vlaneseq
        %v2614 = vshrl.u32 %v2613, 7
        %v2615 = vsub.s32 2, %v2614
        %v2616 = vrot.slane %v2588, %v2615
        %s2618 = sor.u32 256, 96
        %2619 = vbcast.lane.b32.xlu0 %v2616, %s2618
        %v2620 = vpop.permute.xlu0 %2619
        %s2622 = sor.u32 256, 104
        %2623 = vbcast.lane.b32.xlu0 %v2616, %s2622
        %v2624 = vpop.permute.xlu0 %2623
        %v2625 = vlaneseq
        %v2626 = vshrl.u32 %v2625, 7
        %v2627 = vsub.s32 3, %v2626
        %v2628 = vrot.slane %v2588, %v2627
        %s2630 = sor.u32 256, 96
        %2631 = vbcast.lane.b32.xlu0 %v2628, %s2630
        %v2632 = vpop.permute.xlu0 %2631
        %s2634 = sor.u32 256, 104
        %2635 = vbcast.lane.b32.xlu0 %v2628, %s2634
        %v2636 = vpop.permute.xlu0 %2635
        %v2637 = vlaneseq
        %v2638 = vshrl.u32 %v2637, 7
        %v2639 = vsub.s32 4, %v2638
        %v2640 = vrot.slane %v2588, %v2639
        %s2642 = sor.u32 256, 96
        %2643 = vbcast.lane.b32.xlu0 %v2640, %s2642
        %v2644 = vpop.permute.xlu0 %2643
        %s2646 = sor.u32 256, 104
        %2647 = vbcast.lane.b32.xlu0 %v2640, %s2646
        %v2648 = vpop.permute.xlu0 %2647
        %v2649 = vlaneseq
        %v2650 = vshrl.u32 %v2649, 7
        %v2651 = vsub.s32 5, %v2650
        %v2652 = vrot.slane %v2588, %v2651
        %s2654 = sor.u32 256, 96
        %2655 = vbcast.lane.b32.xlu0 %v2652, %s2654
        %v2656 = vpop.permute.xlu0 %2655
        %s2658 = sor.u32 256, 104
        %2659 = vbcast.lane.b32.xlu0 %v2652, %s2658
        %v2660 = vpop.permute.xlu0 %2659
        %v2661 = vlaneseq
        %v2662 = vshrl.u32 %v2661, 7
        %v2663 = vsub.s32 6, %v2662
        %v2664 = vrot.slane %v2588, %v2663
        %s2666 = sor.u32 256, 96
        %2667 = vbcast.lane.b32.xlu0 %v2664, %s2666
        %v2668 = vpop.permute.xlu0 %2667
        %s2670 = sor.u32 256, 104
        %2671 = vbcast.lane.b32.xlu0 %v2664, %s2670
        %v2672 = vpop.permute.xlu0 %2671
        %v2673 = vlaneseq
        %v2674 = vshrl.u32 %v2673, 7
        %v2675 = vsub.s32 7, %v2674
        %v2676 = vrot.slane %v2588, %v2675
        %s2678 = sor.u32 256, 96
        %2679 = vbcast.lane.b32.xlu0 %v2676, %s2678
        %v2680 = vpop.permute.xlu0 %2679
        %s2682 = sor.u32 256, 104
        %2683 = vbcast.lane.b32.xlu0 %v2676, %s2682
        %v2684 = vpop.permute.xlu0 %2683
        %vm2685 = vcmp.eq.s32.totalorder %v2596, %v388
        %vm2686 = vcmp.eq.s32.totalorder %v2600, %v388
        %vm2687 = vcmp.eq.s32.totalorder %v2608, %v388
        %vm2688 = vcmp.eq.s32.totalorder %v2612, %v388
        %vm2689 = vcmp.eq.s32.totalorder %v2620, %v388
        %vm2690 = vcmp.eq.s32.totalorder %v2624, %v388
        %vm2691 = vcmp.eq.s32.totalorder %v2632, %v388
        %vm2692 = vcmp.eq.s32.totalorder %v2636, %v388
        %vm2693 = vcmp.eq.s32.totalorder %v2644, %v388
        %vm2694 = vcmp.eq.s32.totalorder %v2648, %v388
        %vm2695 = vcmp.eq.s32.totalorder %v2656, %v388
        %vm2696 = vcmp.eq.s32.totalorder %v2660, %v388
        %vm2697 = vcmp.eq.s32.totalorder %v2668, %v388
        %vm2698 = vcmp.eq.s32.totalorder %v2672, %v388
        %vm2699 = vcmp.eq.s32.totalorder %v2680, %v388
        %vm2700 = vcmp.eq.s32.totalorder %v2684, %v388
        %v2701 = vsel %vm2685, %v1093, 0.0
        %v2702 = vsel %vm2686, %v1093, 0.0
        %v2703 = vsel %vm2687, %v1097, 0.0
        %v2704 = vsel %vm2688, %v1097, 0.0
        %v2705 = vsel %vm2689, %v1101, 0.0
        %v2706 = vsel %vm2690, %v1101, 0.0
        %v2707 = vsel %vm2691, %v1105, 0.0
        %v2708 = vsel %vm2692, %v1105, 0.0
        %v2709 = vsel %vm2693, %v1109, 0.0
        %v2710 = vsel %vm2694, %v1109, 0.0
        %v2711 = vsel %vm2695, %v1113, 0.0
        %v2712 = vsel %vm2696, %v1113, 0.0
        %v2713 = vsel %vm2697, %v1117, 0.0
        %v2714 = vsel %vm2698, %v1117, 0.0
        %v2715 = vsel %vm2699, %v1121, 0.0
        %v2716 = vsel %vm2700, %v1121, 0.0
        %2717 = vadd.xlane.f32.xlu0 %v2701
        %v2718 = vpop.xlane.xlu0 %2717
        %2719 = vadd.xlane.f32.xlu0 %v2702
        %v2720 = vpop.xlane.xlu0 %2719
        %2721 = vadd.xlane.f32.xlu0 %v2703
        %v2722 = vpop.xlane.xlu0 %2721
        %2723 = vadd.xlane.f32.xlu0 %v2704
        %v2724 = vpop.xlane.xlu0 %2723
        %2725 = vadd.xlane.f32.xlu0 %v2705
        %v2726 = vpop.xlane.xlu0 %2725
        %2727 = vadd.xlane.f32.xlu0 %v2706
        %v2728 = vpop.xlane.xlu0 %2727
        %2729 = vadd.xlane.f32.xlu0 %v2707
        %v2730 = vpop.xlane.xlu0 %2729
        %2731 = vadd.xlane.f32.xlu0 %v2708
        %v2732 = vpop.xlane.xlu0 %2731
        %2733 = vadd.xlane.f32.xlu0 %v2709
        %v2734 = vpop.xlane.xlu0 %2733
        %2735 = vadd.xlane.f32.xlu0 %v2710
        %v2736 = vpop.xlane.xlu0 %2735
        %2737 = vadd.xlane.f32.xlu0 %v2711
        %v2738 = vpop.xlane.xlu0 %2737
        %2739 = vadd.xlane.f32.xlu0 %v2712
        %v2740 = vpop.xlane.xlu0 %2739
        %2741 = vadd.xlane.f32.xlu0 %v2713
        %v2742 = vpop.xlane.xlu0 %2741
        %2743 = vadd.xlane.f32.xlu0 %v2714
        %v2744 = vpop.xlane.xlu0 %2743
        %2745 = vadd.xlane.f32.xlu0 %v2715
        %v2746 = vpop.xlane.xlu0 %2745
        %2747 = vadd.xlane.f32.xlu0 %v2716
        %v2748 = vpop.xlane.xlu0 %2747
        %v2765 = vadd.s32 %v388, 4294967200
        %v2766 = vlaneseq
        %v2767 = vshrl.u32 %v2766, 7
        %v2768 = vsub.s32 %v2765, %v2767
        %v2769 = vrot.slane %v2718, %v2768
        %v2770 = vadd.s32 %v388, 4294967192
        %v2771 = vlaneseq
        %v2772 = vshrl.u32 %v2771, 7
        %v2773 = vsub.s32 %v2770, %v2772
        %v2774 = vrot.slane %v2720, %v2773
        %vm2775 = vcmask 917312
        %v2776 = vsel %vm2775, %v2774, %v2769
        %v2777 = vlaneseq
        %v2778 = vshrl.u32 %v2777, 7
        %v2779 = vsub.s32 %v2765, %v2778
        %v2780 = vrot.slane %v2722, %v2779
        %v2781 = vlaneseq
        %v2782 = vshrl.u32 %v2781, 7
        %v2783 = vsub.s32 %v2770, %v2782
        %v2784 = vrot.slane %v2724, %v2783
        %v2785 = vsel %vm2775, %v2784, %v2780
        %v2786 = vlaneseq
        %v2787 = vshrl.u32 %v2786, 7
        %v2788 = vsub.s32 %v2765, %v2787
        %v2789 = vrot.slane %v2726, %v2788
        %v2790 = vlaneseq
        %v2791 = vshrl.u32 %v2790, 7
        %v2792 = vsub.s32 %v2770, %v2791
        %v2793 = vrot.slane %v2728, %v2792
        %v2794 = vsel %vm2775, %v2793, %v2789
        %v2795 = vlaneseq
        %v2796 = vshrl.u32 %v2795, 7
        %v2797 = vsub.s32 %v2765, %v2796
        %v2798 = vrot.slane %v2730, %v2797
        %v2799 = vlaneseq
        %v2800 = vshrl.u32 %v2799, 7
        %v2801 = vsub.s32 %v2770, %v2800
        %v2802 = vrot.slane %v2732, %v2801
        %v2803 = vsel %vm2775, %v2802, %v2798
        %v2804 = vlaneseq
        %v2805 = vshrl.u32 %v2804, 7
        %v2806 = vsub.s32 %v2765, %v2805
        %v2807 = vrot.slane %v2734, %v2806
        %v2808 = vlaneseq
        %v2809 = vshrl.u32 %v2808, 7
        %v2810 = vsub.s32 %v2770, %v2809
        %v2811 = vrot.slane %v2736, %v2810
        %v2812 = vsel %vm2775, %v2811, %v2807
        %v2813 = vlaneseq
        %v2814 = vshrl.u32 %v2813, 7
        %v2815 = vsub.s32 %v2765, %v2814
        %v2816 = vrot.slane %v2738, %v2815
        %v2817 = vlaneseq
        %v2818 = vshrl.u32 %v2817, 7
        %v2819 = vsub.s32 %v2770, %v2818
        %v2820 = vrot.slane %v2740, %v2819
        %v2821 = vsel %vm2775, %v2820, %v2816
        %v2822 = vlaneseq
        %v2823 = vshrl.u32 %v2822, 7
        %v2824 = vsub.s32 %v2765, %v2823
        %v2825 = vrot.slane %v2742, %v2824
        %v2826 = vlaneseq
        %v2827 = vshrl.u32 %v2826, 7
        %v2828 = vsub.s32 %v2770, %v2827
        %v2829 = vrot.slane %v2744, %v2828
        %v2830 = vsel %vm2775, %v2829, %v2825
        %v2831 = vlaneseq
        %v2832 = vshrl.u32 %v2831, 7
        %v2833 = vsub.s32 %v2765, %v2832
        %v2834 = vrot.slane %v2746, %v2833
        %v2835 = vlaneseq
        %v2836 = vshrl.u32 %v2835, 7
        %v2837 = vsub.s32 %v2770, %v2836
        %v2838 = vrot.slane %v2748, %v2837
        %v2839 = vsel %vm2775, %v2838, %v2834
        %v2840 = vsel %vm605, %v2785, %v2776
        %v2841 = vsel %vm607, %v2794, %v2840
        %v2842 = vsel %vm609, %v2803, %v2841
        %v2843 = vsel %vm611, %v2812, %v2842
        %v2844 = vsel %vm613, %v2821, %v2843
        %v2845 = vsel %vm615, %v2830, %v2844
        %v2846 = vsel %vm617, %v2839, %v2845
        %vm2848 = vcmask 917248
        %2849 = vst.msk [vmem:[%s375] sm:$0xff] %vm2848, %v2846
        %v2850 = vld [vmem:[%s327] sm:$0xff]
        %v2851 = vlaneseq
        %v2852 = vshrl.u32 %v2851, 7
        %v2853 = vsub.s32 0, %v2852
        %v2854 = vrot.slane %v2850, %v2853
        %s2856 = sor.u32 256, 112
        %2857 = vbcast.lane.b32.xlu0 %v2854, %s2856
        %v2858 = vpop.permute.xlu0 %2857
        %s2860 = sor.u32 256, 120
        %2861 = vbcast.lane.b32.xlu0 %v2854, %s2860
        %v2862 = vpop.permute.xlu0 %2861
        %v2863 = vlaneseq
        %v2864 = vshrl.u32 %v2863, 7
        %v2865 = vsub.s32 1, %v2864
        %v2866 = vrot.slane %v2850, %v2865
        %s2868 = sor.u32 256, 112
        %2869 = vbcast.lane.b32.xlu0 %v2866, %s2868
        %v2870 = vpop.permute.xlu0 %2869
        %s2872 = sor.u32 256, 120
        %2873 = vbcast.lane.b32.xlu0 %v2866, %s2872
        %v2874 = vpop.permute.xlu0 %2873
        %v2875 = vlaneseq
        %v2876 = vshrl.u32 %v2875, 7
        %v2877 = vsub.s32 2, %v2876
        %v2878 = vrot.slane %v2850, %v2877
        %s2880 = sor.u32 256, 112
        %2881 = vbcast.lane.b32.xlu0 %v2878, %s2880
        %v2882 = vpop.permute.xlu0 %2881
        %s2884 = sor.u32 256, 120
        %2885 = vbcast.lane.b32.xlu0 %v2878, %s2884
        %v2886 = vpop.permute.xlu0 %2885
        %v2887 = vlaneseq
        %v2888 = vshrl.u32 %v2887, 7
        %v2889 = vsub.s32 3, %v2888
        %v2890 = vrot.slane %v2850, %v2889
        %s2892 = sor.u32 256, 112
        %2893 = vbcast.lane.b32.xlu0 %v2890, %s2892
        %v2894 = vpop.permute.xlu0 %2893
        %s2896 = sor.u32 256, 120
        %2897 = vbcast.lane.b32.xlu0 %v2890, %s2896
        %v2898 = vpop.permute.xlu0 %2897
        %v2899 = vlaneseq
        %v2900 = vshrl.u32 %v2899, 7
        %v2901 = vsub.s32 4, %v2900
        %v2902 = vrot.slane %v2850, %v2901
        %s2904 = sor.u32 256, 112
        %2905 = vbcast.lane.b32.xlu0 %v2902, %s2904
        %v2906 = vpop.permute.xlu0 %2905
        %s2908 = sor.u32 256, 120
        %2909 = vbcast.lane.b32.xlu0 %v2902, %s2908
        %v2910 = vpop.permute.xlu0 %2909
        %v2911 = vlaneseq
        %v2912 = vshrl.u32 %v2911, 7
        %v2913 = vsub.s32 5, %v2912
        %v2914 = vrot.slane %v2850, %v2913
        %s2916 = sor.u32 256, 112
        %2917 = vbcast.lane.b32.xlu0 %v2914, %s2916
        %v2918 = vpop.permute.xlu0 %2917
        %s2920 = sor.u32 256, 120
        %2921 = vbcast.lane.b32.xlu0 %v2914, %s2920
        %v2922 = vpop.permute.xlu0 %2921
        %v2923 = vlaneseq
        %v2924 = vshrl.u32 %v2923, 7
        %v2925 = vsub.s32 6, %v2924
        %v2926 = vrot.slane %v2850, %v2925
        %s2928 = sor.u32 256, 112
        %2929 = vbcast.lane.b32.xlu0 %v2926, %s2928
        %v2930 = vpop.permute.xlu0 %2929
        %s2932 = sor.u32 256, 120
        %2933 = vbcast.lane.b32.xlu0 %v2926, %s2932
        %v2934 = vpop.permute.xlu0 %2933
        %v2935 = vlaneseq
        %v2936 = vshrl.u32 %v2935, 7
        %v2937 = vsub.s32 7, %v2936
        %v2938 = vrot.slane %v2850, %v2937
        %s2940 = sor.u32 256, 112
        %2941 = vbcast.lane.b32.xlu0 %v2938, %s2940
        %v2942 = vpop.permute.xlu0 %2941
        %s2944 = sor.u32 256, 120
        %2945 = vbcast.lane.b32.xlu0 %v2938, %s2944
        %v2946 = vpop.permute.xlu0 %2945
        %vm2947 = vcmp.eq.s32.totalorder %v2858, %v388
        %vm2948 = vcmp.eq.s32.totalorder %v2862, %v388
        %vm2949 = vcmp.eq.s32.totalorder %v2870, %v388
        %vm2950 = vcmp.eq.s32.totalorder %v2874, %v388
        %vm2951 = vcmp.eq.s32.totalorder %v2882, %v388
        %vm2952 = vcmp.eq.s32.totalorder %v2886, %v388
        %vm2953 = vcmp.eq.s32.totalorder %v2894, %v388
        %vm2954 = vcmp.eq.s32.totalorder %v2898, %v388
        %vm2955 = vcmp.eq.s32.totalorder %v2906, %v388
        %vm2956 = vcmp.eq.s32.totalorder %v2910, %v388
        %vm2957 = vcmp.eq.s32.totalorder %v2918, %v388
        %vm2958 = vcmp.eq.s32.totalorder %v2922, %v388
        %vm2959 = vcmp.eq.s32.totalorder %v2930, %v388
        %vm2960 = vcmp.eq.s32.totalorder %v2934, %v388
        %vm2961 = vcmp.eq.s32.totalorder %v2942, %v388
        %vm2962 = vcmp.eq.s32.totalorder %v2946, %v388
        %v2963 = vsel %vm2947, %v1093, 0.0
        %v2964 = vsel %vm2948, %v1093, 0.0
        %v2965 = vsel %vm2949, %v1097, 0.0
        %v2966 = vsel %vm2950, %v1097, 0.0
        %v2967 = vsel %vm2951, %v1101, 0.0
        %v2968 = vsel %vm2952, %v1101, 0.0
        %v2969 = vsel %vm2953, %v1105, 0.0
        %v2970 = vsel %vm2954, %v1105, 0.0
        %v2971 = vsel %vm2955, %v1109, 0.0
        %v2972 = vsel %vm2956, %v1109, 0.0
        %v2973 = vsel %vm2957, %v1113, 0.0
        %v2974 = vsel %vm2958, %v1113, 0.0
        %v2975 = vsel %vm2959, %v1117, 0.0
        %v2976 = vsel %vm2960, %v1117, 0.0
        %v2977 = vsel %vm2961, %v1121, 0.0
        %v2978 = vsel %vm2962, %v1121, 0.0
        %2979 = vadd.xlane.f32.xlu0 %v2963
        %v2980 = vpop.xlane.xlu0 %2979
        %2981 = vadd.xlane.f32.xlu0 %v2964
        %v2982 = vpop.xlane.xlu0 %2981
        %2983 = vadd.xlane.f32.xlu0 %v2965
        %v2984 = vpop.xlane.xlu0 %2983
        %2985 = vadd.xlane.f32.xlu0 %v2966
        %v2986 = vpop.xlane.xlu0 %2985
        %2987 = vadd.xlane.f32.xlu0 %v2967
        %v2988 = vpop.xlane.xlu0 %2987
        %2989 = vadd.xlane.f32.xlu0 %v2968
        %v2990 = vpop.xlane.xlu0 %2989
        %2991 = vadd.xlane.f32.xlu0 %v2969
        %v2992 = vpop.xlane.xlu0 %2991
        %2993 = vadd.xlane.f32.xlu0 %v2970
        %v2994 = vpop.xlane.xlu0 %2993
        %2995 = vadd.xlane.f32.xlu0 %v2971
        %v2996 = vpop.xlane.xlu0 %2995
        %2997 = vadd.xlane.f32.xlu0 %v2972
        %v2998 = vpop.xlane.xlu0 %2997
        %2999 = vadd.xlane.f32.xlu0 %v2973
        %v3000 = vpop.xlane.xlu0 %2999
        %3001 = vadd.xlane.f32.xlu0 %v2974
        %v3002 = vpop.xlane.xlu0 %3001
        %3003 = vadd.xlane.f32.xlu0 %v2975
        %v3004 = vpop.xlane.xlu0 %3003
        %3005 = vadd.xlane.f32.xlu0 %v2976
        %v3006 = vpop.xlane.xlu0 %3005
        %3007 = vadd.xlane.f32.xlu0 %v2977
        %v3008 = vpop.xlane.xlu0 %3007
        %3009 = vadd.xlane.f32.xlu0 %v2978
        %v3010 = vpop.xlane.xlu0 %3009
        %v3027 = vadd.s32 %v388, 4294967184
        %v3028 = vlaneseq
        %v3029 = vshrl.u32 %v3028, 7
        %v3030 = vsub.s32 %v3027, %v3029
        %v3031 = vrot.slane %v2980, %v3030
        %v3032 = vadd.s32 %v388, 4294967176
        %v3033 = vlaneseq
        %v3034 = vshrl.u32 %v3033, 7
        %v3035 = vsub.s32 %v3032, %v3034
        %v3036 = vrot.slane %v2982, %v3035
        %vm3037 = vcmask 1048512
        %v3038 = vsel %vm3037, %v3036, %v3031
        %v3039 = vlaneseq
        %v3040 = vshrl.u32 %v3039, 7
        %v3041 = vsub.s32 %v3027, %v3040
        %v3042 = vrot.slane %v2984, %v3041
        %v3043 = vlaneseq
        %v3044 = vshrl.u32 %v3043, 7
        %v3045 = vsub.s32 %v3032, %v3044
        %v3046 = vrot.slane %v2986, %v3045
        %v3047 = vsel %vm3037, %v3046, %v3042
        %v3048 = vlaneseq
        %v3049 = vshrl.u32 %v3048, 7
        %v3050 = vsub.s32 %v3027, %v3049
        %v3051 = vrot.slane %v2988, %v3050
        %v3052 = vlaneseq
        %v3053 = vshrl.u32 %v3052, 7
        %v3054 = vsub.s32 %v3032, %v3053
        %v3055 = vrot.slane %v2990, %v3054
        %v3056 = vsel %vm3037, %v3055, %v3051
        %v3057 = vlaneseq
        %v3058 = vshrl.u32 %v3057, 7
        %v3059 = vsub.s32 %v3027, %v3058
        %v3060 = vrot.slane %v2992, %v3059
        %v3061 = vlaneseq
        %v3062 = vshrl.u32 %v3061, 7
        %v3063 = vsub.s32 %v3032, %v3062
        %v3064 = vrot.slane %v2994, %v3063
        %v3065 = vsel %vm3037, %v3064, %v3060
        %v3066 = vlaneseq
        %v3067 = vshrl.u32 %v3066, 7
        %v3068 = vsub.s32 %v3027, %v3067
        %v3069 = vrot.slane %v2996, %v3068
        %v3070 = vlaneseq
        %v3071 = vshrl.u32 %v3070, 7
        %v3072 = vsub.s32 %v3032, %v3071
        %v3073 = vrot.slane %v2998, %v3072
        %v3074 = vsel %vm3037, %v3073, %v3069
        %v3075 = vlaneseq
        %v3076 = vshrl.u32 %v3075, 7
        %v3077 = vsub.s32 %v3027, %v3076
        %v3078 = vrot.slane %v3000, %v3077
        %v3079 = vlaneseq
        %v3080 = vshrl.u32 %v3079, 7
        %v3081 = vsub.s32 %v3032, %v3080
        %v3082 = vrot.slane %v3002, %v3081
        %v3083 = vsel %vm3037, %v3082, %v3078
        %v3084 = vlaneseq
        %v3085 = vshrl.u32 %v3084, 7
        %v3086 = vsub.s32 %v3027, %v3085
        %v3087 = vrot.slane %v3004, %v3086
        %v3088 = vlaneseq
        %v3089 = vshrl.u32 %v3088, 7
        %v3090 = vsub.s32 %v3032, %v3089
        %v3091 = vrot.slane %v3006, %v3090
        %v3092 = vsel %vm3037, %v3091, %v3087
        %v3093 = vlaneseq
        %v3094 = vshrl.u32 %v3093, 7
        %v3095 = vsub.s32 %v3027, %v3094
        %v3096 = vrot.slane %v3008, %v3095
        %v3097 = vlaneseq
        %v3098 = vshrl.u32 %v3097, 7
        %v3099 = vsub.s32 %v3032, %v3098
        %v3100 = vrot.slane %v3010, %v3099
        %v3101 = vsel %vm3037, %v3100, %v3096
        %v3102 = vsel %vm605, %v3047, %v3038
        %v3103 = vsel %vm607, %v3056, %v3102
        %v3104 = vsel %vm609, %v3065, %v3103
        %v3105 = vsel %vm611, %v3074, %v3104
        %v3106 = vsel %vm613, %v3083, %v3105
        %v3107 = vsel %vm615, %v3092, %v3106
        %v3108 = vsel %vm617, %v3101, %v3107
        %vm3110 = vcmask 1048448
        %3111 = vst.msk [vmem:[%s375] sm:$0xff] %vm3110, %v3108
        %s3112 = sand.u32 %s217, 1
        %s3113 = scalar_lea.sflag [#allocation4], %s3112
        %s3114 = sand.u32 %s217, 1
        %s3115 = smul.addr %s3114, 8
        %s3116 = scalar_lea.vmem [#allocation8], %s3115
        // Predicated region
        $region65: #{tpu_custom_call.1} parent=51 // pred_check
          %p3117 = pneg %p227
        $region66: #{tpu_custom_call.1} parent=51 // pred_check_branch
          %3119 = sbr.rel (%p3117) target = $region68
        $region67: #{tpu_custom_call.1} parent=51 // pred_region
          %s3121 = ssub.s32 128, 128
          %3122 = vsyncadd %s3113, %s3121
          %s3123 = smul.addr %s26, 128
          %s3124 = scalar_lea.hbm %s8, %s3123
          %s3126 = sshll.u32 %s3116, 4
          %s3127 = int_to_ptr.vmem [resolvable:$true] %s3126
          %3129 = dma.vmem_to_hbm [thread:$0]  %s3127, 128, %s3124, %s3113
        $region68: #{tpu_custom_call.1} parent=51 // pred_fallthru
          _
      $region52: #{tpu_custom_call.1} parent=5 // pred_fallthru
        _
      %p3130 = scmp.le.s32.totalorder 2, %s21
      // Predicated region
      $region69: #{tpu_custom_call.1} parent=5 // pred_check
        %p3131 = pneg %p3130
      $region70: #{tpu_custom_call.1} parent=5 // pred_check_branch
        %3133 = sbr.rel (%p3131) target = $region72
      $region71: #{tpu_custom_call.1} parent=5 // pred_region
        %s3134 = ssub.s32 %s21, 2
        // Predicated region
        $region73: #{tpu_custom_call.1} parent=71 // pred_check
          %p3135 = pneg %p233
        $region74: #{tpu_custom_call.1} parent=71 // pred_check_branch
          %3137 = sbr.rel (%p3135) target = $region76
        $region75: #{tpu_custom_call.1} parent=71 // pred_region
          %s3138 = sand.u32 %s218, 1
          %s3139 = scalar_lea.sflag [#allocation4], %s3138
          %s3140 = sand.u32 %s218, 1
          %s3141 = smul.addr %s3140, 8
          %s3142 = scalar_lea.vmem [#allocation8], %s3141
          %3143 = dma.done %s3139, 128
        $region76: #{tpu_custom_call.1} parent=71 // pred_fallthru
          _
      $region72: #{tpu_custom_call.1} parent=5 // pred_fallthru
        _
    $region6: #{tpu_custom_call.1} parent=1 // loop_footer
      %s25 = sadd.s32 1, %s21
    $region7: #{tpu_custom_call.1} parent=1 // loop_footer_branch
      %20 = sbr.rel target = $region3
    $region8: #{tpu_custom_call.1} parent=1 // loop_exit
      _
    %3144 = vsyncpa [#allocation3], 1
    %s3145 = scalar_lea.sflag [#allocation3], 1
    %3146 = vsyncpa %s3145, 1
    %3147 = vsyncpa [#allocation6], 1
    %3148 = vsyncpa [#allocation4], 1
    %s3149 = scalar_lea.sflag [#allocation4], 1
    %3150 = vsyncpa %s3149, 1

</llo_original>
